<compile_context>
chip_gen: v5e
topology: v5e:2x2
jax: 0.10.0
libtpu: 0.0.40
codegen_flags: <defaults>
</compile_context>

<pallas_src>
import functools

import jax
import jax.numpy as jnp
import numpy as np
from jax.experimental import pallas as pl
from jax.experimental.pallas import tpu as pltpu

HIDDEN = 32          # hidden_channels
NUM_LAYERS = 3       # num_layers
MAX_Z = 10
LN_EPS = 1e-5        # torch.nn.LayerNorm default
OUT_LANES = 128      # lane-dense score output (column 0 holds the real score)


# --------------------------------------------------------------------------- kernel
def plabeling_zogin_kernel(x0_ref, adj_ref, pm_ref, w_ref, v_ref, head_ref,
                           out_ref, *, hidden, num_layers, dot_dtype):
    H, L = hidden, num_layers
    SG, _, N, _ = x0_ref.shape              # subgraphs-per-step, 2 branches, nodes, H
    R = SG * 2 * N                          # total node rows in this step
    f32 = jnp.float32

    # Replicate the [SG,N,N] adjacency across the two z-label branches once
    # (VMEM-only copy, hoisted out of the layer loop).  HBM only ever holds [N,N].
    adj = adj_ref[...]
    adj2 = jnp.broadcast_to(adj[:, None], (SG, 2, N, N)).reshape(SG * 2, N, N)

    x = x0_ref[...].reshape(SG * 2, N, H).astype(f32)
    acc = jnp.zeros((R, H), f32)            # JK concat + lin0 folded accumulator

    for l in range(L):
        # static views into the resident packed slabs (zero-cost)
        w1 = w_ref[l * H:(l + 1) * H, :]
        w2 = w_ref[(L + l) * H:(L + l + 1) * H, :]
        w0 = w_ref[(2 * L + l) * H:(2 * L + l + 1) * H, :]
        b1 = v_ref[l:l + 1, :]
        b2 = v_ref[L + l:L + l + 1, :]
        g = v_ref[2 * L + l:2 * L + l + 1, :]
        be = v_ref[3 * L + l:3 * L + l + 1, :]

        # GIN (eps = 0): agg_i = x_i + sum_{j->i} x_j, per subgraph and z-branch
        agg = x + jnp.einsum('bij,bjh->bih', adj2, x.astype(dot_dtype),
                             preferred_element_type=f32)
        flat = agg.reshape(R, H)
        h = jnp.maximum(jnp.dot(flat.astype(dot_dtype), w1,
                                preferred_element_type=f32) + b1, 0.0)
        h = jnp.maximum(jnp.dot(h.astype(dot_dtype), w2,
                                preferred_element_type=f32) + b2, 0.0)
        # LayerNorm (biased variance), kept in f32
        mu = jnp.mean(h, axis=-1, keepdims=True)
        c = h - mu
        var = jnp.mean(c * c, axis=-1, keepdims=True)
        h = c * jax.lax.rsqrt(var + LN_EPS) * g + be
        # JK concat + lin0 as a running accumulator: acc += h_l @ W0_l
        acc = acc + jnp.dot(h.astype(dot_dtype), w0, preferred_element_type=f32)
        if l + 1 < L:
            x = h.reshape(SG * 2, N, H)

    # lin0 bias + ReLU.  TODO(synk): Dropout(p=0.5) is stochastic in train mode;
    # identity here (eval mode).
    b0 = v_ref[4 * L:4 * L + 1, :]
    y = jnp.maximum(acc + b0, 0.0)                                   # [R, H]

    # z-branch sum (.sum(dim=0)) + global_mean_pool fused into one block-diagonal
    # pooling matmul: [SG, R] @ [R, H] -> [SG, H]
    pooled = jnp.dot(pm_ref[...], y, preferred_element_type=f32)

    # head: Linear(H,H) -> ReLU -> Linear(H,1); wb/bb packed lane-dense ([H,128])
    wa = w_ref[3 * L * H:(3 * L + 1) * H, :]
    ba = v_ref[4 * L + 1:4 * L + 2, :]
    hh = jnp.maximum(jnp.dot(pooled.astype(dot_dtype), wa,
                             preferred_element_type=f32) + ba, 0.0)
    out_ref[...] = (jnp.dot(hh, head_ref[0:H, :], preferred_element_type=f32)
                    + head_ref[H:H + 1, :])                          # [SG, 128]


# ------------------------------------------------------------------- param packing
def pack_params(params, compute_dtype=jnp.float32):
    """Pack parameters into: W [(3L+1)H, H] (compute dtype), V [4L+2, H] (f32) and a
    lane-dense head slab [H+1, 128] (f32, column 0 holds wb / bb)."""
    L, H = params["w1"].shape[0], params["w1"].shape[-1]
    w_slab = jnp.concatenate([
        params["w1"].reshape(L * H, H),
        params["w2"].reshape(L * H, H),
        params["w0"].reshape(L * H, H),
        params["wa"],
    ], axis=0).astype(compute_dtype)
    v_slab = jnp.concatenate([
        params["b1"], params["b2"], params["ln_g"], params["ln_b"],
        params["b0"], params["ba"],
    ], axis=0).astype(jnp.float32)
    head = jnp.zeros((H + 1, OUT_LANES), jnp.float32)
    head = head.at[0:H, 0:1].set(params["wb"])
    head = head.at[H, 0].set(params["bb"][0, 0])
    return w_slab, v_slab, head


# -------------------------------------------------------------------- preprocessing
def preprocess(z, edge_index, batch, z_emb, num_graphs_pad, n_max, compute_dtype):
    """Turn a PyG-style disjoint union (z, edge_index, batch; batch sorted) into
    padded per-subgraph dense tensors (hoistable / cacheable per batch)."""
    n = z.shape[0]
    H = z_emb.shape[-1]
    counts = jnp.zeros((num_graphs_pad,), jnp.int32).at[batch].add(1)
    starts = jnp.concatenate([jnp.zeros((1,), jnp.int32),
                              jnp.cumsum(counts)[:-1].astype(jnp.int32)])
    local = jnp.arange(n, dtype=jnp.int32) - starts[batch]
    # z_embedding(([[1],[2]] == z).long()) -> both branches
    idx = jnp.stack([(z == 1), (z == 2)], axis=0).astype(jnp.int32)      # [2, n]
    emb = z_emb[idx]                                                     # [2, n, H]
    x0 = jnp.zeros((num_graphs_pad, 2, n_max, H), jnp.float32)
    x0 = x0.at[batch, :, local, :].set(jnp.transpose(emb, (1, 0, 2)))
    # per-subgraph dense adjacency: adj[g, i, j] = #edges j -> i (local indices)
    src, dst = edge_index[0], edge_index[1]
    adj = jnp.zeros((num_graphs_pad, n_max, n_max), jnp.float32)
    adj = adj.at[batch[src], local[dst], local[src]].add(1.0)
    # per-subgraph mean-pool weights (zeros on padded nodes / padded subgraphs)
    pool = jnp.zeros((num_graphs_pad, n_max), jnp.float32)
    pool = pool.at[batch, local].set(1.0)
    pool = pool / jnp.maximum(counts, 1)[:, None].astype(jnp.float32)
    return x0.astype(compute_dtype), adj.astype(compute_dtype), pool


def build_pool_matrix(pool, sg_tile):
    """Expand per-subgraph pool weights [B, N] into per-tile block-diagonal pooling
    matrices [B, sg_tile*2*N] that also fold the z-branch sum."""
    b, n = pool.shape
    nt = b // sg_tile
    pool2 = jnp.concatenate([pool, pool], axis=-1)                       # [B, 2N]
    eye = jnp.eye(sg_tile, dtype=pool.dtype)
    pm = eye[None, :, :, None] * pool2.reshape(nt, 1, sg_tile, 2 * n)
    return pm.reshape(b, sg_tile * 2 * n)


def choose_sg_tile(n_max, target_rows=256):
    """Pick subgraphs-per-step so the weight matmuls see ~256 rows (fills MXU M)."""
    return max(1, target_rows // (2 * n_max))


# ------------------------------------------------------------------------- wrapper
def plabeling_zogin_forward(x0, adj, pool_mat, w_slab, v_slab, head_slab, *,
                            sg_tile, hidden=HIDDEN, num_layers=NUM_LAYERS):
    B_pad, _, n_max, H = x0.shape
    assert B_pad % sg_tile == 0
    num_tiles = B_pad // sg_tile
    L = num_layers
    rows = sg_tile * 2 * n_max

    flops_per_tile = (L * (4 * sg_tile * n_max * n_max * H        # aggregation
                           + 3 * 2 * rows * H * H)                # w1, w2, w0
                      + 2 * sg_tile * rows * H                    # pooling matmul
                      + 2 * sg_tile * H * H                       # head wa
                      + 2 * sg_tile * H * OUT_LANES)              # head wb (padded)
    flops = num_tiles * flops_per_tile
    transcendentals = num_tiles * L * rows                        # rsqrt per LN row
    bytes_accessed = (x0.size * x0.dtype.itemsize + adj.size * adj.dtype.itemsize
                      + pool_mat.size * 4 + w_slab.size * w_slab.dtype.itemsize
                      + v_slab.size * 4 + head_slab.size * 4
                      + B_pad * OUT_LANES * 4)

    kernel = functools.partial(plabeling_zogin_kernel, hidden=H, num_layers=L,
                               dot_dtype=w_slab.dtype)
    grid_spec = pltpu.PrefetchScalarGridSpec(
        num_scalar_prefetch=0,
        grid=(num_tiles,),
        in_specs=[
            pl.BlockSpec((sg_tile, 2, n_max, H), lambda i: (i, 0, 0, 0)),
            pl.BlockSpec((sg_tile, n_max, n_max), lambda i: (i, 0, 0)),
            pl.BlockSpec((sg_tile, rows), lambda i: (i, 0)),
            # packed weights: constant index_map -> resident in VMEM across steps
            pl.BlockSpec(w_slab.shape, lambda i: (0, 0)),
            pl.BlockSpec(v_slab.shape, lambda i: (0, 0)),
            pl.BlockSpec(head_slab.shape, lambda i: (0, 0)),
        ],
        out_specs=pl.BlockSpec((sg_tile, OUT_LANES), lambda i: (i, 0)),
    )
    out = pl.pallas_call(
        kernel,
        out_shape=jax.ShapeDtypeStruct((B_pad, OUT_LANES), jnp.float32),
        grid_spec=grid_spec,
        compiler_params=pltpu.CompilerParams(
            dimension_semantics=("parallel",)),    # both v7x TensorCores get tiles
        cost_estimate=pl.CostEstimate(flops=int(flops),
                                      transcendentals=int(transcendentals),
                                      bytes_accessed=int(bytes_accessed)),
    )(x0, adj, pool_mat, w_slab, v_slab, head_slab)
    return out[:, 0:1]                             # [B_pad, 1]; caller slices [:B]


# ------------------------------------------------------------------ pure-JAX reference
def ref_forward(z, edge_index, batch, params, num_graphs):
    """Mirrors the PyTorch forward (eval mode, default SEAL config) on the union graph."""
    n = z.shape[0]
    idx = jnp.stack([(z == 1), (z == 2)], 0).astype(jnp.int32)           # [2, n]
    x = params["z_emb"][idx]                                             # [2, n, H]
    src, dst = edge_index[0], edge_index[1]
    adj = jnp.zeros((n, n), jnp.float32).at[dst, src].add(1.0)
    xs = []
    for l in range(NUM_LAYERS):
        agg = x + jnp.einsum("ij,bjh->bih", adj, x)
        h = jax.nn.relu(agg @ params["w1"][l] + params["b1"][l])
        h = jax.nn.relu(h @ params["w2"][l] + params["b2"][l])
        mu = h.mean(-1, keepdims=True)
        var = ((h - mu) ** 2).mean(-1, keepdims=True)
        h = (h - mu) / jnp.sqrt(var + LN_EPS) * params["ln_g"][l] + params["ln_b"][l]
        x = h
        xs.append(h)
    xcat = jnp.concatenate(xs, -1)
    w0_full = jnp.concatenate(list(params["w0"]), axis=0)                # [L*H, H]
    y = jax.nn.relu(xcat @ w0_full + params["b0"][0]).sum(0)             # [n, H]
    onehot = (batch[None, :] == jnp.arange(num_graphs)[:, None]).astype(jnp.float32)
    pool = onehot / onehot.sum(1, keepdims=True)
    p = pool @ y
    h = jax.nn.relu(p @ params["wa"] + params["ba"])
    return h @ params["wb"] + params["bb"]


def init_params(key, hidden=HIDDEN, num_layers=NUM_LAYERS, max_z=MAX_Z):
    ks = jax.random.split(key, 12)
    s = 1.0 / np.sqrt(hidden)
    return {
        "z_emb": jax.random.normal(ks[0], (max_z, hidden), jnp.float32),
        "w1": jax.random.normal(ks[1], (num_layers, hidden, hidden), jnp.float32) * s,
        "b1": jax.random.normal(ks[2], (num_layers, hidden), jnp.float32) * 0.1,
        "w2": jax.random.normal(ks[3], (num_layers, hidden, hidden), jnp.float32) * s,
        "b2": jax.random.normal(ks[4], (num_layers, hidden), jnp.float32) * 0.1,
        "ln_g": jnp.ones((num_layers, hidden), jnp.float32),
        "ln_b": jnp.zeros((num_layers, hidden), jnp.float32),
        "w0": jax.random.normal(ks[5], (num_layers, hidden, hidden), jnp.float32)
              * (1.0 / np.sqrt(num_layers * hidden)),
        "b0": jax.random.normal(ks[6], (1, hidden), jnp.float32) * 0.1,
        "wa": jax.random.normal(ks[7], (hidden, hidden), jnp.float32) * s,
        "ba": jax.random.normal(ks[8], (1, hidden), jnp.float32) * 0.1,
        "wb": jax.random.normal(ks[9], (hidden, 1), jnp.float32) * s,
        "bb": jax.random.normal(ks[10], (1, 1), jnp.float32) * 0.1,
    }


# TODO(synk): use_feature / node_embedding / center_pool / no_label branches of the
# PyTorch module are non-default and not implemented here (default SEAL config).

if __name__ == "__main__":
    key = jax.random.PRNGKey(0)
    kz, kp = jax.random.split(key)

    # build B ring subgraphs of varying size (10..16 nodes), PyG-style disjoint union
    B = 14
    sizes = [10 + (i % 7) for i in range(B)]
    edges, batch_list, offset = [], [], 0
    for g, ng in enumerate(sizes):
        for i in range(ng):
            j = (i + 1) % ng
            edges.append((offset + i, offset + j))
            edges.append((offset + j, offset + i))
        batch_list += [g] * ng
        offset += ng
    edge_index = jnp.array(np.array(edges, dtype=np.int32).T)           # [2, E]
    batch = jnp.array(batch_list, dtype=jnp.int32)                      # [n_total]
    z = jax.random.randint(kz, (offset,), 0, MAX_Z, dtype=jnp.int32)
    n_max = max(sizes)                                                   # 16

    params = init_params(kp)
    ref = ref_forward(z, edge_index, batch, params, num_graphs=B)        # [B, 1]

    sg_tile = choose_sg_tile(n_max)                                      # 8
    B_pad = ((B + sg_tile - 1) // sg_tile) * sg_tile                     # 16

    # f32: tight check; bf16 (v6e/v7x MXU-native): loosened tolerance (rounding)
    for cdt, rtol, atol in [(jnp.float32, 1e-4, 1e-4), (jnp.bfloat16, 1e-1, 1e-1)]:
        w_slab, v_slab, head_slab = pack_params(params, cdt)
        x0, adj, pool = preprocess(z, edge_index, batch, params["z_emb"],
                                   B_pad, n_max, cdt)
        pool_mat = build_pool_matrix(pool, sg_tile)
        out = plabeling_zogin_forward(x0, adj, pool_mat, w_slab, v_slab, head_slab,
                                      sg_tile=sg_tile)
        out = jax.block_until_ready(out)[:B]
        np.testing.assert_allclose(np.asarray(out), np.asarray(ref),
                                   rtol=rtol, atol=atol)
        assert out.shape == (B, 1)

    print("KERNEL_OK")
</pallas_src>

<mosaic_0001>
module attributes {stable_mosaic.version = 11 : i64} {
  func.func @plabeling_zogin_kernel(%arg0: i32, %arg1: memref<8x2x16x32xf32, #tpu.memory_space<vmem>>, %arg2: memref<8x16x16xf32, #tpu.memory_space<vmem>>, %arg3: memref<8x256xf32, #tpu.memory_space<vmem>>, %arg4: memref<320x32xf32, #tpu.memory_space<vmem>>, %arg5: memref<14x32xf32, #tpu.memory_space<vmem>>, %arg6: memref<33x128xf32, #tpu.memory_space<vmem>>, %arg7: memref<8x128xf32, #tpu.memory_space<vmem>>) attributes {dimension_semantics = [#tpu.dimension_semantics<parallel>], iteration_bounds = array<i64: 2>, scalar_prefetch = 0 : i64, scratch_operands = 0 : i64, tpu.core_type = #tpu.core_type<tc>, window_params = [{transform_indices = @transform_0, window_bounds = array<i64: 8, 2, 16, 32>}, {transform_indices = @transform_1, window_bounds = array<i64: 8, 16, 16>}, {transform_indices = @transform_2, window_bounds = array<i64: 8, 256>}, {pipeline_mode = #tpu.pipeline_mode<synchronous>, transform_indices = @transform_3, window_bounds = array<i64: 320, 32>}, {pipeline_mode = #tpu.pipeline_mode<synchronous>, transform_indices = @transform_4, window_bounds = array<i64: 14, 32>}, {pipeline_mode = #tpu.pipeline_mode<synchronous>, transform_indices = @transform_5, window_bounds = array<i64: 33, 128>}, {transform_indices = @transform_6, window_bounds = array<i64: 8, 128>}]} {
    %c0 = arith.constant 0 : index
    %c0_0 = arith.constant 0 : index
    %c0_1 = arith.constant 0 : index
    %0 = vector.load %arg2[%c0, %c0_0, %c0_1] : memref<8x16x16xf32, #tpu.memory_space<vmem>>, vector<8x16x16xf32>
    %1 = vector.shape_cast %0 : vector<8x16x16xf32> to vector<8x1x16x16xf32>
    %2 = vector.shape_cast %1 : vector<8x1x16x16xf32> to vector<8x1x16x16xf32>
    %3 = vector.broadcast %2 : vector<8x1x16x16xf32> to vector<8x2x16x16xf32>
    %4 = vector.shape_cast %3 : vector<8x2x16x16xf32> to vector<16x16x16xf32>
    %c0_2 = arith.constant 0 : index
    %c0_3 = arith.constant 0 : index
    %c0_4 = arith.constant 0 : index
    %c0_5 = arith.constant 0 : index
    %5 = vector.load %arg1[%c0_2, %c0_3, %c0_4, %c0_5] : memref<8x2x16x32xf32, #tpu.memory_space<vmem>>, vector<8x2x16x32xf32>
    %6 = vector.shape_cast %5 : vector<8x2x16x32xf32> to vector<16x16x32xf32>
    %cst = arith.constant 0.000000e+00 : f32
    %7 = vector.broadcast %cst : f32 to vector<256x32xf32>
    %c0_6 = arith.constant 0 : index
    %c0_7 = arith.constant 0 : index
    %8 = vector.load %arg4[%c0_6, %c0_7] : memref<320x32xf32, #tpu.memory_space<vmem>>, vector<32x32xf32>
    %c96 = arith.constant 96 : index
    %c0_8 = arith.constant 0 : index
    %9 = vector.load %arg4[%c96, %c0_8] : memref<320x32xf32, #tpu.memory_space<vmem>>, vector<32x32xf32>
    %c192 = arith.constant 192 : index
    %c0_9 = arith.constant 0 : index
    %10 = vector.load %arg4[%c192, %c0_9] : memref<320x32xf32, #tpu.memory_space<vmem>>, vector<32x32xf32>
    %c0_10 = arith.constant 0 : index
    %c0_11 = arith.constant 0 : index
    %11 = vector.load %arg5[%c0_10, %c0_11] : memref<14x32xf32, #tpu.memory_space<vmem>>, vector<1x32xf32>
    %c3 = arith.constant 3 : index
    %c0_12 = arith.constant 0 : index
    %12 = vector.load %arg5[%c3, %c0_12] : memref<14x32xf32, #tpu.memory_space<vmem>>, vector<1x32xf32>
    %c6 = arith.constant 6 : index
    %c0_13 = arith.constant 0 : index
    %13 = vector.load %arg5[%c6, %c0_13] : memref<14x32xf32, #tpu.memory_space<vmem>>, vector<1x32xf32>
    %c9 = arith.constant 9 : index
    %c0_14 = arith.constant 0 : index
    %14 = vector.load %arg5[%c9, %c0_14] : memref<14x32xf32, #tpu.memory_space<vmem>>, vector<1x32xf32>
    "tpu.trace_start"() <{level = 10 : i32, message = "bij,bjh->bih"}> : () -> ()
    %cst_15 = arith.constant dense<0.000000e+00> : vector<16x16x32xf32>
    %15 = tpu.matmul %4, %6, %cst_15 {dimension_numbers = #tpu.dot_dimension_numbers<[2], [1], [1], [2], [0, 0, 0, 1, 1, 2], [0], [0]>} : vector<16x16x16xf32>, vector<16x16x32xf32>, vector<16x16x32xf32> -> vector<16x16x32xf32>
    "tpu.trace_stop"() : () -> ()
    %16 = arith.addf %6, %15 : vector<16x16x32xf32>
    %17 = vector.shape_cast %16 : vector<16x16x32xf32> to vector<256x32xf32>
    %cst_16 = arith.constant dense<0.000000e+00> : vector<256x32xf32>
    %18 = tpu.matmul %17, %8, %cst_16 {dimension_numbers = #tpu.dot_dimension_numbers<[1], [0], [0], [1], [0, 0, 1, 1], [], []>} : vector<256x32xf32>, vector<32x32xf32>, vector<256x32xf32> -> vector<256x32xf32>
    %19 = vector.broadcast %11 : vector<1x32xf32> to vector<256x32xf32>
    %20 = arith.addf %18, %19 : vector<256x32xf32>
    %cst_17 = arith.constant 0.000000e+00 : f32
    %21 = vector.broadcast %cst_17 : f32 to vector<256x32xf32>
    %22 = arith.maximumf %20, %21 : vector<256x32xf32>
    %cst_18 = arith.constant dense<0.000000e+00> : vector<256x32xf32>
    %23 = tpu.matmul %22, %9, %cst_18 {dimension_numbers = #tpu.dot_dimension_numbers<[1], [0], [0], [1], [0, 0, 1, 1], [], []>} : vector<256x32xf32>, vector<32x32xf32>, vector<256x32xf32> -> vector<256x32xf32>
    %24 = vector.broadcast %12 : vector<1x32xf32> to vector<256x32xf32>
    %25 = arith.addf %23, %24 : vector<256x32xf32>
    %cst_19 = arith.constant 0.000000e+00 : f32
    %26 = vector.broadcast %cst_19 : f32 to vector<256x32xf32>
    %27 = arith.maximumf %25, %26 : vector<256x32xf32>
    %cst_20 = arith.constant dense<0.000000e+00> : vector<256xf32>
    %28 = vector.multi_reduction <add>, %27, %cst_20 [1] : vector<256x32xf32> to vector<256xf32>
    %29 = vector.shape_cast %28 : vector<256xf32> to vector<256x1xf32>
    %cst_21 = arith.constant 3.200000e+01 : f32
    %30 = vector.broadcast %cst_21 : f32 to vector<256x1xf32>
    %31 = arith.divf %29, %30 : vector<256x1xf32>
    %32 = vector.broadcast %31 : vector<256x1xf32> to vector<256x32xf32>
    %33 = arith.subf %27, %32 : vector<256x32xf32>
    %34 = arith.mulf %33, %33 : vector<256x32xf32>
    %cst_22 = arith.constant dense<0.000000e+00> : vector<256xf32>
    %35 = vector.multi_reduction <add>, %34, %cst_22 [1] : vector<256x32xf32> to vector<256xf32>
    %36 = vector.shape_cast %35 : vector<256xf32> to vector<256x1xf32>
    %cst_23 = arith.constant 3.200000e+01 : f32
    %37 = vector.broadcast %cst_23 : f32 to vector<256x1xf32>
    %38 = arith.divf %36, %37 : vector<256x1xf32>
    %cst_24 = arith.constant 9.99999974E-6 : f32
    %39 = vector.broadcast %cst_24 : f32 to vector<256x1xf32>
    %40 = arith.addf %38, %39 : vector<256x1xf32>
    %41 = math.rsqrt %40 : vector<256x1xf32>
    %42 = vector.broadcast %41 : vector<256x1xf32> to vector<256x32xf32>
    %43 = arith.mulf %33, %42 : vector<256x32xf32>
    %44 = vector.broadcast %13 : vector<1x32xf32> to vector<256x32xf32>
    %45 = arith.mulf %43, %44 : vector<256x32xf32>
    %46 = vector.broadcast %14 : vector<1x32xf32> to vector<256x32xf32>
    %47 = arith.addf %45, %46 : vector<256x32xf32>
    %cst_25 = arith.constant dense<0.000000e+00> : vector<256x32xf32>
    %48 = tpu.matmul %47, %10, %cst_25 {dimension_numbers = #tpu.dot_dimension_numbers<[1], [0], [0], [1], [0, 0, 1, 1], [], []>} : vector<256x32xf32>, vector<32x32xf32>, vector<256x32xf32> -> vector<256x32xf32>
    %49 = arith.addf %7, %48 : vector<256x32xf32>
    %50 = vector.shape_cast %47 : vector<256x32xf32> to vector<16x16x32xf32>
    %c32 = arith.constant 32 : index
    %c0_26 = arith.constant 0 : index
    %51 = vector.load %arg4[%c32, %c0_26] : memref<320x32xf32, #tpu.memory_space<vmem>>, vector<32x32xf32>
    %c128 = arith.constant 128 : index
    %c0_27 = arith.constant 0 : index
    %52 = vector.load %arg4[%c128, %c0_27] : memref<320x32xf32, #tpu.memory_space<vmem>>, vector<32x32xf32>
    %c224 = arith.constant 224 : index
    %c0_28 = arith.constant 0 : index
    %53 = vector.load %arg4[%c224, %c0_28] : memref<320x32xf32, #tpu.memory_space<vmem>>, vector<32x32xf32>
    %c1 = arith.constant 1 : index
    %c0_29 = arith.constant 0 : index
    %54 = vector.load %arg5[%c1, %c0_29] : memref<14x32xf32, #tpu.memory_space<vmem>>, vector<1x32xf32>
    %c4 = arith.constant 4 : index
    %c0_30 = arith.constant 0 : index
    %55 = vector.load %arg5[%c4, %c0_30] : memref<14x32xf32, #tpu.memory_space<vmem>>, vector<1x32xf32>
    %c7 = arith.constant 7 : index
    %c0_31 = arith.constant 0 : index
    %56 = vector.load %arg5[%c7, %c0_31] : memref<14x32xf32, #tpu.memory_space<vmem>>, vector<1x32xf32>
    %c10 = arith.constant 10 : index
    %c0_32 = arith.constant 0 : index
    %57 = vector.load %arg5[%c10, %c0_32] : memref<14x32xf32, #tpu.memory_space<vmem>>, vector<1x32xf32>
    "tpu.trace_start"() <{level = 10 : i32, message = "bij,bjh->bih"}> : () -> ()
    %cst_33 = arith.constant dense<0.000000e+00> : vector<16x16x32xf32>
    %58 = tpu.matmul %4, %50, %cst_33 {dimension_numbers = #tpu.dot_dimension_numbers<[2], [1], [1], [2], [0, 0, 0, 1, 1, 2], [0], [0]>} : vector<16x16x16xf32>, vector<16x16x32xf32>, vector<16x16x32xf32> -> vector<16x16x32xf32>
    "tpu.trace_stop"() : () -> ()
    %59 = arith.addf %50, %58 : vector<16x16x32xf32>
    %60 = vector.shape_cast %59 : vector<16x16x32xf32> to vector<256x32xf32>
    %cst_34 = arith.constant dense<0.000000e+00> : vector<256x32xf32>
    %61 = tpu.matmul %60, %51, %cst_34 {dimension_numbers = #tpu.dot_dimension_numbers<[1], [0], [0], [1], [0, 0, 1, 1], [], []>} : vector<256x32xf32>, vector<32x32xf32>, vector<256x32xf32> -> vector<256x32xf32>
    %62 = vector.broadcast %54 : vector<1x32xf32> to vector<256x32xf32>
    %63 = arith.addf %61, %62 : vector<256x32xf32>
    %cst_35 = arith.constant 0.000000e+00 : f32
    %64 = vector.broadcast %cst_35 : f32 to vector<256x32xf32>
    %65 = arith.maximumf %63, %64 : vector<256x32xf32>
    %cst_36 = arith.constant dense<0.000000e+00> : vector<256x32xf32>
    %66 = tpu.matmul %65, %52, %cst_36 {dimension_numbers = #tpu.dot_dimension_numbers<[1], [0], [0], [1], [0, 0, 1, 1], [], []>} : vector<256x32xf32>, vector<32x32xf32>, vector<256x32xf32> -> vector<256x32xf32>
    %67 = vector.broadcast %55 : vector<1x32xf32> to vector<256x32xf32>
    %68 = arith.addf %66, %67 : vector<256x32xf32>
    %cst_37 = arith.constant 0.000000e+00 : f32
    %69 = vector.broadcast %cst_37 : f32 to vector<256x32xf32>
    %70 = arith.maximumf %68, %69 : vector<256x32xf32>
    %cst_38 = arith.constant dense<0.000000e+00> : vector<256xf32>
    %71 = vector.multi_reduction <add>, %70, %cst_38 [1] : vector<256x32xf32> to vector<256xf32>
    %72 = vector.shape_cast %71 : vector<256xf32> to vector<256x1xf32>
    %cst_39 = arith.constant 3.200000e+01 : f32
    %73 = vector.broadcast %cst_39 : f32 to vector<256x1xf32>
    %74 = arith.divf %72, %73 : vector<256x1xf32>
    %75 = vector.broadcast %74 : vector<256x1xf32> to vector<256x32xf32>
    %76 = arith.subf %70, %75 : vector<256x32xf32>
    %77 = arith.mulf %76, %76 : vector<256x32xf32>
    %cst_40 = arith.constant dense<0.000000e+00> : vector<256xf32>
    %78 = vector.multi_reduction <add>, %77, %cst_40 [1] : vector<256x32xf32> to vector<256xf32>
    %79 = vector.shape_cast %78 : vector<256xf32> to vector<256x1xf32>
    %cst_41 = arith.constant 3.200000e+01 : f32
    %80 = vector.broadcast %cst_41 : f32 to vector<256x1xf32>
    %81 = arith.divf %79, %80 : vector<256x1xf32>
    %cst_42 = arith.constant 9.99999974E-6 : f32
    %82 = vector.broadcast %cst_42 : f32 to vector<256x1xf32>
    %83 = arith.addf %81, %82 : vector<256x1xf32>
    %84 = math.rsqrt %83 : vector<256x1xf32>
    %85 = vector.broadcast %84 : vector<256x1xf32> to vector<256x32xf32>
    %86 = arith.mulf %76, %85 : vector<256x32xf32>
    %87 = vector.broadcast %56 : vector<1x32xf32> to vector<256x32xf32>
    %88 = arith.mulf %86, %87 : vector<256x32xf32>
    %89 = vector.broadcast %57 : vector<1x32xf32> to vector<256x32xf32>
    %90 = arith.addf %88, %89 : vector<256x32xf32>
    %cst_43 = arith.constant dense<0.000000e+00> : vector<256x32xf32>
    %91 = tpu.matmul %90, %53, %cst_43 {dimension_numbers = #tpu.dot_dimension_numbers<[1], [0], [0], [1], [0, 0, 1, 1], [], []>} : vector<256x32xf32>, vector<32x32xf32>, vector<256x32xf32> -> vector<256x32xf32>
    %92 = arith.addf %49, %91 : vector<256x32xf32>
    %93 = vector.shape_cast %90 : vector<256x32xf32> to vector<16x16x32xf32>
    %c64 = arith.constant 64 : index
    %c0_44 = arith.constant 0 : index
    %94 = vector.load %arg4[%c64, %c0_44] : memref<320x32xf32, #tpu.memory_space<vmem>>, vector<32x32xf32>
    %c160 = arith.constant 160 : index
    %c0_45 = arith.constant 0 : index
    %95 = vector.load %arg4[%c160, %c0_45] : memref<320x32xf32, #tpu.memory_space<vmem>>, vector<32x32xf32>
    %c256 = arith.constant 256 : index
    %c0_46 = arith.constant 0 : index
    %96 = vector.load %arg4[%c256, %c0_46] : memref<320x32xf32, #tpu.memory_space<vmem>>, vector<32x32xf32>
    %c2 = arith.constant 2 : index
    %c0_47 = arith.constant 0 : index
    %97 = vector.load %arg5[%c2, %c0_47] : memref<14x32xf32, #tpu.memory_space<vmem>>, vector<1x32xf32>
    %c5 = arith.constant 5 : index
    %c0_48 = arith.constant 0 : index
    %98 = vector.load %arg5[%c5, %c0_48] : memref<14x32xf32, #tpu.memory_space<vmem>>, vector<1x32xf32>
    %c8 = arith.constant 8 : index
    %c0_49 = arith.constant 0 : index
    %99 = vector.load %arg5[%c8, %c0_49] : memref<14x32xf32, #tpu.memory_space<vmem>>, vector<1x32xf32>
    %c11 = arith.constant 11 : index
    %c0_50 = arith.constant 0 : index
    %100 = vector.load %arg5[%c11, %c0_50] : memref<14x32xf32, #tpu.memory_space<vmem>>, vector<1x32xf32>
    "tpu.trace_start"() <{level = 10 : i32, message = "bij,bjh->bih"}> : () -> ()
    %cst_51 = arith.constant dense<0.000000e+00> : vector<16x16x32xf32>
    %101 = tpu.matmul %4, %93, %cst_51 {dimension_numbers = #tpu.dot_dimension_numbers<[2], [1], [1], [2], [0, 0, 0, 1, 1, 2], [0], [0]>} : vector<16x16x16xf32>, vector<16x16x32xf32>, vector<16x16x32xf32> -> vector<16x16x32xf32>
    "tpu.trace_stop"() : () -> ()
    %102 = arith.addf %93, %101 : vector<16x16x32xf32>
    %103 = vector.shape_cast %102 : vector<16x16x32xf32> to vector<256x32xf32>
    %cst_52 = arith.constant dense<0.000000e+00> : vector<256x32xf32>
    %104 = tpu.matmul %103, %94, %cst_52 {dimension_numbers = #tpu.dot_dimension_numbers<[1], [0], [0], [1], [0, 0, 1, 1], [], []>} : vector<256x32xf32>, vector<32x32xf32>, vector<256x32xf32> -> vector<256x32xf32>
    %105 = vector.broadcast %97 : vector<1x32xf32> to vector<256x32xf32>
    %106 = arith.addf %104, %105 : vector<256x32xf32>
    %cst_53 = arith.constant 0.000000e+00 : f32
    %107 = vector.broadcast %cst_53 : f32 to vector<256x32xf32>
    %108 = arith.maximumf %106, %107 : vector<256x32xf32>
    %cst_54 = arith.constant dense<0.000000e+00> : vector<256x32xf32>
    %109 = tpu.matmul %108, %95, %cst_54 {dimension_numbers = #tpu.dot_dimension_numbers<[1], [0], [0], [1], [0, 0, 1, 1], [], []>} : vector<256x32xf32>, vector<32x32xf32>, vector<256x32xf32> -> vector<256x32xf32>
    %110 = vector.broadcast %98 : vector<1x32xf32> to vector<256x32xf32>
    %111 = arith.addf %109, %110 : vector<256x32xf32>
    %cst_55 = arith.constant 0.000000e+00 : f32
    %112 = vector.broadcast %cst_55 : f32 to vector<256x32xf32>
    %113 = arith.maximumf %111, %112 : vector<256x32xf32>
    %cst_56 = arith.constant dense<0.000000e+00> : vector<256xf32>
    %114 = vector.multi_reduction <add>, %113, %cst_56 [1] : vector<256x32xf32> to vector<256xf32>
    %115 = vector.shape_cast %114 : vector<256xf32> to vector<256x1xf32>
    %cst_57 = arith.constant 3.200000e+01 : f32
    %116 = vector.broadcast %cst_57 : f32 to vector<256x1xf32>
    %117 = arith.divf %115, %116 : vector<256x1xf32>
    %118 = vector.broadcast %117 : vector<256x1xf32> to vector<256x32xf32>
    %119 = arith.subf %113, %118 : vector<256x32xf32>
    %120 = arith.mulf %119, %119 : vector<256x32xf32>
    %cst_58 = arith.constant dense<0.000000e+00> : vector<256xf32>
    %121 = vector.multi_reduction <add>, %120, %cst_58 [1] : vector<256x32xf32> to vector<256xf32>
    %122 = vector.shape_cast %121 : vector<256xf32> to vector<256x1xf32>
    %cst_59 = arith.constant 3.200000e+01 : f32
    %123 = vector.broadcast %cst_59 : f32 to vector<256x1xf32>
    %124 = arith.divf %122, %123 : vector<256x1xf32>
    %cst_60 = arith.constant 9.99999974E-6 : f32
    %125 = vector.broadcast %cst_60 : f32 to vector<256x1xf32>
    %126 = arith.addf %124, %125 : vector<256x1xf32>
    %127 = math.rsqrt %126 : vector<256x1xf32>
    %128 = vector.broadcast %127 : vector<256x1xf32> to vector<256x32xf32>
    %129 = arith.mulf %119, %128 : vector<256x32xf32>
    %130 = vector.broadcast %99 : vector<1x32xf32> to vector<256x32xf32>
    %131 = arith.mulf %129, %130 : vector<256x32xf32>
    %132 = vector.broadcast %100 : vector<1x32xf32> to vector<256x32xf32>
    %133 = arith.addf %131, %132 : vector<256x32xf32>
    %cst_61 = arith.constant dense<0.000000e+00> : vector<256x32xf32>
    %134 = tpu.matmul %133, %96, %cst_61 {dimension_numbers = #tpu.dot_dimension_numbers<[1], [0], [0], [1], [0, 0, 1, 1], [], []>} : vector<256x32xf32>, vector<32x32xf32>, vector<256x32xf32> -> vector<256x32xf32>
    %135 = arith.addf %92, %134 : vector<256x32xf32>
    %c12 = arith.constant 12 : index
    %c0_62 = arith.constant 0 : index
    %136 = vector.load %arg5[%c12, %c0_62] : memref<14x32xf32, #tpu.memory_space<vmem>>, vector<1x32xf32>
    %137 = vector.broadcast %136 : vector<1x32xf32> to vector<256x32xf32>
    %138 = arith.addf %135, %137 : vector<256x32xf32>
    %cst_63 = arith.constant 0.000000e+00 : f32
    %139 = vector.broadcast %cst_63 : f32 to vector<256x32xf32>
    %140 = arith.maximumf %138, %139 : vector<256x32xf32>
    %c0_64 = arith.constant 0 : index
    %c0_65 = arith.constant 0 : index
    %141 = vector.load %arg3[%c0_64, %c0_65] : memref<8x256xf32, #tpu.memory_space<vmem>>, vector<8x256xf32>
    %cst_66 = arith.constant dense<0.000000e+00> : vector<8x32xf32>
    %142 = tpu.matmul %141, %140, %cst_66 {dimension_numbers = #tpu.dot_dimension_numbers<[1], [0], [0], [1], [0, 0, 1, 1], [], []>} : vector<8x256xf32>, vector<256x32xf32>, vector<8x32xf32> -> vector<8x32xf32>
    %c288 = arith.constant 288 : index
    %c0_67 = arith.constant 0 : index
    %143 = vector.load %arg4[%c288, %c0_67] : memref<320x32xf32, #tpu.memory_space<vmem>>, vector<32x32xf32>
    %c13 = arith.constant 13 : index
    %c0_68 = arith.constant 0 : index
    %144 = vector.load %arg5[%c13, %c0_68] : memref<14x32xf32, #tpu.memory_space<vmem>>, vector<1x32xf32>
    %cst_69 = arith.constant dense<0.000000e+00> : vector<8x32xf32>
    %145 = tpu.matmul %142, %143, %cst_69 {dimension_numbers = #tpu.dot_dimension_numbers<[1], [0], [0], [1], [0, 0, 1, 1], [], []>} : vector<8x32xf32>, vector<32x32xf32>, vector<8x32xf32> -> vector<8x32xf32>
    %146 = vector.broadcast %144 : vector<1x32xf32> to vector<8x32xf32>
    %147 = arith.addf %145, %146 : vector<8x32xf32>
    %cst_70 = arith.constant 0.000000e+00 : f32
    %148 = vector.broadcast %cst_70 : f32 to vector<8x32xf32>
    %149 = arith.maximumf %147, %148 : vector<8x32xf32>
    %c0_71 = arith.constant 0 : index
    %c0_72 = arith.constant 0 : index
    %150 = vector.load %arg6[%c0_71, %c0_72] : memref<33x128xf32, #tpu.memory_space<vmem>>, vector<32x128xf32>
    %cst_73 = arith.constant dense<0.000000e+00> : vector<8x128xf32>
    %151 = tpu.matmul %149, %150, %cst_73 {dimension_numbers = #tpu.dot_dimension_numbers<[1], [0], [0], [1], [0, 0, 1, 1], [], []>} : vector<8x32xf32>, vector<32x128xf32>, vector<8x128xf32> -> vector<8x128xf32>
    %c32_74 = arith.constant 32 : index
    %c0_75 = arith.constant 0 : index
    %152 = vector.load %arg6[%c32_74, %c0_75] : memref<33x128xf32, #tpu.memory_space<vmem>>, vector<1x128xf32>
    %153 = vector.broadcast %152 : vector<1x128xf32> to vector<8x128xf32>
    %154 = arith.addf %151, %153 : vector<8x128xf32>
    %c0_76 = arith.constant 0 : index
    %c0_77 = arith.constant 0 : index
    %155 = vector.load %arg7[%c0_76, %c0_77] : memref<8x128xf32, #tpu.memory_space<vmem>>, vector<8x128xf32>
    tpu.vector_store %arg7[%c0_76, %c0_77], %154 {strides = array<i32>} : memref<8x128xf32, #tpu.memory_space<vmem>>, vector<8x128xf32>,
    return
  }
  func.func @transform_0(%arg0: i32) -> (i32, i32, i32, i32) {
    %c0_i32 = arith.constant 0 : i32
    %c0_i32_0 = arith.constant 0 : i32
    %c0_i32_1 = arith.constant 0 : i32
    %c0_i32_2 = arith.constant 0 : i32
    return %arg0, %c0_i32, %c0_i32_0, %c0_i32_1 : i32, i32, i32, i32
  }
  func.func @transform_1(%arg0: i32) -> (i32, i32, i32) {
    %c0_i32 = arith.constant 0 : i32
    %c0_i32_0 = arith.constant 0 : i32
    %c0_i32_1 = arith.constant 0 : i32
    return %arg0, %c0_i32, %c0_i32_0 : i32, i32, i32
  }
  func.func @transform_2(%arg0: i32) -> (i32, i32) {
    %c0_i32 = arith.constant 0 : i32
    %c0_i32_0 = arith.constant 0 : i32
    return %arg0, %c0_i32 : i32, i32
  }
  func.func @transform_3(%arg0: i32) -> (i32, i32) {
    %c0_i32 = arith.constant 0 : i32
    %c0_i32_0 = arith.constant 0 : i32
    %c0_i32_1 = arith.constant 0 : i32
    return %c0_i32, %c0_i32_0 : i32, i32
  }
  func.func @transform_4(%arg0: i32) -> (i32, i32) {
    %c0_i32 = arith.constant 0 : i32
    %c0_i32_0 = arith.constant 0 : i32
    %c0_i32_1 = arith.constant 0 : i32
    return %c0_i32, %c0_i32_0 : i32, i32
  }
  func.func @transform_5(%arg0: i32) -> (i32, i32) {
    %c0_i32 = arith.constant 0 : i32
    %c0_i32_0 = arith.constant 0 : i32
    %c0_i32_1 = arith.constant 0 : i32
    return %c0_i32, %c0_i32_0 : i32, i32
  }
  func.func @transform_6(%arg0: i32) -> (i32, i32) {
    %c0_i32 = arith.constant 0 : i32
    %c0_i32_0 = arith.constant 0 : i32
    return %arg0, %c0_i32 : i32, i32
  }
}

</mosaic_0001>

<llo_original>
// kernel: tpu_custom_call.1
$region0: #{tpu_custom_call.1}
  #allocation0 [shape = 'u32[]', space=smem, size = 0x4, offset = 0x4, fixed_abs, tag = 'smem constant byte address 0x4 - core index']
  #allocation1 [shape = 'u32[72,128]{1,0:T(1,128)}', space=vmem, size = 0x9000, scoped, tag = 'internal scratch']
  %s0 = inlined_call_operand.hbm [shape: f32[16,2,16,32], index: 0, kind: input, shape index: {}]
  %s1 = inlined_call_operand.vmem [shape: f32[16,16,16], index: 1, kind: input, shape index: {}]
  %s2 = inlined_call_operand.vmem [shape: f32[16,256], index: 2, kind: input, shape index: {}]
  %s3 = inlined_call_operand.vmem [shape: f32[320,32], index: 3, kind: input, shape index: {}]
  %s4 = inlined_call_operand.vmem [shape: f32[14,32], index: 4, kind: input, shape index: {}]
  %s5 = inlined_call_operand.vmem [shape: f32[33,128], index: 5, kind: input, shape index: {}]
  %s6 = inlined_call_operand.hbm [shape: f32[16,128], index: 6, kind: output, shape index: {}]
  %s7 = sld [smem:[#allocation0]]
  $region61: #{tpu_custom_call.1} parent=0
    _
  %s9 = ssub.s32 1, %s7
  %s10 = scalar_select 0, %s9, %s7
  $region1: #{tpu_custom_call.1} parent=0
    #allocation2 [shape = 'u8[262144]{0}', space=vmem, size = 0x40000, scoped, tag = 'input window, operand 0']
    #allocation3 [shape = 's32[2]{0}', space=sflag, size = 0x8, scoped, tag = 'scoped memory for tpu_custom_call.1']
    #allocation4 [shape = 's32[2]{0}', space=sflag, size = 0x8, scoped, tag = 'scoped memory for tpu_custom_call.1']
    #allocation5 [shape = 'u8[8192]{0}', space=vmem, size = 0x2000, scoped, tag = 'output window, operand 0']
    %11 = vsyncpa [#allocation3], 0
    %s12 = scalar_lea.sflag [#allocation3], 1
    %13 = vsyncpa %s12, 0
    %14 = vsyncpa [#allocation4], 0
    %s15 = scalar_lea.sflag [#allocation4], 1
    %16 = vsyncpa %s15, 0
    loop: start=0, step=1, limit=4
    $region2: #{tpu_custom_call.1} parent=1 // loop_pre_header
      _
    $region3: #{tpu_custom_call.1} parent=1 // loop_header
      %s18 = sphi 0, %s22
      %p19 = scmp.ge.s32.totalorder %s18, 4
      %s28 = sphi 0, %s30
      %s31 = sphi 0, %s28
      %s32 = sphi 0, %s31
      %s48 = sphi 0, %s32
      %s54 = sphi 0, %s56
      %s57 = sphi 0, %s54
      %s58 = sphi 0, %s57
      %s74 = sphi 0, %s58
      %s80 = sphi 0, %s82
      %s83 = sphi 0, %s80
      %s84 = sphi 0, %s83
      %s100 = sphi 0, %s84
      %s104 = sphi 0, %s104
      %s106 = sphi 0, %s104
      %s107 = sphi 0, %s106
      %s121 = sphi 0, %s107
      %s125 = sphi 0, %s125
      %s127 = sphi 0, %s125
      %s128 = sphi 0, %s127
      %s142 = sphi 0, %s128
      %s146 = sphi 0, %s146
      %s148 = sphi 0, %s146
      %s149 = sphi 0, %s148
      %s163 = sphi 0, %s149
      %s169 = sphi 0, %s171
      %s172 = sphi 0, %s169
      %s173 = sphi 0, %s172
      %s189 = sphi 0, %s173
    $region4: #{tpu_custom_call.1} parent=1 // loop_header_branch
      %21 = sbr.rel (%p19) target = $region8
    $region5: #{tpu_custom_call.1} parent=1 // loop_body
      %s23 = ssub.s32 %s18, 1
      %s24 = ssub.s32 %s18, 2
      %s25 = sadd.s32 %s18, 1
      %s26 = ssub.s32 %s18, %s25
      %p27 = scmp.eq.s32.totalorder %s26, 0
      %s29 = sadd.s32 %s28, 1
      %s30 = scalar_select %p27, %s28, %s29
      %p33 = pneg %p27
      %p34 = scmp.eq.s32.totalorder %s18, 1
      %p35 = por %p33, %p34
      %p36 = scmp.ne.s32.totalorder %s28, %s31
      %p37 = scmp.eq.s32.totalorder %s18, 0
      %p38 = por %p36, %p37
      %p39 = scmp.ne.s32.totalorder %s28, %s31
      %p40 = scmp.eq.s32.totalorder %s23, 1
      %p41 = por %p39, %p40
      %p42 = scmp.ne.s32.totalorder %s31, %s32
      %p43 = scmp.eq.s32.totalorder %s23, 0
      %p44 = por %p42, %p43
      %p45 = scmp.ne.s32.totalorder %s31, %s32
      %p46 = scmp.eq.s32.totalorder %s24, 1
      %p47 = por %p45, %p46
      %p49 = scmp.ne.s32.totalorder %s32, %s48
      %p50 = scmp.eq.s32.totalorder %s24, 0
      %p51 = por %p49, %p50
      %s52 = ssub.s32 %s18, %s25
      %p53 = scmp.eq.s32.totalorder %s52, 0
      %s55 = sadd.s32 %s54, 1
      %s56 = scalar_select %p53, %s54, %s55
      %p59 = pneg %p53
      %p60 = scmp.eq.s32.totalorder %s18, 1
      %p61 = por %p59, %p60
      %p62 = scmp.ne.s32.totalorder %s54, %s57
      %p63 = scmp.eq.s32.totalorder %s18, 0
      %p64 = por %p62, %p63
      %p65 = scmp.ne.s32.totalorder %s54, %s57
      %p66 = scmp.eq.s32.totalorder %s23, 1
      %p67 = por %p65, %p66
      %p68 = scmp.ne.s32.totalorder %s57, %s58
      %p69 = scmp.eq.s32.totalorder %s23, 0
      %p70 = por %p68, %p69
      %p71 = scmp.ne.s32.totalorder %s57, %s58
      %p72 = scmp.eq.s32.totalorder %s24, 1
      %p73 = por %p71, %p72
      %p75 = scmp.ne.s32.totalorder %s58, %s74
      %p76 = scmp.eq.s32.totalorder %s24, 0
      %p77 = por %p75, %p76
      %s78 = ssub.s32 %s18, %s25
      %p79 = scmp.eq.s32.totalorder %s78, 0
      %s81 = sadd.s32 %s80, 1
      %s82 = scalar_select %p79, %s80, %s81
      %p85 = pneg %p79
      %p86 = scmp.eq.s32.totalorder %s18, 1
      %p87 = por %p85, %p86
      %p88 = scmp.ne.s32.totalorder %s80, %s83
      %p89 = scmp.eq.s32.totalorder %s18, 0
      %p90 = por %p88, %p89
      %p91 = scmp.ne.s32.totalorder %s80, %s83
      %p92 = scmp.eq.s32.totalorder %s23, 1
      %p93 = por %p91, %p92
      %p94 = scmp.ne.s32.totalorder %s83, %s84
      %p95 = scmp.eq.s32.totalorder %s23, 0
      %p96 = por %p94, %p95
      %p97 = scmp.ne.s32.totalorder %s83, %s84
      %p98 = scmp.eq.s32.totalorder %s24, 1
      %p99 = por %p97, %p98
      %p101 = scmp.ne.s32.totalorder %s84, %s100
      %p102 = scmp.eq.s32.totalorder %s24, 0
      %p103 = por %p101, %p102
      %s105 = sadd.s32 %s104, 1
      %p108 = scmp.eq.s32.totalorder %s18, 1
      %p109 = scmp.ne.s32.totalorder %s104, %s106
      %p110 = scmp.eq.s32.totalorder %s18, 0
      %p111 = por %p109, %p110
      %p112 = scmp.ne.s32.totalorder %s104, %s106
      %p113 = scmp.eq.s32.totalorder %s23, 1
      %p114 = por %p112, %p113
      %p115 = scmp.ne.s32.totalorder %s106, %s107
      %p116 = scmp.eq.s32.totalorder %s23, 0
      %p117 = por %p115, %p116
      %p118 = scmp.ne.s32.totalorder %s106, %s107
      %p119 = scmp.eq.s32.totalorder %s24, 1
      %p120 = por %p118, %p119
      %p122 = scmp.ne.s32.totalorder %s107, %s121
      %p123 = scmp.eq.s32.totalorder %s24, 0
      %p124 = por %p122, %p123
      %s126 = sadd.s32 %s125, 1
      %p129 = scmp.eq.s32.totalorder %s18, 1
      %p130 = scmp.ne.s32.totalorder %s125, %s127
      %p131 = scmp.eq.s32.totalorder %s18, 0
      %p132 = por %p130, %p131
      %p133 = scmp.ne.s32.totalorder %s125, %s127
      %p134 = scmp.eq.s32.totalorder %s23, 1
      %p135 = por %p133, %p134
      %p136 = scmp.ne.s32.totalorder %s127, %s128
      %p137 = scmp.eq.s32.totalorder %s23, 0
      %p138 = por %p136, %p137
      %p139 = scmp.ne.s32.totalorder %s127, %s128
      %p140 = scmp.eq.s32.totalorder %s24, 1
      %p141 = por %p139, %p140
      %p143 = scmp.ne.s32.totalorder %s128, %s142
      %p144 = scmp.eq.s32.totalorder %s24, 0
      %p145 = por %p143, %p144
      %s147 = sadd.s32 %s146, 1
      %p150 = scmp.eq.s32.totalorder %s18, 1
      %p151 = scmp.ne.s32.totalorder %s146, %s148
      %p152 = scmp.eq.s32.totalorder %s18, 0
      %p153 = por %p151, %p152
      %p154 = scmp.ne.s32.totalorder %s146, %s148
      %p155 = scmp.eq.s32.totalorder %s23, 1
      %p156 = por %p154, %p155
      %p157 = scmp.ne.s32.totalorder %s148, %s149
      %p158 = scmp.eq.s32.totalorder %s23, 0
      %p159 = por %p157, %p158
      %p160 = scmp.ne.s32.totalorder %s148, %s149
      %p161 = scmp.eq.s32.totalorder %s24, 1
      %p162 = por %p160, %p161
      %p164 = scmp.ne.s32.totalorder %s149, %s163
      %p165 = scmp.eq.s32.totalorder %s24, 0
      %p166 = por %p164, %p165
      %s167 = ssub.s32 %s18, %s25
      %p168 = scmp.eq.s32.totalorder %s167, 0
      %s170 = sadd.s32 %s169, 1
      %s171 = scalar_select %p168, %s169, %s170
      %p174 = pneg %p168
      %p175 = scmp.eq.s32.totalorder %s18, 1
      %p176 = por %p174, %p175
      %p177 = scmp.ne.s32.totalorder %s169, %s172
      %p178 = scmp.eq.s32.totalorder %s18, 0
      %p179 = por %p177, %p178
      %p180 = scmp.ne.s32.totalorder %s169, %s172
      %p181 = scmp.eq.s32.totalorder %s23, 1
      %p182 = por %p180, %p181
      %p183 = scmp.ne.s32.totalorder %s172, %s173
      %p184 = scmp.eq.s32.totalorder %s23, 0
      %p185 = por %p183, %p184
      %p186 = scmp.ne.s32.totalorder %s172, %s173
      %p187 = scmp.eq.s32.totalorder %s24, 1
      %p188 = por %p186, %p187
      %p190 = scmp.ne.s32.totalorder %s173, %s189
      %p191 = scmp.eq.s32.totalorder %s24, 0
      %p192 = por %p190, %p191
      %p193 = scmp.le.s32.totalorder 1, %s18
      %p194 = scmp.lt.s32.totalorder %s18, 3
      %p195 = pnand %p193, %p194
      %p196 = pneg %p195
      // Predicated region
      $region9: #{tpu_custom_call.1} parent=5 // pred_check
        _
      $region10: #{tpu_custom_call.1} parent=5 // pred_check_branch
        %198 = sbr.rel (%p195) target = $region12
      $region11: #{tpu_custom_call.1} parent=5 // pred_region
        %s199 = ssub.s32 %s18, 1
        // Predicated region
        $region13: #{tpu_custom_call.1} parent=11 // pred_check
          %p200 = pneg %p117
        $region14: #{tpu_custom_call.1} parent=11 // pred_check_branch
          %202 = sbr.rel (%p200) target = $region16
        $region15: #{tpu_custom_call.1} parent=11 // pred_region
          _
        $region16: #{tpu_custom_call.1} parent=11 // pred_fallthru
          _
        // Predicated region
        $region17: #{tpu_custom_call.1} parent=11 // pred_check
          %p203 = pneg %p138
        $region18: #{tpu_custom_call.1} parent=11 // pred_check_branch
          %205 = sbr.rel (%p203) target = $region20
        $region19: #{tpu_custom_call.1} parent=11 // pred_region
          _
        $region20: #{tpu_custom_call.1} parent=11 // pred_fallthru
          _
        // Predicated region
        $region21: #{tpu_custom_call.1} parent=11 // pred_check
          %p206 = pneg %p159
        $region22: #{tpu_custom_call.1} parent=11 // pred_check_branch
          %208 = sbr.rel (%p206) target = $region24
        $region23: #{tpu_custom_call.1} parent=11 // pred_region
          _
        $region24: #{tpu_custom_call.1} parent=11 // pred_fallthru
          _
      $region12: #{tpu_custom_call.1} parent=5 // pred_fallthru
        _
      %p209 = scmp.lt.s32.totalorder %s18, 2
      // Predicated region
      $region25: #{tpu_custom_call.1} parent=5 // pred_check
        %p210 = pneg %p209
      $region26: #{tpu_custom_call.1} parent=5 // pred_check_branch
        %212 = sbr.rel (%p210) target = $region28
      $region27: #{tpu_custom_call.1} parent=5 // pred_region
        // Predicated region
        $region29: #{tpu_custom_call.1} parent=27 // pred_check
          %p213 = pneg %p38
        $region30: #{tpu_custom_call.1} parent=27 // pred_check_branch
          %215 = sbr.rel (%p213) target = $region32
        $region31: #{tpu_custom_call.1} parent=27 // pred_region
          %s216 = sand.u32 %s28, 1
          %s217 = scalar_lea.sflag [#allocation3], %s216
          %s218 = sand.u32 %s28, 1
          %s219 = smul.addr %s218, 256
          %s220 = scalar_lea.vmem [#allocation2], %s219
          %s221 = smul.u32 8, %s18
          %223 = vsyncadd %s217, 0
          %s224 = smul.addr %s221, 4
          %s225 = smul.addr %s224, 8
          %s226 = scalar_lea.hbm %s0, %s225
          %s227 = sshll.u32 %s226, 4
          %s228 = int_to_ptr.hbm [resolvable:$true] %s227
          %s229 = sshll.u32 %s220, 4
          %s230 = int_to_ptr.vmem [resolvable:$true] %s229
          %235 = dma.hbm_to_vmem [thread:$0]  %s228, 4096, %s230, %s217, 128, 128, 8
        $region32: #{tpu_custom_call.1} parent=27 // pred_fallthru
          _
        // Predicated region
        $region33: #{tpu_custom_call.1} parent=27 // pred_check
          %p236 = pneg %p64
        $region34: #{tpu_custom_call.1} parent=27 // pred_check_branch
          %238 = sbr.rel (%p236) target = $region36
        $region35: #{tpu_custom_call.1} parent=27 // pred_region
          %s239 = smul.u32 8, %s18
          %p240 = scmp.lt.s32.totalorder %s239, 15
          %s241 = scalar_select %p240, %s239, 15
          %s242 = smul.addr %s241, 2
          %s243 = smul.addr %s242, 8
          %s244 = scalar_lea.vmem %s1, %s243
          %s245 = smul.u32 8, %s18
        $region36: #{tpu_custom_call.1} parent=27 // pred_fallthru
          _
        // Predicated region
        $region37: #{tpu_custom_call.1} parent=27 // pred_check
          %p246 = pneg %p90
        $region38: #{tpu_custom_call.1} parent=27 // pred_check_branch
          %248 = sbr.rel (%p246) target = $region40
        $region39: #{tpu_custom_call.1} parent=27 // pred_region
          %p249 = scmp.lt.s32.totalorder %s18, 1
          %s250 = scalar_select %p249, %s18, 1
          %s251 = smul.addr %s250, 2
          %s252 = smul.addr %s251, 8
          %s253 = scalar_lea.vmem %s2, %s252
        $region40: #{tpu_custom_call.1} parent=27 // pred_fallthru
          _
      $region28: #{tpu_custom_call.1} parent=5 // pred_fallthru
        _
      %p254 = scmp.le.s32.totalorder 1, %s18
      %p255 = scmp.lt.s32.totalorder %s18, 3
      %p256 = pnand %p254, %p255
      %p257 = pneg %p256
      // Predicated region
      $region41: #{tpu_custom_call.1} parent=5 // pred_check
        _
      $region42: #{tpu_custom_call.1} parent=5 // pred_check_branch
        %259 = sbr.rel (%p256) target = $region44
      $region43: #{tpu_custom_call.1} parent=5 // pred_region
        %s260 = ssub.s32 %s18, 1
        %s261 = sand.u32 %s31, 1
        %s262 = scalar_lea.sflag [#allocation3], %s261
        %s263 = sand.u32 %s31, 1
        %s264 = smul.addr %s263, 256
        %s265 = scalar_lea.vmem [#allocation2], %s264
        // Predicated region
        $region45: #{tpu_custom_call.1} parent=43 // pred_check
          %p266 = pneg %p44
        $region46: #{tpu_custom_call.1} parent=43 // pred_check_branch
          %268 = sbr.rel (%p266) target = $region48
        $region47: #{tpu_custom_call.1} parent=43 // pred_region
          %270 = dma.done %s262, 4096
        $region48: #{tpu_custom_call.1} parent=43 // pred_fallthru
          _
        %s271 = sand.u32 %s31, 1
        %s272 = scalar_lea.sflag [#allocation3], %s271
        %s273 = sand.u32 %s31, 1
        %s274 = smul.addr %s273, 256
        %s275 = scalar_lea.vmem [#allocation2], %s274
        %p276 = pneg %p44
        %p277 = pneg %p41
        %s278 = smul.u32 8, %s23
        %p279 = scmp.lt.s32.totalorder %s278, 15
        %s280 = scalar_select %p279, %s278, 15
        %s281 = smul.addr %s280, 2
        %s282 = smul.addr %s281, 8
        %s283 = scalar_lea.vmem %s1, %s282
        %p284 = pneg %p70
        %p285 = pneg %p67
        %p286 = scmp.lt.s32.totalorder %s23, 1
        %s287 = scalar_select %p286, %s23, 1
        %s288 = smul.addr %s287, 2
        %s289 = smul.addr %s288, 8
        %s290 = scalar_lea.vmem %s2, %s289
        %p291 = pneg %p96
        %p292 = pneg %p93
        %p293 = pneg %p117
        %p294 = pneg %p114
        %p295 = pneg %p138
        %p296 = pneg %p135
        %p297 = pneg %p159
        %p298 = pneg %p156
        %p299 = pneg %p185
        %p300 = pneg %p182
        %s301 = sand.u32 %s172, 1
        %s302 = scalar_lea.sflag [#allocation4], %s301
        %s303 = sand.u32 %s172, 1
        %s304 = smul.addr %s303, 8
        %s305 = scalar_lea.vmem [#allocation5], %s304
        %s306 = smul.u32 8, %s23
        %s307 = smul.u32 8, %s23
        %p308 = scmp.lt.s32.totalorder %s307, 15
        %s309 = scalar_select %p308, %s307, 15
        %s310 = smul.addr %s309, 2
        %s311 = smul.addr %s310, 8
        %s312 = scalar_lea.vmem %s1, %s311
        %s313 = smul.u32 8, %s23
        %p314 = scmp.lt.s32.totalorder %s23, 1
        %s315 = scalar_select %p314, %s23, 1
        %s316 = smul.addr %s315, 2
        %s317 = smul.addr %s316, 8
        %s318 = scalar_lea.vmem %s2, %s317
        %v319 = vld [vmem:[%s312] sm:$0xff]
        %v320 = vld [vmem:[%s312 + $0x8] sm:$0xff]
        %v321 = vld [vmem:[%s312 + $0x10] sm:$0xff]
        %v322 = vld [vmem:[%s312 + $0x18] sm:$0xff]
        %v323 = vld [vmem:[%s312 + $0x20] sm:$0xff]
        %v324 = vld [vmem:[%s312 + $0x28] sm:$0xff]
        %v325 = vld [vmem:[%s312 + $0x30] sm:$0xff]
        %v326 = vld [vmem:[%s312 + $0x38] sm:$0xff]
        %v327 = vld [vmem:[%s312 + $0x40] sm:$0xff]
        %v328 = vld [vmem:[%s312 + $0x48] sm:$0xff]
        %v329 = vld [vmem:[%s312 + $0x50] sm:$0xff]
        %v330 = vld [vmem:[%s312 + $0x58] sm:$0xff]
        %v331 = vld [vmem:[%s312 + $0x60] sm:$0xff]
        %v332 = vld [vmem:[%s312 + $0x68] sm:$0xff]
        %v333 = vld [vmem:[%s312 + $0x70] sm:$0xff]
        %v334 = vld [vmem:[%s312 + $0x78] sm:$0xff]
        %v335 = vld [vmem:[%s265] sm:$0xff]
        %v336 = vld [vmem:[%s265 + $0x8] sm:$0xff]
        %v337 = vld [vmem:[%s265 + $0x10] sm:$0xff]
        %v338 = vld [vmem:[%s265 + $0x18] sm:$0xff]
        %v339 = vld [vmem:[%s265 + $0x20] sm:$0xff]
        %v340 = vld [vmem:[%s265 + $0x28] sm:$0xff]
        %v341 = vld [vmem:[%s265 + $0x30] sm:$0xff]
        %v342 = vld [vmem:[%s265 + $0x38] sm:$0xff]
        %v343 = vld [vmem:[%s265 + $0x40] sm:$0xff]
        %v344 = vld [vmem:[%s265 + $0x48] sm:$0xff]
        %v345 = vld [vmem:[%s265 + $0x50] sm:$0xff]
        %v346 = vld [vmem:[%s265 + $0x58] sm:$0xff]
        %v347 = vld [vmem:[%s265 + $0x60] sm:$0xff]
        %v348 = vld [vmem:[%s265 + $0x68] sm:$0xff]
        %v349 = vld [vmem:[%s265 + $0x70] sm:$0xff]
        %v350 = vld [vmem:[%s265 + $0x78] sm:$0xff]
        %v351 = vld [vmem:[%s265 + $0x80] sm:$0xff]
        %v352 = vld [vmem:[%s265 + $0x88] sm:$0xff]
        %v353 = vld [vmem:[%s265 + $0x90] sm:$0xff]
        %v354 = vld [vmem:[%s265 + $0x98] sm:$0xff]
        %v355 = vld [vmem:[%s265 + $0xa0] sm:$0xff]
        %v356 = vld [vmem:[%s265 + $0xa8] sm:$0xff]
        %v357 = vld [vmem:[%s265 + $0xb0] sm:$0xff]
        %v358 = vld [vmem:[%s265 + $0xb8] sm:$0xff]
        %v359 = vld [vmem:[%s265 + $0xc0] sm:$0xff]
        %v360 = vld [vmem:[%s265 + $0xc8] sm:$0xff]
        %v361 = vld [vmem:[%s265 + $0xd0] sm:$0xff]
        %v362 = vld [vmem:[%s265 + $0xd8] sm:$0xff]
        %v363 = vld [vmem:[%s265 + $0xe0] sm:$0xff]
        %v364 = vld [vmem:[%s265 + $0xe8] sm:$0xff]
        %v365 = vld [vmem:[%s265 + $0xf0] sm:$0xff]
        %v366 = vld [vmem:[%s265 + $0xf8] sm:$0xff]
        %v367 = vld [vmem:[%s3] sm:$0xff]
        %v368 = vld [vmem:[%s3 + $0x8] sm:$0xff]
        %v369 = vld [vmem:[%s3 + $0x10] sm:$0xff]
        %v370 = vld [vmem:[%s3 + $0x18] sm:$0xff]
        %v371 = vld [vmem:[%s3 + $0x60] sm:$0xff]
        %v372 = vld [vmem:[%s3 + $0x68] sm:$0xff]
        %v373 = vld [vmem:[%s3 + $0x70] sm:$0xff]
        %v374 = vld [vmem:[%s3 + $0x78] sm:$0xff]
        %v375 = vld [vmem:[%s3 + $0xc0] sm:$0xff]
        %v376 = vld [vmem:[%s3 + $0xc8] sm:$0xff]
        %v377 = vld [vmem:[%s3 + $0xd0] sm:$0xff]
        %v378 = vld [vmem:[%s3 + $0xd8] sm:$0xff]
        %v379 = vld [vmem:[%s4] sm:$0x1]
        %v380 = vld [vmem:[%s4 + $0x3] sm:$0x1]
        %v381 = vld [vmem:[%s4 + $0x6] sm:$0x1]
        %v382 = vld [vmem:[%s4 + $0x9] sm:$0x1]
        %vm383 = vcmask 130048
        %v385 = vsel %vm383, %v319, 0
        %v388 = vsel %vm383, %v320, 0
        %390 = vmatpush.msra.mxu0 0.0
        %391 = vmatpush.msra.mxu0 0.0
        %392 = vmatpush.msra.mxu0 0.0
        %393 = vmatpush.msra.mxu0 0.0
        %394 = vmatpush.msra.mxu0 0.0
        %395 = vmatpush.msra.mxu0 0.0
        %396 = vmatpush.msra.mxu0 0.0
        %397 = vmatpush.msra.mxu0 0.0
        %398 = vmatpush.msra.mxu0 0.0
        %399 = vmatpush.msra.mxu0 0.0
        %400 = vmatpush.msra.mxu0 0.0
        %401 = vmatpush.msra.mxu0 0.0
        %402 = vmatpush.msra.mxu0 0.0
        %403 = vmatpush.msra.mxu0 0.0
        %404 = vmatpush.msra.mxu0 %v336
        %405 = vmatpush.msra.mxu0 %v335
        %406 = vmatmul.f32.gmra.mxu0 %v385
        %v407 = vpop.f32.mrf.mxu0
        %v408 = vadd.f32 0.0, %v407
        %409 = vmatmul.f32.gmra.mxu0 %v388
        %v410 = vpop.f32.mrf.mxu0
        %v411 = vadd.f32 0.0, %v410
        %412 = vdwg.mxu0
        %413 = vmatpush.msra.mxu0 0.0
        %414 = vmatpush.msra.mxu0 0.0
        %415 = vmatpush.msra.mxu0 0.0
        %416 = vmatpush.msra.mxu0 0.0
        %417 = vmatpush.msra.mxu0 0.0
        %418 = vmatpush.msra.mxu0 0.0
        %419 = vmatpush.msra.mxu0 0.0
        %420 = vmatpush.msra.mxu0 0.0
        %421 = vmatpush.msra.mxu0 0.0
        %422 = vmatpush.msra.mxu0 0.0
        %423 = vmatpush.msra.mxu0 0.0
        %424 = vmatpush.msra.mxu0 0.0
        %425 = vmatpush.msra.mxu0 0.0
        %426 = vmatpush.msra.mxu0 0.0
        %427 = vmatpush.msra.mxu0 %v338
        %428 = vmatpush.msra.mxu0 %v337
        %429 = vmatmul.f32.gmra.mxu0 %v385
        %v430 = vpop.f32.mrf.mxu0
        %v431 = vadd.f32 0.0, %v430
        %432 = vmatmul.f32.gmra.mxu0 %v388
        %v433 = vpop.f32.mrf.mxu0
        %v434 = vadd.f32 0.0, %v433
        %435 = vdwg.mxu0
        %v437 = vsel %vm383, %v321, 0
        %v440 = vsel %vm383, %v322, 0
        %442 = vmatpush.msra.mxu0 0.0
        %443 = vmatpush.msra.mxu0 0.0
        %444 = vmatpush.msra.mxu0 0.0
        %445 = vmatpush.msra.mxu0 0.0
        %446 = vmatpush.msra.mxu0 0.0
        %447 = vmatpush.msra.mxu0 0.0
        %448 = vmatpush.msra.mxu0 0.0
        %449 = vmatpush.msra.mxu0 0.0
        %450 = vmatpush.msra.mxu0 0.0
        %451 = vmatpush.msra.mxu0 0.0
        %452 = vmatpush.msra.mxu0 0.0
        %453 = vmatpush.msra.mxu0 0.0
        %454 = vmatpush.msra.mxu0 0.0
        %455 = vmatpush.msra.mxu0 0.0
        %456 = vmatpush.msra.mxu0 %v340
        %457 = vmatpush.msra.mxu0 %v339
        %458 = vmatmul.f32.gmra.mxu0 %v437
        %v459 = vpop.f32.mrf.mxu0
        %v460 = vadd.f32 0.0, %v459
        %461 = vmatmul.f32.gmra.mxu0 %v440
        %v462 = vpop.f32.mrf.mxu0
        %v463 = vadd.f32 0.0, %v462
        %464 = vdwg.mxu0
        %465 = vmatpush.msra.mxu0 0.0
        %466 = vmatpush.msra.mxu0 0.0
        %467 = vmatpush.msra.mxu0 0.0
        %468 = vmatpush.msra.mxu0 0.0
        %469 = vmatpush.msra.mxu0 0.0
        %470 = vmatpush.msra.mxu0 0.0
        %471 = vmatpush.msra.mxu0 0.0
        %472 = vmatpush.msra.mxu0 0.0
        %473 = vmatpush.msra.mxu0 0.0
        %474 = vmatpush.msra.mxu0 0.0
        %475 = vmatpush.msra.mxu0 0.0
        %476 = vmatpush.msra.mxu0 0.0
        %477 = vmatpush.msra.mxu0 0.0
        %478 = vmatpush.msra.mxu0 0.0
        %479 = vmatpush.msra.mxu0 %v342
        %480 = vmatpush.msra.mxu0 %v341
        %481 = vmatmul.f32.gmra.mxu0 %v437
        %v482 = vpop.f32.mrf.mxu0
        %v483 = vadd.f32 0.0, %v482
        %484 = vmatmul.f32.gmra.mxu0 %v440
        %v485 = vpop.f32.mrf.mxu0
        %v486 = vadd.f32 0.0, %v485
        %487 = vdwg.mxu0
        %v489 = vsel %vm383, %v323, 0
        %v492 = vsel %vm383, %v324, 0
        %494 = vmatpush.msra.mxu0 0.0
        %495 = vmatpush.msra.mxu0 0.0
        %496 = vmatpush.msra.mxu0 0.0
        %497 = vmatpush.msra.mxu0 0.0
        %498 = vmatpush.msra.mxu0 0.0
        %499 = vmatpush.msra.mxu0 0.0
        %500 = vmatpush.msra.mxu0 0.0
        %501 = vmatpush.msra.mxu0 0.0
        %502 = vmatpush.msra.mxu0 0.0
        %503 = vmatpush.msra.mxu0 0.0
        %504 = vmatpush.msra.mxu0 0.0
        %505 = vmatpush.msra.mxu0 0.0
        %506 = vmatpush.msra.mxu0 0.0
        %507 = vmatpush.msra.mxu0 0.0
        %508 = vmatpush.msra.mxu0 %v344
        %509 = vmatpush.msra.mxu0 %v343
        %510 = vmatmul.f32.gmra.mxu0 %v489
        %v511 = vpop.f32.mrf.mxu0
        %v512 = vadd.f32 0.0, %v511
        %513 = vmatmul.f32.gmra.mxu0 %v492
        %v514 = vpop.f32.mrf.mxu0
        %v515 = vadd.f32 0.0, %v514
        %516 = vdwg.mxu0
        %517 = vmatpush.msra.mxu0 0.0
        %518 = vmatpush.msra.mxu0 0.0
        %519 = vmatpush.msra.mxu0 0.0
        %520 = vmatpush.msra.mxu0 0.0
        %521 = vmatpush.msra.mxu0 0.0
        %522 = vmatpush.msra.mxu0 0.0
        %523 = vmatpush.msra.mxu0 0.0
        %524 = vmatpush.msra.mxu0 0.0
        %525 = vmatpush.msra.mxu0 0.0
        %526 = vmatpush.msra.mxu0 0.0
        %527 = vmatpush.msra.mxu0 0.0
        %528 = vmatpush.msra.mxu0 0.0
        %529 = vmatpush.msra.mxu0 0.0
        %530 = vmatpush.msra.mxu0 0.0
        %531 = vmatpush.msra.mxu0 %v346
        %532 = vmatpush.msra.mxu0 %v345
        %533 = vmatmul.f32.gmra.mxu0 %v489
        %v534 = vpop.f32.mrf.mxu0
        %v535 = vadd.f32 0.0, %v534
        %536 = vmatmul.f32.gmra.mxu0 %v492
        %v537 = vpop.f32.mrf.mxu0
        %v538 = vadd.f32 0.0, %v537
        %539 = vdwg.mxu0
        %v541 = vsel %vm383, %v325, 0
        %v544 = vsel %vm383, %v326, 0
        %546 = vmatpush.msra.mxu0 0.0
        %547 = vmatpush.msra.mxu0 0.0
        %548 = vmatpush.msra.mxu0 0.0
        %549 = vmatpush.msra.mxu0 0.0
        %550 = vmatpush.msra.mxu0 0.0
        %551 = vmatpush.msra.mxu0 0.0
        %552 = vmatpush.msra.mxu0 0.0
        %553 = vmatpush.msra.mxu0 0.0
        %554 = vmatpush.msra.mxu0 0.0
        %555 = vmatpush.msra.mxu0 0.0
        %556 = vmatpush.msra.mxu0 0.0
        %557 = vmatpush.msra.mxu0 0.0
        %558 = vmatpush.msra.mxu0 0.0
        %559 = vmatpush.msra.mxu0 0.0
        %560 = vmatpush.msra.mxu0 %v348
        %561 = vmatpush.msra.mxu0 %v347
        %562 = vmatmul.f32.gmra.mxu0 %v541
        %v563 = vpop.f32.mrf.mxu0
        %v564 = vadd.f32 0.0, %v563
        %565 = vmatmul.f32.gmra.mxu0 %v544
        %v566 = vpop.f32.mrf.mxu0
        %v567 = vadd.f32 0.0, %v566
        %568 = vdwg.mxu0
        %569 = vmatpush.msra.mxu0 0.0
        %570 = vmatpush.msra.mxu0 0.0
        %571 = vmatpush.msra.mxu0 0.0
        %572 = vmatpush.msra.mxu0 0.0
        %573 = vmatpush.msra.mxu0 0.0
        %574 = vmatpush.msra.mxu0 0.0
        %575 = vmatpush.msra.mxu0 0.0
        %576 = vmatpush.msra.mxu0 0.0
        %577 = vmatpush.msra.mxu0 0.0
        %578 = vmatpush.msra.mxu0 0.0
        %579 = vmatpush.msra.mxu0 0.0
        %580 = vmatpush.msra.mxu0 0.0
        %581 = vmatpush.msra.mxu0 0.0
        %582 = vmatpush.msra.mxu0 0.0
        %583 = vmatpush.msra.mxu0 %v350
        %584 = vmatpush.msra.mxu0 %v349
        %585 = vmatmul.f32.gmra.mxu0 %v541
        %v586 = vpop.f32.mrf.mxu0
        %v587 = vadd.f32 0.0, %v586
        %588 = vmatmul.f32.gmra.mxu0 %v544
        %v589 = vpop.f32.mrf.mxu0
        %v590 = vadd.f32 0.0, %v589
        %591 = vdwg.mxu0
        %v593 = vsel %vm383, %v327, 0
        %v596 = vsel %vm383, %v328, 0
        %598 = vmatpush.msra.mxu0 0.0
        %599 = vmatpush.msra.mxu0 0.0
        %600 = vmatpush.msra.mxu0 0.0
        %601 = vmatpush.msra.mxu0 0.0
        %602 = vmatpush.msra.mxu0 0.0
        %603 = vmatpush.msra.mxu0 0.0
        %604 = vmatpush.msra.mxu0 0.0
        %605 = vmatpush.msra.mxu0 0.0
        %606 = vmatpush.msra.mxu0 0.0
        %607 = vmatpush.msra.mxu0 0.0
        %608 = vmatpush.msra.mxu0 0.0
        %609 = vmatpush.msra.mxu0 0.0
        %610 = vmatpush.msra.mxu0 0.0
        %611 = vmatpush.msra.mxu0 0.0
        %612 = vmatpush.msra.mxu0 %v352
        %613 = vmatpush.msra.mxu0 %v351
        %614 = vmatmul.f32.gmra.mxu0 %v593
        %v615 = vpop.f32.mrf.mxu0
        %v616 = vadd.f32 0.0, %v615
        %617 = vmatmul.f32.gmra.mxu0 %v596
        %v618 = vpop.f32.mrf.mxu0
        %v619 = vadd.f32 0.0, %v618
        %620 = vdwg.mxu0
        %621 = vmatpush.msra.mxu0 0.0
        %622 = vmatpush.msra.mxu0 0.0
        %623 = vmatpush.msra.mxu0 0.0
        %624 = vmatpush.msra.mxu0 0.0
        %625 = vmatpush.msra.mxu0 0.0
        %626 = vmatpush.msra.mxu0 0.0
        %627 = vmatpush.msra.mxu0 0.0
        %628 = vmatpush.msra.mxu0 0.0
        %629 = vmatpush.msra.mxu0 0.0
        %630 = vmatpush.msra.mxu0 0.0
        %631 = vmatpush.msra.mxu0 0.0
        %632 = vmatpush.msra.mxu0 0.0
        %633 = vmatpush.msra.mxu0 0.0
        %634 = vmatpush.msra.mxu0 0.0
        %635 = vmatpush.msra.mxu0 %v354
        %636 = vmatpush.msra.mxu0 %v353
        %637 = vmatmul.f32.gmra.mxu0 %v593
        %v638 = vpop.f32.mrf.mxu0
        %v639 = vadd.f32 0.0, %v638
        %640 = vmatmul.f32.gmra.mxu0 %v596
        %v641 = vpop.f32.mrf.mxu0
        %v642 = vadd.f32 0.0, %v641
        %643 = vdwg.mxu0
        %v645 = vsel %vm383, %v329, 0
        %v648 = vsel %vm383, %v330, 0
        %650 = vmatpush.msra.mxu0 0.0
        %651 = vmatpush.msra.mxu0 0.0
        %652 = vmatpush.msra.mxu0 0.0
        %653 = vmatpush.msra.mxu0 0.0
        %654 = vmatpush.msra.mxu0 0.0
        %655 = vmatpush.msra.mxu0 0.0
        %656 = vmatpush.msra.mxu0 0.0
        %657 = vmatpush.msra.mxu0 0.0
        %658 = vmatpush.msra.mxu0 0.0
        %659 = vmatpush.msra.mxu0 0.0
        %660 = vmatpush.msra.mxu0 0.0
        %661 = vmatpush.msra.mxu0 0.0
        %662 = vmatpush.msra.mxu0 0.0
        %663 = vmatpush.msra.mxu0 0.0
        %664 = vmatpush.msra.mxu0 %v356
        %665 = vmatpush.msra.mxu0 %v355
        %666 = vmatmul.f32.gmra.mxu0 %v645
        %v667 = vpop.f32.mrf.mxu0
        %v668 = vadd.f32 0.0, %v667
        %669 = vmatmul.f32.gmra.mxu0 %v648
        %v670 = vpop.f32.mrf.mxu0
        %v671 = vadd.f32 0.0, %v670
        %672 = vdwg.mxu0
        %673 = vmatpush.msra.mxu0 0.0
        %674 = vmatpush.msra.mxu0 0.0
        %675 = vmatpush.msra.mxu0 0.0
        %676 = vmatpush.msra.mxu0 0.0
        %677 = vmatpush.msra.mxu0 0.0
        %678 = vmatpush.msra.mxu0 0.0
        %679 = vmatpush.msra.mxu0 0.0
        %680 = vmatpush.msra.mxu0 0.0
        %681 = vmatpush.msra.mxu0 0.0
        %682 = vmatpush.msra.mxu0 0.0
        %683 = vmatpush.msra.mxu0 0.0
        %684 = vmatpush.msra.mxu0 0.0
        %685 = vmatpush.msra.mxu0 0.0
        %686 = vmatpush.msra.mxu0 0.0
        %687 = vmatpush.msra.mxu0 %v358
        %688 = vmatpush.msra.mxu0 %v357
        %689 = vmatmul.f32.gmra.mxu0 %v645
        %v690 = vpop.f32.mrf.mxu0
        %v691 = vadd.f32 0.0, %v690
        %692 = vmatmul.f32.gmra.mxu0 %v648
        %v693 = vpop.f32.mrf.mxu0
        %v694 = vadd.f32 0.0, %v693
        %695 = vdwg.mxu0
        %v697 = vsel %vm383, %v331, 0
        %v700 = vsel %vm383, %v332, 0
        %702 = vmatpush.msra.mxu0 0.0
        %703 = vmatpush.msra.mxu0 0.0
        %704 = vmatpush.msra.mxu0 0.0
        %705 = vmatpush.msra.mxu0 0.0
        %706 = vmatpush.msra.mxu0 0.0
        %707 = vmatpush.msra.mxu0 0.0
        %708 = vmatpush.msra.mxu0 0.0
        %709 = vmatpush.msra.mxu0 0.0
        %710 = vmatpush.msra.mxu0 0.0
        %711 = vmatpush.msra.mxu0 0.0
        %712 = vmatpush.msra.mxu0 0.0
        %713 = vmatpush.msra.mxu0 0.0
        %714 = vmatpush.msra.mxu0 0.0
        %715 = vmatpush.msra.mxu0 0.0
        %716 = vmatpush.msra.mxu0 %v360
        %717 = vmatpush.msra.mxu0 %v359
        %718 = vmatmul.f32.gmra.mxu0 %v697
        %v719 = vpop.f32.mrf.mxu0
        %v720 = vadd.f32 0.0, %v719
        %721 = vmatmul.f32.gmra.mxu0 %v700
        %v722 = vpop.f32.mrf.mxu0
        %v723 = vadd.f32 0.0, %v722
        %724 = vdwg.mxu0
        %725 = vmatpush.msra.mxu0 0.0
        %726 = vmatpush.msra.mxu0 0.0
        %727 = vmatpush.msra.mxu0 0.0
        %728 = vmatpush.msra.mxu0 0.0
        %729 = vmatpush.msra.mxu0 0.0
        %730 = vmatpush.msra.mxu0 0.0
        %731 = vmatpush.msra.mxu0 0.0
        %732 = vmatpush.msra.mxu0 0.0
        %733 = vmatpush.msra.mxu0 0.0
        %734 = vmatpush.msra.mxu0 0.0
        %735 = vmatpush.msra.mxu0 0.0
        %736 = vmatpush.msra.mxu0 0.0
        %737 = vmatpush.msra.mxu0 0.0
        %738 = vmatpush.msra.mxu0 0.0
        %739 = vmatpush.msra.mxu0 %v362
        %740 = vmatpush.msra.mxu0 %v361
        %741 = vmatmul.f32.gmra.mxu0 %v697
        %v742 = vpop.f32.mrf.mxu0
        %v743 = vadd.f32 0.0, %v742
        %744 = vmatmul.f32.gmra.mxu0 %v700
        %v745 = vpop.f32.mrf.mxu0
        %v746 = vadd.f32 0.0, %v745
        %747 = vdwg.mxu0
        %v749 = vsel %vm383, %v333, 0
        %v752 = vsel %vm383, %v334, 0
        %754 = vmatpush.msra.mxu0 0.0
        %755 = vmatpush.msra.mxu0 0.0
        %756 = vmatpush.msra.mxu0 0.0
        %757 = vmatpush.msra.mxu0 0.0
        %758 = vmatpush.msra.mxu0 0.0
        %759 = vmatpush.msra.mxu0 0.0
        %760 = vmatpush.msra.mxu0 0.0
        %761 = vmatpush.msra.mxu0 0.0
        %762 = vmatpush.msra.mxu0 0.0
        %763 = vmatpush.msra.mxu0 0.0
        %764 = vmatpush.msra.mxu0 0.0
        %765 = vmatpush.msra.mxu0 0.0
        %766 = vmatpush.msra.mxu0 0.0
        %767 = vmatpush.msra.mxu0 0.0
        %768 = vmatpush.msra.mxu0 %v364
        %769 = vmatpush.msra.mxu0 %v363
        %770 = vmatmul.f32.gmra.mxu0 %v749
        %v771 = vpop.f32.mrf.mxu0
        %v772 = vadd.f32 0.0, %v771
        %773 = vmatmul.f32.gmra.mxu0 %v752
        %v774 = vpop.f32.mrf.mxu0
        %v775 = vadd.f32 0.0, %v774
        %776 = vdwg.mxu0
        %777 = vmatpush.msra.mxu0 0.0
        %778 = vmatpush.msra.mxu0 0.0
        %779 = vmatpush.msra.mxu0 0.0
        %780 = vmatpush.msra.mxu0 0.0
        %781 = vmatpush.msra.mxu0 0.0
        %782 = vmatpush.msra.mxu0 0.0
        %783 = vmatpush.msra.mxu0 0.0
        %784 = vmatpush.msra.mxu0 0.0
        %785 = vmatpush.msra.mxu0 0.0
        %786 = vmatpush.msra.mxu0 0.0
        %787 = vmatpush.msra.mxu0 0.0
        %788 = vmatpush.msra.mxu0 0.0
        %789 = vmatpush.msra.mxu0 0.0
        %790 = vmatpush.msra.mxu0 0.0
        %791 = vmatpush.msra.mxu0 %v366
        %792 = vmatpush.msra.mxu0 %v365
        %793 = vmatmul.f32.gmra.mxu0 %v749
        %v794 = vpop.f32.mrf.mxu0
        %v795 = vadd.f32 0.0, %v794
        %796 = vmatmul.f32.gmra.mxu0 %v752
        %v797 = vpop.f32.mrf.mxu0
        %v798 = vadd.f32 0.0, %v797
        %799 = vdwg.mxu0
        %v800 = vadd.f32 %v335, %v408
        %v801 = vadd.f32 %v336, %v411
        %v802 = vadd.f32 %v337, %v431
        %v803 = vadd.f32 %v338, %v434
        %v804 = vadd.f32 %v339, %v460
        %v805 = vadd.f32 %v340, %v463
        %v806 = vadd.f32 %v341, %v483
        %v807 = vadd.f32 %v342, %v486
        %v808 = vadd.f32 %v343, %v512
        %v809 = vadd.f32 %v344, %v515
        %v810 = vadd.f32 %v345, %v535
        %v811 = vadd.f32 %v346, %v538
        %v812 = vadd.f32 %v347, %v564
        %v813 = vadd.f32 %v348, %v567
        %v814 = vadd.f32 %v349, %v587
        %v815 = vadd.f32 %v350, %v590
        %v816 = vadd.f32 %v351, %v616
        %v817 = vadd.f32 %v352, %v619
        %v818 = vadd.f32 %v353, %v639
        %v819 = vadd.f32 %v354, %v642
        %v820 = vadd.f32 %v355, %v668
        %v821 = vadd.f32 %v356, %v671
        %v822 = vadd.f32 %v357, %v691
        %v823 = vadd.f32 %v358, %v694
        %v824 = vadd.f32 %v359, %v720
        %v825 = vadd.f32 %v360, %v723
        %v826 = vadd.f32 %v361, %v743
        %v827 = vadd.f32 %v362, %v746
        %v828 = vadd.f32 %v363, %v772
        %v829 = vadd.f32 %v364, %v775
        %v830 = vadd.f32 %v365, %v795
        %v831 = vadd.f32 %v366, %v798
        %v832 = vperm.slane %v379, 0
        %vm833 = vcmask 261120
        %v835 = vsel %vm833, %v800, 0
        %v838 = vsel %vm833, %v801, 0
        %v841 = vsel %vm833, %v802, 0
        %v844 = vsel %vm833, %v803, 0
        %v847 = vsel %vm833, %v804, 0
        %v850 = vsel %vm833, %v805, 0
        %v853 = vsel %vm833, %v806, 0
        %v856 = vsel %vm833, %v807, 0
        %v859 = vsel %vm833, %v808, 0
        %v862 = vsel %vm833, %v809, 0
        %v865 = vsel %vm833, %v810, 0
        %v868 = vsel %vm833, %v811, 0
        %v871 = vsel %vm833, %v812, 0
        %v874 = vsel %vm833, %v813, 0
        %v877 = vsel %vm833, %v814, 0
        %v880 = vsel %vm833, %v815, 0
        %v883 = vsel %vm833, %v816, 0
        %v886 = vsel %vm833, %v817, 0
        %v889 = vsel %vm833, %v818, 0
        %v892 = vsel %vm833, %v819, 0
        %v895 = vsel %vm833, %v820, 0
        %v898 = vsel %vm833, %v821, 0
        %v901 = vsel %vm833, %v822, 0
        %v904 = vsel %vm833, %v823, 0
        %v907 = vsel %vm833, %v824, 0
        %v910 = vsel %vm833, %v825, 0
        %v913 = vsel %vm833, %v826, 0
        %v916 = vsel %vm833, %v827, 0
        %v919 = vsel %vm833, %v828, 0
        %v922 = vsel %vm833, %v829, 0
        %v925 = vsel %vm833, %v830, 0
        %v928 = vsel %vm833, %v831, 0
        %930 = vmatpush.msra.mxu0 0.0
        %931 = vmatpush.msra.mxu0 0.0
        %932 = vmatpush.msra.mxu0 0.0
        %933 = vmatpush.msra.mxu0 0.0
        %934 = vmatpush.msra.mxu0 0.0
        %935 = vmatpush.msra.mxu0 0.0
        %936 = vmatpush.msra.mxu0 0.0
        %937 = vmatpush.msra.mxu0 0.0
        %938 = vmatpush.msra.mxu0 0.0
        %939 = vmatpush.msra.mxu0 0.0
        %940 = vmatpush.msra.mxu0 0.0
        %941 = vmatpush.msra.mxu0 0.0
        %942 = vmatpush.msra.mxu0 %v370
        %943 = vmatpush.msra.mxu0 %v369
        %944 = vmatpush.msra.mxu0 %v368
        %945 = vmatpush.msra.mxu0 %v367
        %946 = vmatmul.f32.gmra.mxu0 %v835
        %v947 = vpop.f32.mrf.mxu0
        %v948 = vadd.f32 %v832, %v947
        %949 = vmatmul.f32.gmra.mxu0 %v838
        %v950 = vpop.f32.mrf.mxu0
        %v951 = vadd.f32 %v832, %v950
        %952 = vmatmul.f32.gmra.mxu0 %v841
        %v953 = vpop.f32.mrf.mxu0
        %v954 = vadd.f32 %v832, %v953
        %955 = vmatmul.f32.gmra.mxu0 %v844
        %v956 = vpop.f32.mrf.mxu0
        %v957 = vadd.f32 %v832, %v956
        %958 = vmatmul.f32.gmra.mxu0 %v847
        %v959 = vpop.f32.mrf.mxu0
        %v960 = vadd.f32 %v832, %v959
        %961 = vmatmul.f32.gmra.mxu0 %v850
        %v962 = vpop.f32.mrf.mxu0
        %v963 = vadd.f32 %v832, %v962
        %964 = vmatmul.f32.gmra.mxu0 %v853
        %v965 = vpop.f32.mrf.mxu0
        %v966 = vadd.f32 %v832, %v965
        %967 = vmatmul.f32.gmra.mxu0 %v856
        %v968 = vpop.f32.mrf.mxu0
        %v969 = vadd.f32 %v832, %v968
        %970 = vmatmul.f32.gmra.mxu0 %v859
        %v971 = vpop.f32.mrf.mxu0
        %v972 = vadd.f32 %v832, %v971
        %973 = vmatmul.f32.gmra.mxu0 %v862
        %v974 = vpop.f32.mrf.mxu0
        %v975 = vadd.f32 %v832, %v974
        %976 = vmatmul.f32.gmra.mxu0 %v865
        %v977 = vpop.f32.mrf.mxu0
        %v978 = vadd.f32 %v832, %v977
        %979 = vmatmul.f32.gmra.mxu0 %v868
        %v980 = vpop.f32.mrf.mxu0
        %v981 = vadd.f32 %v832, %v980
        %982 = vmatmul.f32.gmra.mxu0 %v871
        %v983 = vpop.f32.mrf.mxu0
        %v984 = vadd.f32 %v832, %v983
        %985 = vmatmul.f32.gmra.mxu0 %v874
        %v986 = vpop.f32.mrf.mxu0
        %v987 = vadd.f32 %v832, %v986
        %988 = vmatmul.f32.gmra.mxu0 %v877
        %v989 = vpop.f32.mrf.mxu0
        %v990 = vadd.f32 %v832, %v989
        %991 = vmatmul.f32.gmra.mxu0 %v880
        %v992 = vpop.f32.mrf.mxu0
        %v993 = vadd.f32 %v832, %v992
        %994 = vmatmul.f32.gmra.mxu0 %v883
        %v995 = vpop.f32.mrf.mxu0
        %v996 = vadd.f32 %v832, %v995
        %997 = vmatmul.f32.gmra.mxu0 %v886
        %v998 = vpop.f32.mrf.mxu0
        %v999 = vadd.f32 %v832, %v998
        %1000 = vmatmul.f32.gmra.mxu0 %v889
        %v1001 = vpop.f32.mrf.mxu0
        %v1002 = vadd.f32 %v832, %v1001
        %1003 = vmatmul.f32.gmra.mxu0 %v892
        %v1004 = vpop.f32.mrf.mxu0
        %v1005 = vadd.f32 %v832, %v1004
        %1006 = vmatmul.f32.gmra.mxu0 %v895
        %v1007 = vpop.f32.mrf.mxu0
        %v1008 = vadd.f32 %v832, %v1007
        %1009 = vmatmul.f32.gmra.mxu0 %v898
        %v1010 = vpop.f32.mrf.mxu0
        %v1011 = vadd.f32 %v832, %v1010
        %1012 = vmatmul.f32.gmra.mxu0 %v901
        %v1013 = vpop.f32.mrf.mxu0
        %v1014 = vadd.f32 %v832, %v1013
        %1015 = vmatmul.f32.gmra.mxu0 %v904
        %v1016 = vpop.f32.mrf.mxu0
        %v1017 = vadd.f32 %v832, %v1016
        %1018 = vmatmul.f32.gmra.mxu0 %v907
        %v1019 = vpop.f32.mrf.mxu0
        %v1020 = vadd.f32 %v832, %v1019
        %1021 = vmatmul.f32.gmra.mxu0 %v910
        %v1022 = vpop.f32.mrf.mxu0
        %v1023 = vadd.f32 %v832, %v1022
        %1024 = vmatmul.f32.gmra.mxu0 %v913
        %v1025 = vpop.f32.mrf.mxu0
        %v1026 = vadd.f32 %v832, %v1025
        %1027 = vmatmul.f32.gmra.mxu0 %v916
        %v1028 = vpop.f32.mrf.mxu0
        %v1029 = vadd.f32 %v832, %v1028
        %1030 = vmatmul.f32.gmra.mxu0 %v919
        %v1031 = vpop.f32.mrf.mxu0
        %v1032 = vadd.f32 %v832, %v1031
        %1033 = vmatmul.f32.gmra.mxu0 %v922
        %v1034 = vpop.f32.mrf.mxu0
        %v1035 = vadd.f32 %v832, %v1034
        %1036 = vmatmul.f32.gmra.mxu0 %v925
        %v1037 = vpop.f32.mrf.mxu0
        %v1038 = vadd.f32 %v832, %v1037
        %1039 = vmatmul.f32.gmra.mxu0 %v928
        %v1040 = vpop.f32.mrf.mxu0
        %v1041 = vadd.f32 %v832, %v1040
        %1042 = vdwg.mxu0
        %v1043 = vmax.f32 %v948, 0.0
        %v1044 = vmax.f32 %v951, 0.0
        %v1045 = vmax.f32 %v954, 0.0
        %v1046 = vmax.f32 %v957, 0.0
        %v1047 = vmax.f32 %v960, 0.0
        %v1048 = vmax.f32 %v963, 0.0
        %v1049 = vmax.f32 %v966, 0.0
        %v1050 = vmax.f32 %v969, 0.0
        %v1051 = vmax.f32 %v972, 0.0
        %v1052 = vmax.f32 %v975, 0.0
        %v1053 = vmax.f32 %v978, 0.0
        %v1054 = vmax.f32 %v981, 0.0
        %v1055 = vmax.f32 %v984, 0.0
        %v1056 = vmax.f32 %v987, 0.0
        %v1057 = vmax.f32 %v990, 0.0
        %v1058 = vmax.f32 %v993, 0.0
        %v1059 = vmax.f32 %v996, 0.0
        %v1060 = vmax.f32 %v999, 0.0
        %v1061 = vmax.f32 %v1002, 0.0
        %v1062 = vmax.f32 %v1005, 0.0
        %v1063 = vmax.f32 %v1008, 0.0
        %v1064 = vmax.f32 %v1011, 0.0
        %v1065 = vmax.f32 %v1014, 0.0
        %v1066 = vmax.f32 %v1017, 0.0
        %v1067 = vmax.f32 %v1020, 0.0
        %v1068 = vmax.f32 %v1023, 0.0
        %v1069 = vmax.f32 %v1026, 0.0
        %v1070 = vmax.f32 %v1029, 0.0
        %v1071 = vmax.f32 %v1032, 0.0
        %v1072 = vmax.f32 %v1035, 0.0
        %v1073 = vmax.f32 %v1038, 0.0
        %v1074 = vmax.f32 %v1041, 0.0
        %v1075 = vperm.slane %v380, 0
        %v1077 = vsel %vm833, %v1043, 0
        %v1080 = vsel %vm833, %v1044, 0
        %v1083 = vsel %vm833, %v1045, 0
        %v1086 = vsel %vm833, %v1046, 0
        %v1089 = vsel %vm833, %v1047, 0
        %v1092 = vsel %vm833, %v1048, 0
        %v1095 = vsel %vm833, %v1049, 0
        %v1098 = vsel %vm833, %v1050, 0
        %v1101 = vsel %vm833, %v1051, 0
        %v1104 = vsel %vm833, %v1052, 0
        %v1107 = vsel %vm833, %v1053, 0
        %v1110 = vsel %vm833, %v1054, 0
        %v1113 = vsel %vm833, %v1055, 0
        %v1116 = vsel %vm833, %v1056, 0
        %v1119 = vsel %vm833, %v1057, 0
        %v1122 = vsel %vm833, %v1058, 0
        %v1125 = vsel %vm833, %v1059, 0
        %v1128 = vsel %vm833, %v1060, 0
        %v1131 = vsel %vm833, %v1061, 0
        %v1134 = vsel %vm833, %v1062, 0
        %v1137 = vsel %vm833, %v1063, 0
        %v1140 = vsel %vm833, %v1064, 0
        %v1143 = vsel %vm833, %v1065, 0
        %v1146 = vsel %vm833, %v1066, 0
        %v1149 = vsel %vm833, %v1067, 0
        %v1152 = vsel %vm833, %v1068, 0
        %v1155 = vsel %vm833, %v1069, 0
        %v1158 = vsel %vm833, %v1070, 0
        %v1161 = vsel %vm833, %v1071, 0
        %v1164 = vsel %vm833, %v1072, 0
        %v1167 = vsel %vm833, %v1073, 0
        %v1170 = vsel %vm833, %v1074, 0
        %1172 = vmatpush.msra.mxu0 0.0
        %1173 = vmatpush.msra.mxu0 0.0
        %1174 = vmatpush.msra.mxu0 0.0
        %1175 = vmatpush.msra.mxu0 0.0
        %1176 = vmatpush.msra.mxu0 0.0
        %1177 = vmatpush.msra.mxu0 0.0
        %1178 = vmatpush.msra.mxu0 0.0
        %1179 = vmatpush.msra.mxu0 0.0
        %1180 = vmatpush.msra.mxu0 0.0
        %1181 = vmatpush.msra.mxu0 0.0
        %1182 = vmatpush.msra.mxu0 0.0
        %1183 = vmatpush.msra.mxu0 0.0
        %1184 = vmatpush.msra.mxu0 %v374
        %1185 = vmatpush.msra.mxu0 %v373
        %1186 = vmatpush.msra.mxu0 %v372
        %1187 = vmatpush.msra.mxu0 %v371
        %1188 = vmatmul.f32.gmra.mxu0 %v1077
        %v1189 = vpop.f32.mrf.mxu0
        %v1190 = vadd.f32 %v1075, %v1189
        %1191 = vmatmul.f32.gmra.mxu0 %v1080
        %v1192 = vpop.f32.mrf.mxu0
        %v1193 = vadd.f32 %v1075, %v1192
        %1194 = vmatmul.f32.gmra.mxu0 %v1083
        %v1195 = vpop.f32.mrf.mxu0
        %v1196 = vadd.f32 %v1075, %v1195
        %1197 = vmatmul.f32.gmra.mxu0 %v1086
        %v1198 = vpop.f32.mrf.mxu0
        %v1199 = vadd.f32 %v1075, %v1198
        %1200 = vmatmul.f32.gmra.mxu0 %v1089
        %v1201 = vpop.f32.mrf.mxu0
        %v1202 = vadd.f32 %v1075, %v1201
        %1203 = vmatmul.f32.gmra.mxu0 %v1092
        %v1204 = vpop.f32.mrf.mxu0
        %v1205 = vadd.f32 %v1075, %v1204
        %1206 = vmatmul.f32.gmra.mxu0 %v1095
        %v1207 = vpop.f32.mrf.mxu0
        %v1208 = vadd.f32 %v1075, %v1207
        %1209 = vmatmul.f32.gmra.mxu0 %v1098
        %v1210 = vpop.f32.mrf.mxu0
        %v1211 = vadd.f32 %v1075, %v1210
        %1212 = vmatmul.f32.gmra.mxu0 %v1101
        %v1213 = vpop.f32.mrf.mxu0
        %v1214 = vadd.f32 %v1075, %v1213
        %1215 = vmatmul.f32.gmra.mxu0 %v1104
        %v1216 = vpop.f32.mrf.mxu0
        %v1217 = vadd.f32 %v1075, %v1216
        %1218 = vmatmul.f32.gmra.mxu0 %v1107
        %v1219 = vpop.f32.mrf.mxu0
        %v1220 = vadd.f32 %v1075, %v1219
        %1221 = vmatmul.f32.gmra.mxu0 %v1110
        %v1222 = vpop.f32.mrf.mxu0
        %v1223 = vadd.f32 %v1075, %v1222
        %1224 = vmatmul.f32.gmra.mxu0 %v1113
        %v1225 = vpop.f32.mrf.mxu0
        %v1226 = vadd.f32 %v1075, %v1225
        %1227 = vmatmul.f32.gmra.mxu0 %v1116
        %v1228 = vpop.f32.mrf.mxu0
        %v1229 = vadd.f32 %v1075, %v1228
        %1230 = vmatmul.f32.gmra.mxu0 %v1119
        %v1231 = vpop.f32.mrf.mxu0
        %v1232 = vadd.f32 %v1075, %v1231
        %1233 = vmatmul.f32.gmra.mxu0 %v1122
        %v1234 = vpop.f32.mrf.mxu0
        %v1235 = vadd.f32 %v1075, %v1234
        %1236 = vmatmul.f32.gmra.mxu0 %v1125
        %v1237 = vpop.f32.mrf.mxu0
        %v1238 = vadd.f32 %v1075, %v1237
        %1239 = vmatmul.f32.gmra.mxu0 %v1128
        %v1240 = vpop.f32.mrf.mxu0
        %v1241 = vadd.f32 %v1075, %v1240
        %1242 = vmatmul.f32.gmra.mxu0 %v1131
        %v1243 = vpop.f32.mrf.mxu0
        %v1244 = vadd.f32 %v1075, %v1243
        %1245 = vmatmul.f32.gmra.mxu0 %v1134
        %v1246 = vpop.f32.mrf.mxu0
        %v1247 = vadd.f32 %v1075, %v1246
        %1248 = vmatmul.f32.gmra.mxu0 %v1137
        %v1249 = vpop.f32.mrf.mxu0
        %v1250 = vadd.f32 %v1075, %v1249
        %1251 = vmatmul.f32.gmra.mxu0 %v1140
        %v1252 = vpop.f32.mrf.mxu0
        %v1253 = vadd.f32 %v1075, %v1252
        %1254 = vmatmul.f32.gmra.mxu0 %v1143
        %v1255 = vpop.f32.mrf.mxu0
        %v1256 = vadd.f32 %v1075, %v1255
        %1257 = vmatmul.f32.gmra.mxu0 %v1146
        %v1258 = vpop.f32.mrf.mxu0
        %v1259 = vadd.f32 %v1075, %v1258
        %1260 = vmatmul.f32.gmra.mxu0 %v1149
        %v1261 = vpop.f32.mrf.mxu0
        %v1262 = vadd.f32 %v1075, %v1261
        %1263 = vmatmul.f32.gmra.mxu0 %v1152
        %v1264 = vpop.f32.mrf.mxu0
        %v1265 = vadd.f32 %v1075, %v1264
        %1266 = vmatmul.f32.gmra.mxu0 %v1155
        %v1267 = vpop.f32.mrf.mxu0
        %v1268 = vadd.f32 %v1075, %v1267
        %1269 = vmatmul.f32.gmra.mxu0 %v1158
        %v1270 = vpop.f32.mrf.mxu0
        %v1271 = vadd.f32 %v1075, %v1270
        %1272 = vmatmul.f32.gmra.mxu0 %v1161
        %v1273 = vpop.f32.mrf.mxu0
        %v1274 = vadd.f32 %v1075, %v1273
        %1275 = vmatmul.f32.gmra.mxu0 %v1164
        %v1276 = vpop.f32.mrf.mxu0
        %v1277 = vadd.f32 %v1075, %v1276
        %1278 = vmatmul.f32.gmra.mxu0 %v1167
        %v1279 = vpop.f32.mrf.mxu0
        %v1280 = vadd.f32 %v1075, %v1279
        %1281 = vmatmul.f32.gmra.mxu0 %v1170
        %v1282 = vpop.f32.mrf.mxu0
        %v1283 = vadd.f32 %v1075, %v1282
        %1284 = vdwg.mxu0
        %v1285 = vmax.f32 %v1190, 0.0
        %v1286 = vmax.f32 %v1193, 0.0
        %v1287 = vmax.f32 %v1196, 0.0
        %v1288 = vmax.f32 %v1199, 0.0
        %v1289 = vmax.f32 %v1202, 0.0
        %v1290 = vmax.f32 %v1205, 0.0
        %v1291 = vmax.f32 %v1208, 0.0
        %v1292 = vmax.f32 %v1211, 0.0
        %v1293 = vmax.f32 %v1214, 0.0
        %v1294 = vmax.f32 %v1217, 0.0
        %v1295 = vmax.f32 %v1220, 0.0
        %v1296 = vmax.f32 %v1223, 0.0
        %v1297 = vmax.f32 %v1226, 0.0
        %v1298 = vmax.f32 %v1229, 0.0
        %v1299 = vmax.f32 %v1232, 0.0
        %v1300 = vmax.f32 %v1235, 0.0
        %v1301 = vmax.f32 %v1238, 0.0
        %v1302 = vmax.f32 %v1241, 0.0
        %v1303 = vmax.f32 %v1244, 0.0
        %v1304 = vmax.f32 %v1247, 0.0
        %v1305 = vmax.f32 %v1250, 0.0
        %v1306 = vmax.f32 %v1253, 0.0
        %v1307 = vmax.f32 %v1256, 0.0
        %v1308 = vmax.f32 %v1259, 0.0
        %v1309 = vmax.f32 %v1262, 0.0
        %v1310 = vmax.f32 %v1265, 0.0
        %v1311 = vmax.f32 %v1268, 0.0
        %v1312 = vmax.f32 %v1271, 0.0
        %v1313 = vmax.f32 %v1274, 0.0
        %v1314 = vmax.f32 %v1277, 0.0
        %v1315 = vmax.f32 %v1280, 0.0
        %v1316 = vmax.f32 %v1283, 0.0
        %v1317 = vsel %vm833, %v1285, 0.0
        %1318 = vadd.xlane.f32.xlu0 %v1317
        %v1319 = vpop.xlane.xlu0 %1318
        %v1320 = vsel %vm833, %v1286, 0.0
        %1321 = vadd.xlane.f32.xlu0 %v1320
        %v1322 = vpop.xlane.xlu0 %1321
        %v1323 = vsel %vm833, %v1287, 0.0
        %1324 = vadd.xlane.f32.xlu0 %v1323
        %v1325 = vpop.xlane.xlu0 %1324
        %v1326 = vsel %vm833, %v1288, 0.0
        %1327 = vadd.xlane.f32.xlu0 %v1326
        %v1328 = vpop.xlane.xlu0 %1327
        %v1329 = vsel %vm833, %v1289, 0.0
        %1330 = vadd.xlane.f32.xlu0 %v1329
        %v1331 = vpop.xlane.xlu0 %1330
        %v1332 = vsel %vm833, %v1290, 0.0
        %1333 = vadd.xlane.f32.xlu0 %v1332
        %v1334 = vpop.xlane.xlu0 %1333
        %v1335 = vsel %vm833, %v1291, 0.0
        %1336 = vadd.xlane.f32.xlu0 %v1335
        %v1337 = vpop.xlane.xlu0 %1336
        %v1338 = vsel %vm833, %v1292, 0.0
        %1339 = vadd.xlane.f32.xlu0 %v1338
        %v1340 = vpop.xlane.xlu0 %1339
        %v1341 = vsel %vm833, %v1293, 0.0
        %1342 = vadd.xlane.f32.xlu0 %v1341
        %v1343 = vpop.xlane.xlu0 %1342
        %v1344 = vsel %vm833, %v1294, 0.0
        %1345 = vadd.xlane.f32.xlu0 %v1344
        %v1346 = vpop.xlane.xlu0 %1345
        %v1347 = vsel %vm833, %v1295, 0.0
        %1348 = vadd.xlane.f32.xlu0 %v1347
        %v1349 = vpop.xlane.xlu0 %1348
        %v1350 = vsel %vm833, %v1296, 0.0
        %1351 = vadd.xlane.f32.xlu0 %v1350
        %v1352 = vpop.xlane.xlu0 %1351
        %v1353 = vsel %vm833, %v1297, 0.0
        %1354 = vadd.xlane.f32.xlu0 %v1353
        %v1355 = vpop.xlane.xlu0 %1354
        %v1356 = vsel %vm833, %v1298, 0.0
        %1357 = vadd.xlane.f32.xlu0 %v1356
        %v1358 = vpop.xlane.xlu0 %1357
        %v1359 = vsel %vm833, %v1299, 0.0
        %1360 = vadd.xlane.f32.xlu0 %v1359
        %v1361 = vpop.xlane.xlu0 %1360
        %v1362 = vsel %vm833, %v1300, 0.0
        %1363 = vadd.xlane.f32.xlu0 %v1362
        %v1364 = vpop.xlane.xlu0 %1363
        %v1365 = vsel %vm833, %v1301, 0.0
        %1366 = vadd.xlane.f32.xlu0 %v1365
        %v1367 = vpop.xlane.xlu0 %1366
        %v1368 = vsel %vm833, %v1302, 0.0
        %1369 = vadd.xlane.f32.xlu0 %v1368
        %v1370 = vpop.xlane.xlu0 %1369
        %v1371 = vsel %vm833, %v1303, 0.0
        %1372 = vadd.xlane.f32.xlu0 %v1371
        %v1373 = vpop.xlane.xlu0 %1372
        %v1374 = vsel %vm833, %v1304, 0.0
        %1375 = vadd.xlane.f32.xlu0 %v1374
        %v1376 = vpop.xlane.xlu0 %1375
        %v1377 = vsel %vm833, %v1305, 0.0
        %1378 = vadd.xlane.f32.xlu0 %v1377
        %v1379 = vpop.xlane.xlu0 %1378
        %v1380 = vsel %vm833, %v1306, 0.0
        %1381 = vadd.xlane.f32.xlu0 %v1380
        %v1382 = vpop.xlane.xlu0 %1381
        %v1383 = vsel %vm833, %v1307, 0.0
        %1384 = vadd.xlane.f32.xlu0 %v1383
        %v1385 = vpop.xlane.xlu0 %1384
        %v1386 = vsel %vm833, %v1308, 0.0
        %1387 = vadd.xlane.f32.xlu0 %v1386
        %v1388 = vpop.xlane.xlu0 %1387
        %v1389 = vsel %vm833, %v1309, 0.0
        %1390 = vadd.xlane.f32.xlu0 %v1389
        %v1391 = vpop.xlane.xlu0 %1390
        %v1392 = vsel %vm833, %v1310, 0.0
        %1393 = vadd.xlane.f32.xlu0 %v1392
        %v1394 = vpop.xlane.xlu0 %1393
        %v1395 = vsel %vm833, %v1311, 0.0
        %1396 = vadd.xlane.f32.xlu0 %v1395
        %v1397 = vpop.xlane.xlu0 %1396
        %v1398 = vsel %vm833, %v1312, 0.0
        %1399 = vadd.xlane.f32.xlu0 %v1398
        %v1400 = vpop.xlane.xlu0 %1399
        %v1401 = vsel %vm833, %v1313, 0.0
        %1402 = vadd.xlane.f32.xlu0 %v1401
        %v1403 = vpop.xlane.xlu0 %1402
        %v1404 = vsel %vm833, %v1314, 0.0
        %1405 = vadd.xlane.f32.xlu0 %v1404
        %v1406 = vpop.xlane.xlu0 %1405
        %v1407 = vsel %vm833, %v1315, 0.0
        %1408 = vadd.xlane.f32.xlu0 %v1407
        %v1409 = vpop.xlane.xlu0 %1408
        %v1410 = vsel %vm833, %v1316, 0.0
        %1411 = vadd.xlane.f32.xlu0 %v1410
        %v1412 = vpop.xlane.xlu0 %1411
        %v1413 = vrcp.pop 32.0
        %v1414 = vmul.f32 32.0, %v1413
        %v1415 = vsub.f32 1.0, %v1414
        %v1416 = vmul.f32 %v1413, %v1415
        %v1417 = vadd.f32 %v1413, %v1416
        %vm1418 = vweird.f32 %v1413
        %v1419 = vsel %vm1418, %v1413, %v1417
        %v1420 = vmul.f32 %v1319, %v1419
        %v1421 = vmul.f32 %v1322, %v1419
        %v1422 = vmul.f32 %v1325, %v1419
        %v1423 = vmul.f32 %v1328, %v1419
        %v1424 = vmul.f32 %v1331, %v1419
        %v1425 = vmul.f32 %v1334, %v1419
        %v1426 = vmul.f32 %v1337, %v1419
        %v1427 = vmul.f32 %v1340, %v1419
        %v1428 = vmul.f32 %v1343, %v1419
        %v1429 = vmul.f32 %v1346, %v1419
        %v1430 = vmul.f32 %v1349, %v1419
        %v1431 = vmul.f32 %v1352, %v1419
        %v1432 = vmul.f32 %v1355, %v1419
        %v1433 = vmul.f32 %v1358, %v1419
        %v1434 = vmul.f32 %v1361, %v1419
        %v1435 = vmul.f32 %v1364, %v1419
        %v1436 = vmul.f32 %v1367, %v1419
        %v1437 = vmul.f32 %v1370, %v1419
        %v1438 = vmul.f32 %v1373, %v1419
        %v1439 = vmul.f32 %v1376, %v1419
        %v1440 = vmul.f32 %v1379, %v1419
        %v1441 = vmul.f32 %v1382, %v1419
        %v1442 = vmul.f32 %v1385, %v1419
        %v1443 = vmul.f32 %v1388, %v1419
        %v1444 = vmul.f32 %v1391, %v1419
        %v1445 = vmul.f32 %v1394, %v1419
        %v1446 = vmul.f32 %v1397, %v1419
        %v1447 = vmul.f32 %v1400, %v1419
        %v1448 = vmul.f32 %v1403, %v1419
        %v1449 = vmul.f32 %v1406, %v1419
        %v1450 = vmul.f32 %v1409, %v1419
        %v1451 = vmul.f32 %v1412, %v1419
        %v1452 = vsub.f32 %v1285, %v1420
        %v1453 = vsub.f32 %v1286, %v1421
        %v1454 = vsub.f32 %v1287, %v1422
        %v1455 = vsub.f32 %v1288, %v1423
        %v1456 = vsub.f32 %v1289, %v1424
        %v1457 = vsub.f32 %v1290, %v1425
        %v1458 = vsub.f32 %v1291, %v1426
        %v1459 = vsub.f32 %v1292, %v1427
        %v1460 = vsub.f32 %v1293, %v1428
        %v1461 = vsub.f32 %v1294, %v1429
        %v1462 = vsub.f32 %v1295, %v1430
        %v1463 = vsub.f32 %v1296, %v1431
        %v1464 = vsub.f32 %v1297, %v1432
        %v1465 = vsub.f32 %v1298, %v1433
        %v1466 = vsub.f32 %v1299, %v1434
        %v1467 = vsub.f32 %v1300, %v1435
        %v1468 = vsub.f32 %v1301, %v1436
        %v1469 = vsub.f32 %v1302, %v1437
        %v1470 = vsub.f32 %v1303, %v1438
        %v1471 = vsub.f32 %v1304, %v1439
        %v1472 = vsub.f32 %v1305, %v1440
        %v1473 = vsub.f32 %v1306, %v1441
        %v1474 = vsub.f32 %v1307, %v1442
        %v1475 = vsub.f32 %v1308, %v1443
        %v1476 = vsub.f32 %v1309, %v1444
        %v1477 = vsub.f32 %v1310, %v1445
        %v1478 = vsub.f32 %v1311, %v1446
        %v1479 = vsub.f32 %v1312, %v1447
        %v1480 = vsub.f32 %v1313, %v1448
        %v1481 = vsub.f32 %v1314, %v1449
        %v1482 = vsub.f32 %v1315, %v1450
        %v1483 = vsub.f32 %v1316, %v1451
        %v1484 = vmul.f32 %v1452, %v1452
        %v1485 = vmul.f32 %v1453, %v1453
        %v1486 = vmul.f32 %v1454, %v1454
        %v1487 = vmul.f32 %v1455, %v1455
        %v1488 = vmul.f32 %v1456, %v1456
        %v1489 = vmul.f32 %v1457, %v1457
        %v1490 = vmul.f32 %v1458, %v1458
        %v1491 = vmul.f32 %v1459, %v1459
        %v1492 = vmul.f32 %v1460, %v1460
        %v1493 = vmul.f32 %v1461, %v1461
        %v1494 = vmul.f32 %v1462, %v1462
        %v1495 = vmul.f32 %v1463, %v1463
        %v1496 = vmul.f32 %v1464, %v1464
        %v1497 = vmul.f32 %v1465, %v1465
        %v1498 = vmul.f32 %v1466, %v1466
        %v1499 = vmul.f32 %v1467, %v1467
        %v1500 = vmul.f32 %v1468, %v1468
        %v1501 = vmul.f32 %v1469, %v1469
        %v1502 = vmul.f32 %v1470, %v1470
        %v1503 = vmul.f32 %v1471, %v1471
        %v1504 = vmul.f32 %v1472, %v1472
        %v1505 = vmul.f32 %v1473, %v1473
        %v1506 = vmul.f32 %v1474, %v1474
        %v1507 = vmul.f32 %v1475, %v1475
        %v1508 = vmul.f32 %v1476, %v1476
        %v1509 = vmul.f32 %v1477, %v1477
        %v1510 = vmul.f32 %v1478, %v1478
        %v1511 = vmul.f32 %v1479, %v1479
        %v1512 = vmul.f32 %v1480, %v1480
        %v1513 = vmul.f32 %v1481, %v1481
        %v1514 = vmul.f32 %v1482, %v1482
        %v1515 = vmul.f32 %v1483, %v1483
        %v1516 = vsel %vm833, %v1484, 0.0
        %1517 = vadd.xlane.f32.xlu0 %v1516
        %v1518 = vpop.xlane.xlu0 %1517
        %v1519 = vsel %vm833, %v1485, 0.0
        %1520 = vadd.xlane.f32.xlu0 %v1519
        %v1521 = vpop.xlane.xlu0 %1520
        %v1522 = vsel %vm833, %v1486, 0.0
        %1523 = vadd.xlane.f32.xlu0 %v1522
        %v1524 = vpop.xlane.xlu0 %1523
        %v1525 = vsel %vm833, %v1487, 0.0
        %1526 = vadd.xlane.f32.xlu0 %v1525
        %v1527 = vpop.xlane.xlu0 %1526
        %v1528 = vsel %vm833, %v1488, 0.0
        %1529 = vadd.xlane.f32.xlu0 %v1528
        %v1530 = vpop.xlane.xlu0 %1529
        %v1531 = vsel %vm833, %v1489, 0.0
        %1532 = vadd.xlane.f32.xlu0 %v1531
        %v1533 = vpop.xlane.xlu0 %1532
        %v1534 = vsel %vm833, %v1490, 0.0
        %1535 = vadd.xlane.f32.xlu0 %v1534
        %v1536 = vpop.xlane.xlu0 %1535
        %v1537 = vsel %vm833, %v1491, 0.0
        %1538 = vadd.xlane.f32.xlu0 %v1537
        %v1539 = vpop.xlane.xlu0 %1538
        %v1540 = vsel %vm833, %v1492, 0.0
        %1541 = vadd.xlane.f32.xlu0 %v1540
        %v1542 = vpop.xlane.xlu0 %1541
        %v1543 = vsel %vm833, %v1493, 0.0
        %1544 = vadd.xlane.f32.xlu0 %v1543
        %v1545 = vpop.xlane.xlu0 %1544
        %v1546 = vsel %vm833, %v1494, 0.0
        %1547 = vadd.xlane.f32.xlu0 %v1546
        %v1548 = vpop.xlane.xlu0 %1547
        %v1549 = vsel %vm833, %v1495, 0.0
        %1550 = vadd.xlane.f32.xlu0 %v1549
        %v1551 = vpop.xlane.xlu0 %1550
        %v1552 = vsel %vm833, %v1496, 0.0
        %1553 = vadd.xlane.f32.xlu0 %v1552
        %v1554 = vpop.xlane.xlu0 %1553
        %v1555 = vsel %vm833, %v1497, 0.0
        %1556 = vadd.xlane.f32.xlu0 %v1555
        %v1557 = vpop.xlane.xlu0 %1556
        %v1558 = vsel %vm833, %v1498, 0.0
        %1559 = vadd.xlane.f32.xlu0 %v1558
        %v1560 = vpop.xlane.xlu0 %1559
        %v1561 = vsel %vm833, %v1499, 0.0
        %1562 = vadd.xlane.f32.xlu0 %v1561
        %v1563 = vpop.xlane.xlu0 %1562
        %v1564 = vsel %vm833, %v1500, 0.0
        %1565 = vadd.xlane.f32.xlu0 %v1564
        %v1566 = vpop.xlane.xlu0 %1565
        %v1567 = vsel %vm833, %v1501, 0.0
        %1568 = vadd.xlane.f32.xlu0 %v1567
        %v1569 = vpop.xlane.xlu0 %1568
        %v1570 = vsel %vm833, %v1502, 0.0
        %1571 = vadd.xlane.f32.xlu0 %v1570
        %v1572 = vpop.xlane.xlu0 %1571
        %v1573 = vsel %vm833, %v1503, 0.0
        %1574 = vadd.xlane.f32.xlu0 %v1573
        %v1575 = vpop.xlane.xlu0 %1574
        %v1576 = vsel %vm833, %v1504, 0.0
        %1577 = vadd.xlane.f32.xlu0 %v1576
        %v1578 = vpop.xlane.xlu0 %1577
        %v1579 = vsel %vm833, %v1505, 0.0
        %1580 = vadd.xlane.f32.xlu0 %v1579
        %v1581 = vpop.xlane.xlu0 %1580
        %v1582 = vsel %vm833, %v1506, 0.0
        %1583 = vadd.xlane.f32.xlu0 %v1582
        %v1584 = vpop.xlane.xlu0 %1583
        %v1585 = vsel %vm833, %v1507, 0.0
        %1586 = vadd.xlane.f32.xlu0 %v1585
        %v1587 = vpop.xlane.xlu0 %1586
        %v1588 = vsel %vm833, %v1508, 0.0
        %1589 = vadd.xlane.f32.xlu0 %v1588
        %v1590 = vpop.xlane.xlu0 %1589
        %v1591 = vsel %vm833, %v1509, 0.0
        %1592 = vadd.xlane.f32.xlu0 %v1591
        %v1593 = vpop.xlane.xlu0 %1592
        %v1594 = vsel %vm833, %v1510, 0.0
        %1595 = vadd.xlane.f32.xlu0 %v1594
        %v1596 = vpop.xlane.xlu0 %1595
        %v1597 = vsel %vm833, %v1511, 0.0
        %1598 = vadd.xlane.f32.xlu0 %v1597
        %v1599 = vpop.xlane.xlu0 %1598
        %v1600 = vsel %vm833, %v1512, 0.0
        %1601 = vadd.xlane.f32.xlu0 %v1600
        %v1602 = vpop.xlane.xlu0 %1601
        %v1603 = vsel %vm833, %v1513, 0.0
        %1604 = vadd.xlane.f32.xlu0 %v1603
        %v1605 = vpop.xlane.xlu0 %1604
        %v1606 = vsel %vm833, %v1514, 0.0
        %1607 = vadd.xlane.f32.xlu0 %v1606
        %v1608 = vpop.xlane.xlu0 %1607
        %v1609 = vsel %vm833, %v1515, 0.0
        %1610 = vadd.xlane.f32.xlu0 %v1609
        %v1611 = vpop.xlane.xlu0 %1610
        %v1612 = vmul.f32 %v1518, %v1419
        %v1613 = vmul.f32 %v1521, %v1419
        %v1614 = vmul.f32 %v1524, %v1419
        %v1615 = vmul.f32 %v1527, %v1419
        %v1616 = vmul.f32 %v1530, %v1419
        %v1617 = vmul.f32 %v1533, %v1419
        %v1618 = vmul.f32 %v1536, %v1419
        %v1619 = vmul.f32 %v1539, %v1419
        %v1620 = vmul.f32 %v1542, %v1419
        %v1621 = vmul.f32 %v1545, %v1419
        %v1622 = vmul.f32 %v1548, %v1419
        %v1623 = vmul.f32 %v1551, %v1419
        %v1624 = vmul.f32 %v1554, %v1419
        %v1625 = vmul.f32 %v1557, %v1419
        %v1626 = vmul.f32 %v1560, %v1419
        %v1627 = vmul.f32 %v1563, %v1419
        %v1628 = vmul.f32 %v1566, %v1419
        %v1629 = vmul.f32 %v1569, %v1419
        %v1630 = vmul.f32 %v1572, %v1419
        %v1631 = vmul.f32 %v1575, %v1419
        %v1632 = vmul.f32 %v1578, %v1419
        %v1633 = vmul.f32 %v1581, %v1419
        %v1634 = vmul.f32 %v1584, %v1419
        %v1635 = vmul.f32 %v1587, %v1419
        %v1636 = vmul.f32 %v1590, %v1419
        %v1637 = vmul.f32 %v1593, %v1419
        %v1638 = vmul.f32 %v1596, %v1419
        %v1639 = vmul.f32 %v1599, %v1419
        %v1640 = vmul.f32 %v1602, %v1419
        %v1641 = vmul.f32 %v1605, %v1419
        %v1642 = vmul.f32 %v1608, %v1419
        %v1643 = vmul.f32 %v1611, %v1419
        %v1644 = vadd.f32 %v1612, 1e-05
        %v1645 = vadd.f32 %v1613, 1e-05
        %v1646 = vadd.f32 %v1614, 1e-05
        %v1647 = vadd.f32 %v1615, 1e-05
        %v1648 = vadd.f32 %v1616, 1e-05
        %v1649 = vadd.f32 %v1617, 1e-05
        %v1650 = vadd.f32 %v1618, 1e-05
        %v1651 = vadd.f32 %v1619, 1e-05
        %v1652 = vadd.f32 %v1620, 1e-05
        %v1653 = vadd.f32 %v1621, 1e-05
        %v1654 = vadd.f32 %v1622, 1e-05
        %v1655 = vadd.f32 %v1623, 1e-05
        %v1656 = vadd.f32 %v1624, 1e-05
        %v1657 = vadd.f32 %v1625, 1e-05
        %v1658 = vadd.f32 %v1626, 1e-05
        %v1659 = vadd.f32 %v1627, 1e-05
        %v1660 = vadd.f32 %v1628, 1e-05
        %v1661 = vadd.f32 %v1629, 1e-05
        %v1662 = vadd.f32 %v1630, 1e-05
        %v1663 = vadd.f32 %v1631, 1e-05
        %v1664 = vadd.f32 %v1632, 1e-05
        %v1665 = vadd.f32 %v1633, 1e-05
        %v1666 = vadd.f32 %v1634, 1e-05
        %v1667 = vadd.f32 %v1635, 1e-05
        %v1668 = vadd.f32 %v1636, 1e-05
        %v1669 = vadd.f32 %v1637, 1e-05
        %v1670 = vadd.f32 %v1638, 1e-05
        %v1671 = vadd.f32 %v1639, 1e-05
        %v1672 = vadd.f32 %v1640, 1e-05
        %v1673 = vadd.f32 %v1641, 1e-05
        %v1674 = vadd.f32 %v1642, 1e-05
        %v1675 = vadd.f32 %v1643, 1e-05
        %v1676 = vrsqrt.pop %v1644
        %v1677 = vmul.f32 %v1676, %v1644
        %v1678 = vmul.f32 %v1677, %v1676
        %v1679 = vmul.f32 0.5, %v1678
        %v1680 = vsub.f32 1.5, %v1679
        %v1681 = vmul.f32 %v1676, %v1680
        %vm1682 = vweird.f32 %v1644
        %vm1683 = vweird.f32 %v1676
        %vm1684 = vmor %vm1682, %vm1683
        %v1685 = vsel %vm1684, %v1676, %v1681
        %v1686 = vrsqrt.pop %v1645
        %v1687 = vmul.f32 %v1686, %v1645
        %v1688 = vmul.f32 %v1687, %v1686
        %v1689 = vmul.f32 0.5, %v1688
        %v1690 = vsub.f32 1.5, %v1689
        %v1691 = vmul.f32 %v1686, %v1690
        %vm1692 = vweird.f32 %v1645
        %vm1693 = vweird.f32 %v1686
        %vm1694 = vmor %vm1692, %vm1693
        %v1695 = vsel %vm1694, %v1686, %v1691
        %v1696 = vrsqrt.pop %v1646
        %v1697 = vmul.f32 %v1696, %v1646
        %v1698 = vmul.f32 %v1697, %v1696
        %v1699 = vmul.f32 0.5, %v1698
        %v1700 = vsub.f32 1.5, %v1699
        %v1701 = vmul.f32 %v1696, %v1700
        %vm1702 = vweird.f32 %v1646
        %vm1703 = vweird.f32 %v1696
        %vm1704 = vmor %vm1702, %vm1703
        %v1705 = vsel %vm1704, %v1696, %v1701
        %v1706 = vrsqrt.pop %v1647
        %v1707 = vmul.f32 %v1706, %v1647
        %v1708 = vmul.f32 %v1707, %v1706
        %v1709 = vmul.f32 0.5, %v1708
        %v1710 = vsub.f32 1.5, %v1709
        %v1711 = vmul.f32 %v1706, %v1710
        %vm1712 = vweird.f32 %v1647
        %vm1713 = vweird.f32 %v1706
        %vm1714 = vmor %vm1712, %vm1713
        %v1715 = vsel %vm1714, %v1706, %v1711
        %v1716 = vrsqrt.pop %v1648
        %v1717 = vmul.f32 %v1716, %v1648
        %v1718 = vmul.f32 %v1717, %v1716
        %v1719 = vmul.f32 0.5, %v1718
        %v1720 = vsub.f32 1.5, %v1719
        %v1721 = vmul.f32 %v1716, %v1720
        %vm1722 = vweird.f32 %v1648
        %vm1723 = vweird.f32 %v1716
        %vm1724 = vmor %vm1722, %vm1723
        %v1725 = vsel %vm1724, %v1716, %v1721
        %v1726 = vrsqrt.pop %v1649
        %v1727 = vmul.f32 %v1726, %v1649
        %v1728 = vmul.f32 %v1727, %v1726
        %v1729 = vmul.f32 0.5, %v1728
        %v1730 = vsub.f32 1.5, %v1729
        %v1731 = vmul.f32 %v1726, %v1730
        %vm1732 = vweird.f32 %v1649
        %vm1733 = vweird.f32 %v1726
        %vm1734 = vmor %vm1732, %vm1733
        %v1735 = vsel %vm1734, %v1726, %v1731
        %v1736 = vrsqrt.pop %v1650
        %v1737 = vmul.f32 %v1736, %v1650
        %v1738 = vmul.f32 %v1737, %v1736
        %v1739 = vmul.f32 0.5, %v1738
        %v1740 = vsub.f32 1.5, %v1739
        %v1741 = vmul.f32 %v1736, %v1740
        %vm1742 = vweird.f32 %v1650
        %vm1743 = vweird.f32 %v1736
        %vm1744 = vmor %vm1742, %vm1743
        %v1745 = vsel %vm1744, %v1736, %v1741
        %v1746 = vrsqrt.pop %v1651
        %v1747 = vmul.f32 %v1746, %v1651
        %v1748 = vmul.f32 %v1747, %v1746
        %v1749 = vmul.f32 0.5, %v1748
        %v1750 = vsub.f32 1.5, %v1749
        %v1751 = vmul.f32 %v1746, %v1750
        %vm1752 = vweird.f32 %v1651
        %vm1753 = vweird.f32 %v1746
        %vm1754 = vmor %vm1752, %vm1753
        %v1755 = vsel %vm1754, %v1746, %v1751
        %v1756 = vrsqrt.pop %v1652
        %v1757 = vmul.f32 %v1756, %v1652
        %v1758 = vmul.f32 %v1757, %v1756
        %v1759 = vmul.f32 0.5, %v1758
        %v1760 = vsub.f32 1.5, %v1759
        %v1761 = vmul.f32 %v1756, %v1760
        %vm1762 = vweird.f32 %v1652
        %vm1763 = vweird.f32 %v1756
        %vm1764 = vmor %vm1762, %vm1763
        %v1765 = vsel %vm1764, %v1756, %v1761
        %v1766 = vrsqrt.pop %v1653
        %v1767 = vmul.f32 %v1766, %v1653
        %v1768 = vmul.f32 %v1767, %v1766
        %v1769 = vmul.f32 0.5, %v1768
        %v1770 = vsub.f32 1.5, %v1769
        %v1771 = vmul.f32 %v1766, %v1770
        %vm1772 = vweird.f32 %v1653
        %vm1773 = vweird.f32 %v1766
        %vm1774 = vmor %vm1772, %vm1773
        %v1775 = vsel %vm1774, %v1766, %v1771
        %v1776 = vrsqrt.pop %v1654
        %v1777 = vmul.f32 %v1776, %v1654
        %v1778 = vmul.f32 %v1777, %v1776
        %v1779 = vmul.f32 0.5, %v1778
        %v1780 = vsub.f32 1.5, %v1779
        %v1781 = vmul.f32 %v1776, %v1780
        %vm1782 = vweird.f32 %v1654
        %vm1783 = vweird.f32 %v1776
        %vm1784 = vmor %vm1782, %vm1783
        %v1785 = vsel %vm1784, %v1776, %v1781
        %v1786 = vrsqrt.pop %v1655
        %v1787 = vmul.f32 %v1786, %v1655
        %v1788 = vmul.f32 %v1787, %v1786
        %v1789 = vmul.f32 0.5, %v1788
        %v1790 = vsub.f32 1.5, %v1789
        %v1791 = vmul.f32 %v1786, %v1790
        %vm1792 = vweird.f32 %v1655
        %vm1793 = vweird.f32 %v1786
        %vm1794 = vmor %vm1792, %vm1793
        %v1795 = vsel %vm1794, %v1786, %v1791
        %v1796 = vrsqrt.pop %v1656
        %v1797 = vmul.f32 %v1796, %v1656
        %v1798 = vmul.f32 %v1797, %v1796
        %v1799 = vmul.f32 0.5, %v1798
        %v1800 = vsub.f32 1.5, %v1799
        %v1801 = vmul.f32 %v1796, %v1800
        %vm1802 = vweird.f32 %v1656
        %vm1803 = vweird.f32 %v1796
        %vm1804 = vmor %vm1802, %vm1803
        %v1805 = vsel %vm1804, %v1796, %v1801
        %v1806 = vrsqrt.pop %v1657
        %v1807 = vmul.f32 %v1806, %v1657
        %v1808 = vmul.f32 %v1807, %v1806
        %v1809 = vmul.f32 0.5, %v1808
        %v1810 = vsub.f32 1.5, %v1809
        %v1811 = vmul.f32 %v1806, %v1810
        %vm1812 = vweird.f32 %v1657
        %vm1813 = vweird.f32 %v1806
        %vm1814 = vmor %vm1812, %vm1813
        %v1815 = vsel %vm1814, %v1806, %v1811
        %v1816 = vrsqrt.pop %v1658
        %v1817 = vmul.f32 %v1816, %v1658
        %v1818 = vmul.f32 %v1817, %v1816
        %v1819 = vmul.f32 0.5, %v1818
        %v1820 = vsub.f32 1.5, %v1819
        %v1821 = vmul.f32 %v1816, %v1820
        %vm1822 = vweird.f32 %v1658
        %vm1823 = vweird.f32 %v1816
        %vm1824 = vmor %vm1822, %vm1823
        %v1825 = vsel %vm1824, %v1816, %v1821
        %v1826 = vrsqrt.pop %v1659
        %v1827 = vmul.f32 %v1826, %v1659
        %v1828 = vmul.f32 %v1827, %v1826
        %v1829 = vmul.f32 0.5, %v1828
        %v1830 = vsub.f32 1.5, %v1829
        %v1831 = vmul.f32 %v1826, %v1830
        %vm1832 = vweird.f32 %v1659
        %vm1833 = vweird.f32 %v1826
        %vm1834 = vmor %vm1832, %vm1833
        %v1835 = vsel %vm1834, %v1826, %v1831
        %v1836 = vrsqrt.pop %v1660
        %v1837 = vmul.f32 %v1836, %v1660
        %v1838 = vmul.f32 %v1837, %v1836
        %v1839 = vmul.f32 0.5, %v1838
        %v1840 = vsub.f32 1.5, %v1839
        %v1841 = vmul.f32 %v1836, %v1840
        %vm1842 = vweird.f32 %v1660
        %vm1843 = vweird.f32 %v1836
        %vm1844 = vmor %vm1842, %vm1843
        %v1845 = vsel %vm1844, %v1836, %v1841
        %v1846 = vrsqrt.pop %v1661
        %v1847 = vmul.f32 %v1846, %v1661
        %v1848 = vmul.f32 %v1847, %v1846
        %v1849 = vmul.f32 0.5, %v1848
        %v1850 = vsub.f32 1.5, %v1849
        %v1851 = vmul.f32 %v1846, %v1850
        %vm1852 = vweird.f32 %v1661
        %vm1853 = vweird.f32 %v1846
        %vm1854 = vmor %vm1852, %vm1853
        %v1855 = vsel %vm1854, %v1846, %v1851
        %v1856 = vrsqrt.pop %v1662
        %v1857 = vmul.f32 %v1856, %v1662
        %v1858 = vmul.f32 %v1857, %v1856
        %v1859 = vmul.f32 0.5, %v1858
        %v1860 = vsub.f32 1.5, %v1859
        %v1861 = vmul.f32 %v1856, %v1860
        %vm1862 = vweird.f32 %v1662
        %vm1863 = vweird.f32 %v1856
        %vm1864 = vmor %vm1862, %vm1863
        %v1865 = vsel %vm1864, %v1856, %v1861
        %v1866 = vrsqrt.pop %v1663
        %v1867 = vmul.f32 %v1866, %v1663
        %v1868 = vmul.f32 %v1867, %v1866
        %v1869 = vmul.f32 0.5, %v1868
        %v1870 = vsub.f32 1.5, %v1869
        %v1871 = vmul.f32 %v1866, %v1870
        %vm1872 = vweird.f32 %v1663
        %vm1873 = vweird.f32 %v1866
        %vm1874 = vmor %vm1872, %vm1873
        %v1875 = vsel %vm1874, %v1866, %v1871
        %v1876 = vrsqrt.pop %v1664
        %v1877 = vmul.f32 %v1876, %v1664
        %v1878 = vmul.f32 %v1877, %v1876
        %v1879 = vmul.f32 0.5, %v1878
        %v1880 = vsub.f32 1.5, %v1879
        %v1881 = vmul.f32 %v1876, %v1880
        %vm1882 = vweird.f32 %v1664
        %vm1883 = vweird.f32 %v1876
        %vm1884 = vmor %vm1882, %vm1883
        %v1885 = vsel %vm1884, %v1876, %v1881
        %v1886 = vrsqrt.pop %v1665
        %v1887 = vmul.f32 %v1886, %v1665
        %v1888 = vmul.f32 %v1887, %v1886
        %v1889 = vmul.f32 0.5, %v1888
        %v1890 = vsub.f32 1.5, %v1889
        %v1891 = vmul.f32 %v1886, %v1890
        %vm1892 = vweird.f32 %v1665
        %vm1893 = vweird.f32 %v1886
        %vm1894 = vmor %vm1892, %vm1893
        %v1895 = vsel %vm1894, %v1886, %v1891
        %v1896 = vrsqrt.pop %v1666
        %v1897 = vmul.f32 %v1896, %v1666
        %v1898 = vmul.f32 %v1897, %v1896
        %v1899 = vmul.f32 0.5, %v1898
        %v1900 = vsub.f32 1.5, %v1899
        %v1901 = vmul.f32 %v1896, %v1900
        %vm1902 = vweird.f32 %v1666
        %vm1903 = vweird.f32 %v1896
        %vm1904 = vmor %vm1902, %vm1903
        %v1905 = vsel %vm1904, %v1896, %v1901
        %v1906 = vrsqrt.pop %v1667
        %v1907 = vmul.f32 %v1906, %v1667
        %v1908 = vmul.f32 %v1907, %v1906
        %v1909 = vmul.f32 0.5, %v1908
        %v1910 = vsub.f32 1.5, %v1909
        %v1911 = vmul.f32 %v1906, %v1910
        %vm1912 = vweird.f32 %v1667
        %vm1913 = vweird.f32 %v1906
        %vm1914 = vmor %vm1912, %vm1913
        %v1915 = vsel %vm1914, %v1906, %v1911
        %v1916 = vrsqrt.pop %v1668
        %v1917 = vmul.f32 %v1916, %v1668
        %v1918 = vmul.f32 %v1917, %v1916
        %v1919 = vmul.f32 0.5, %v1918
        %v1920 = vsub.f32 1.5, %v1919
        %v1921 = vmul.f32 %v1916, %v1920
        %vm1922 = vweird.f32 %v1668
        %vm1923 = vweird.f32 %v1916
        %vm1924 = vmor %vm1922, %vm1923
        %v1925 = vsel %vm1924, %v1916, %v1921
        %v1926 = vrsqrt.pop %v1669
        %v1927 = vmul.f32 %v1926, %v1669
        %v1928 = vmul.f32 %v1927, %v1926
        %v1929 = vmul.f32 0.5, %v1928
        %v1930 = vsub.f32 1.5, %v1929
        %v1931 = vmul.f32 %v1926, %v1930
        %vm1932 = vweird.f32 %v1669
        %vm1933 = vweird.f32 %v1926
        %vm1934 = vmor %vm1932, %vm1933
        %v1935 = vsel %vm1934, %v1926, %v1931
        %v1936 = vrsqrt.pop %v1670
        %v1937 = vmul.f32 %v1936, %v1670
        %v1938 = vmul.f32 %v1937, %v1936
        %v1939 = vmul.f32 0.5, %v1938
        %v1940 = vsub.f32 1.5, %v1939
        %v1941 = vmul.f32 %v1936, %v1940
        %vm1942 = vweird.f32 %v1670
        %vm1943 = vweird.f32 %v1936
        %vm1944 = vmor %vm1942, %vm1943
        %v1945 = vsel %vm1944, %v1936, %v1941
        %v1946 = vrsqrt.pop %v1671
        %v1947 = vmul.f32 %v1946, %v1671
        %v1948 = vmul.f32 %v1947, %v1946
        %v1949 = vmul.f32 0.5, %v1948
        %v1950 = vsub.f32 1.5, %v1949
        %v1951 = vmul.f32 %v1946, %v1950
        %vm1952 = vweird.f32 %v1671
        %vm1953 = vweird.f32 %v1946
        %vm1954 = vmor %vm1952, %vm1953
        %v1955 = vsel %vm1954, %v1946, %v1951
        %v1956 = vrsqrt.pop %v1672
        %v1957 = vmul.f32 %v1956, %v1672
        %v1958 = vmul.f32 %v1957, %v1956
        %v1959 = vmul.f32 0.5, %v1958
        %v1960 = vsub.f32 1.5, %v1959
        %v1961 = vmul.f32 %v1956, %v1960
        %vm1962 = vweird.f32 %v1672
        %vm1963 = vweird.f32 %v1956
        %vm1964 = vmor %vm1962, %vm1963
        %v1965 = vsel %vm1964, %v1956, %v1961
        %v1966 = vrsqrt.pop %v1673
        %v1967 = vmul.f32 %v1966, %v1673
        %v1968 = vmul.f32 %v1967, %v1966
        %v1969 = vmul.f32 0.5, %v1968
        %v1970 = vsub.f32 1.5, %v1969
        %v1971 = vmul.f32 %v1966, %v1970
        %vm1972 = vweird.f32 %v1673
        %vm1973 = vweird.f32 %v1966
        %vm1974 = vmor %vm1972, %vm1973
        %v1975 = vsel %vm1974, %v1966, %v1971
        %v1976 = vrsqrt.pop %v1674
        %v1977 = vmul.f32 %v1976, %v1674
        %v1978 = vmul.f32 %v1977, %v1976
        %v1979 = vmul.f32 0.5, %v1978
        %v1980 = vsub.f32 1.5, %v1979
        %v1981 = vmul.f32 %v1976, %v1980
        %vm1982 = vweird.f32 %v1674
        %vm1983 = vweird.f32 %v1976
        %vm1984 = vmor %vm1982, %vm1983
        %v1985 = vsel %vm1984, %v1976, %v1981
        %v1986 = vrsqrt.pop %v1675
        %v1987 = vmul.f32 %v1986, %v1675
        %v1988 = vmul.f32 %v1987, %v1986
        %v1989 = vmul.f32 0.5, %v1988
        %v1990 = vsub.f32 1.5, %v1989
        %v1991 = vmul.f32 %v1986, %v1990
        %vm1992 = vweird.f32 %v1675
        %vm1993 = vweird.f32 %v1986
        %vm1994 = vmor %vm1992, %vm1993
        %v1995 = vsel %vm1994, %v1986, %v1991
        %v1996 = vmul.f32 %v1452, %v1685
        %v1997 = vmul.f32 %v1453, %v1695
        %v1998 = vmul.f32 %v1454, %v1705
        %v1999 = vmul.f32 %v1455, %v1715
        %v2000 = vmul.f32 %v1456, %v1725
        %v2001 = vmul.f32 %v1457, %v1735
        %v2002 = vmul.f32 %v1458, %v1745
        %v2003 = vmul.f32 %v1459, %v1755
        %v2004 = vmul.f32 %v1460, %v1765
        %v2005 = vmul.f32 %v1461, %v1775
        %v2006 = vmul.f32 %v1462, %v1785
        %v2007 = vmul.f32 %v1463, %v1795
        %v2008 = vmul.f32 %v1464, %v1805
        %v2009 = vmul.f32 %v1465, %v1815
        %v2010 = vmul.f32 %v1466, %v1825
        %v2011 = vmul.f32 %v1467, %v1835
        %v2012 = vmul.f32 %v1468, %v1845
        %v2013 = vmul.f32 %v1469, %v1855
        %v2014 = vmul.f32 %v1470, %v1865
        %v2015 = vmul.f32 %v1471, %v1875
        %v2016 = vmul.f32 %v1472, %v1885
        %v2017 = vmul.f32 %v1473, %v1895
        %v2018 = vmul.f32 %v1474, %v1905
        %v2019 = vmul.f32 %v1475, %v1915
        %v2020 = vmul.f32 %v1476, %v1925
        %v2021 = vmul.f32 %v1477, %v1935
        %v2022 = vmul.f32 %v1478, %v1945
        %v2023 = vmul.f32 %v1479, %v1955
        %v2024 = vmul.f32 %v1480, %v1965
        %v2025 = vmul.f32 %v1481, %v1975
        %v2026 = vmul.f32 %v1482, %v1985
        %v2027 = vmul.f32 %v1483, %v1995
        %v2028 = vperm.slane %v381, 0
        %v2029 = vmul.f32 %v1996, %v2028
        %v2030 = vmul.f32 %v1997, %v2028
        %v2031 = vmul.f32 %v1998, %v2028
        %v2032 = vmul.f32 %v1999, %v2028
        %v2033 = vmul.f32 %v2000, %v2028
        %v2034 = vmul.f32 %v2001, %v2028
        %v2035 = vmul.f32 %v2002, %v2028
        %v2036 = vmul.f32 %v2003, %v2028
        %v2037 = vmul.f32 %v2004, %v2028
        %v2038 = vmul.f32 %v2005, %v2028
        %v2039 = vmul.f32 %v2006, %v2028
        %v2040 = vmul.f32 %v2007, %v2028
        %v2041 = vmul.f32 %v2008, %v2028
        %v2042 = vmul.f32 %v2009, %v2028
        %v2043 = vmul.f32 %v2010, %v2028
        %v2044 = vmul.f32 %v2011, %v2028
        %v2045 = vmul.f32 %v2012, %v2028
        %v2046 = vmul.f32 %v2013, %v2028
        %v2047 = vmul.f32 %v2014, %v2028
        %v2048 = vmul.f32 %v2015, %v2028
        %v2049 = vmul.f32 %v2016, %v2028
        %v2050 = vmul.f32 %v2017, %v2028
        %v2051 = vmul.f32 %v2018, %v2028
        %v2052 = vmul.f32 %v2019, %v2028
        %v2053 = vmul.f32 %v2020, %v2028
        %v2054 = vmul.f32 %v2021, %v2028
        %v2055 = vmul.f32 %v2022, %v2028
        %v2056 = vmul.f32 %v2023, %v2028
        %v2057 = vmul.f32 %v2024, %v2028
        %v2058 = vmul.f32 %v2025, %v2028
        %v2059 = vmul.f32 %v2026, %v2028
        %v2060 = vmul.f32 %v2027, %v2028
        %v2061 = vperm.slane %v382, 0
        %v2062 = vadd.f32 %v2029, %v2061
        %v2063 = vadd.f32 %v2030, %v2061
        %v2064 = vadd.f32 %v2031, %v2061
        %v2065 = vadd.f32 %v2032, %v2061
        %v2066 = vadd.f32 %v2033, %v2061
        %v2067 = vadd.f32 %v2034, %v2061
        %v2068 = vadd.f32 %v2035, %v2061
        %v2069 = vadd.f32 %v2036, %v2061
        %v2070 = vadd.f32 %v2037, %v2061
        %v2071 = vadd.f32 %v2038, %v2061
        %v2072 = vadd.f32 %v2039, %v2061
        %v2073 = vadd.f32 %v2040, %v2061
        %v2074 = vadd.f32 %v2041, %v2061
        %v2075 = vadd.f32 %v2042, %v2061
        %v2076 = vadd.f32 %v2043, %v2061
        %v2077 = vadd.f32 %v2044, %v2061
        %v2078 = vadd.f32 %v2045, %v2061
        %v2079 = vadd.f32 %v2046, %v2061
        %v2080 = vadd.f32 %v2047, %v2061
        %v2081 = vadd.f32 %v2048, %v2061
        %v2082 = vadd.f32 %v2049, %v2061
        %v2083 = vadd.f32 %v2050, %v2061
        %v2084 = vadd.f32 %v2051, %v2061
        %v2085 = vadd.f32 %v2052, %v2061
        %v2086 = vadd.f32 %v2053, %v2061
        %v2087 = vadd.f32 %v2054, %v2061
        %v2088 = vadd.f32 %v2055, %v2061
        %v2089 = vadd.f32 %v2056, %v2061
        %v2090 = vadd.f32 %v2057, %v2061
        %v2091 = vadd.f32 %v2058, %v2061
        %v2092 = vadd.f32 %v2059, %v2061
        %v2093 = vadd.f32 %v2060, %v2061
        %v2094 = vld [vmem:[%s3 + $0x20] sm:$0xff]
        %v2095 = vld [vmem:[%s3 + $0x28] sm:$0xff]
        %v2096 = vld [vmem:[%s3 + $0x30] sm:$0xff]
        %v2097 = vld [vmem:[%s3 + $0x38] sm:$0xff]
        %v2098 = vld [vmem:[%s3 + $0x80] sm:$0xff]
        %v2099 = vld [vmem:[%s3 + $0x88] sm:$0xff]
        %v2100 = vld [vmem:[%s3 + $0x90] sm:$0xff]
        %v2101 = vld [vmem:[%s3 + $0x98] sm:$0xff]
        %v2102 = vld [vmem:[%s3 + $0xe0] sm:$0xff]
        %v2103 = vld [vmem:[%s3 + $0xe8] sm:$0xff]
        %v2104 = vld [vmem:[%s3 + $0xf0] sm:$0xff]
        %v2105 = vld [vmem:[%s3 + $0xf8] sm:$0xff]
        %v2106 = vld [vmem:[%s4 + $0x1] sm:$0x1]
        %v2107 = vld [vmem:[%s4 + $0x4] sm:$0x1]
        %v2108 = vld [vmem:[%s4 + $0x7] sm:$0x1]
        %v2109 = vld [vmem:[%s4 + $0xa] sm:$0x1]
        %2110 = vmatpush.msra.mxu0 0.0
        %2111 = vmatpush.msra.mxu0 0.0
        %2112 = vmatpush.msra.mxu0 0.0
        %2113 = vmatpush.msra.mxu0 0.0
        %2114 = vmatpush.msra.mxu0 0.0
        %2115 = vmatpush.msra.mxu0 0.0
        %2116 = vmatpush.msra.mxu0 0.0
        %2117 = vmatpush.msra.mxu0 0.0
        %2118 = vmatpush.msra.mxu0 0.0
        %2119 = vmatpush.msra.mxu0 0.0
        %2120 = vmatpush.msra.mxu0 0.0
        %2121 = vmatpush.msra.mxu0 0.0
        %2122 = vmatpush.msra.mxu0 0.0
        %2123 = vmatpush.msra.mxu0 0.0
        %2124 = vmatpush.msra.mxu0 %v2063
        %2125 = vmatpush.msra.mxu0 %v2062
        %2126 = vmatmul.f32.gmra.mxu0 %v385
        %v2127 = vpop.f32.mrf.mxu0
        %v2128 = vadd.f32 0.0, %v2127
        %2129 = vmatmul.f32.gmra.mxu0 %v388
        %v2130 = vpop.f32.mrf.mxu0
        %v2131 = vadd.f32 0.0, %v2130
        %2132 = vdwg.mxu0
        %2133 = vmatpush.msra.mxu0 0.0
        %2134 = vmatpush.msra.mxu0 0.0
        %2135 = vmatpush.msra.mxu0 0.0
        %2136 = vmatpush.msra.mxu0 0.0
        %2137 = vmatpush.msra.mxu0 0.0
        %2138 = vmatpush.msra.mxu0 0.0
        %2139 = vmatpush.msra.mxu0 0.0
        %2140 = vmatpush.msra.mxu0 0.0
        %2141 = vmatpush.msra.mxu0 0.0
        %2142 = vmatpush.msra.mxu0 0.0
        %2143 = vmatpush.msra.mxu0 0.0
        %2144 = vmatpush.msra.mxu0 0.0
        %2145 = vmatpush.msra.mxu0 0.0
        %2146 = vmatpush.msra.mxu0 0.0
        %2147 = vmatpush.msra.mxu0 %v2065
        %2148 = vmatpush.msra.mxu0 %v2064
        %2149 = vmatmul.f32.gmra.mxu0 %v385
        %v2150 = vpop.f32.mrf.mxu0
        %v2151 = vadd.f32 0.0, %v2150
        %2152 = vmatmul.f32.gmra.mxu0 %v388
        %v2153 = vpop.f32.mrf.mxu0
        %v2154 = vadd.f32 0.0, %v2153
        %2155 = vdwg.mxu0
        %2156 = vmatpush.msra.mxu0 0.0
        %2157 = vmatpush.msra.mxu0 0.0
        %2158 = vmatpush.msra.mxu0 0.0
        %2159 = vmatpush.msra.mxu0 0.0
        %2160 = vmatpush.msra.mxu0 0.0
        %2161 = vmatpush.msra.mxu0 0.0
        %2162 = vmatpush.msra.mxu0 0.0
        %2163 = vmatpush.msra.mxu0 0.0
        %2164 = vmatpush.msra.mxu0 0.0
        %2165 = vmatpush.msra.mxu0 0.0
        %2166 = vmatpush.msra.mxu0 0.0
        %2167 = vmatpush.msra.mxu0 0.0
        %2168 = vmatpush.msra.mxu0 0.0
        %2169 = vmatpush.msra.mxu0 0.0
        %2170 = vmatpush.msra.mxu0 %v2067
        %2171 = vmatpush.msra.mxu0 %v2066
        %2172 = vmatmul.f32.gmra.mxu0 %v437
        %v2173 = vpop.f32.mrf.mxu0
        %v2174 = vadd.f32 0.0, %v2173
        %2175 = vmatmul.f32.gmra.mxu0 %v440
        %v2176 = vpop.f32.mrf.mxu0
        %v2177 = vadd.f32 0.0, %v2176
        %2178 = vdwg.mxu0
        %2179 = vmatpush.msra.mxu0 0.0
        %2180 = vmatpush.msra.mxu0 0.0
        %2181 = vmatpush.msra.mxu0 0.0
        %2182 = vmatpush.msra.mxu0 0.0
        %2183 = vmatpush.msra.mxu0 0.0
        %2184 = vmatpush.msra.mxu0 0.0
        %2185 = vmatpush.msra.mxu0 0.0
        %2186 = vmatpush.msra.mxu0 0.0
        %2187 = vmatpush.msra.mxu0 0.0
        %2188 = vmatpush.msra.mxu0 0.0
        %2189 = vmatpush.msra.mxu0 0.0
        %2190 = vmatpush.msra.mxu0 0.0
        %2191 = vmatpush.msra.mxu0 0.0
        %2192 = vmatpush.msra.mxu0 0.0
        %2193 = vmatpush.msra.mxu0 %v2069
        %2194 = vmatpush.msra.mxu0 %v2068
        %2195 = vmatmul.f32.gmra.mxu0 %v437
        %v2196 = vpop.f32.mrf.mxu0
        %v2197 = vadd.f32 0.0, %v2196
        %2198 = vmatmul.f32.gmra.mxu0 %v440
        %v2199 = vpop.f32.mrf.mxu0
        %v2200 = vadd.f32 0.0, %v2199
        %2201 = vdwg.mxu0
        %2202 = vmatpush.msra.mxu0 0.0
        %2203 = vmatpush.msra.mxu0 0.0
        %2204 = vmatpush.msra.mxu0 0.0
        %2205 = vmatpush.msra.mxu0 0.0
        %2206 = vmatpush.msra.mxu0 0.0
        %2207 = vmatpush.msra.mxu0 0.0
        %2208 = vmatpush.msra.mxu0 0.0
        %2209 = vmatpush.msra.mxu0 0.0
        %2210 = vmatpush.msra.mxu0 0.0
        %2211 = vmatpush.msra.mxu0 0.0
        %2212 = vmatpush.msra.mxu0 0.0
        %2213 = vmatpush.msra.mxu0 0.0
        %2214 = vmatpush.msra.mxu0 0.0
        %2215 = vmatpush.msra.mxu0 0.0
        %2216 = vmatpush.msra.mxu0 %v2071
        %2217 = vmatpush.msra.mxu0 %v2070
        %2218 = vmatmul.f32.gmra.mxu0 %v489
        %v2219 = vpop.f32.mrf.mxu0
        %v2220 = vadd.f32 0.0, %v2219
        %2221 = vmatmul.f32.gmra.mxu0 %v492
        %v2222 = vpop.f32.mrf.mxu0
        %v2223 = vadd.f32 0.0, %v2222
        %2224 = vdwg.mxu0
        %2225 = vmatpush.msra.mxu0 0.0
        %2226 = vmatpush.msra.mxu0 0.0
        %2227 = vmatpush.msra.mxu0 0.0
        %2228 = vmatpush.msra.mxu0 0.0
        %2229 = vmatpush.msra.mxu0 0.0
        %2230 = vmatpush.msra.mxu0 0.0
        %2231 = vmatpush.msra.mxu0 0.0
        %2232 = vmatpush.msra.mxu0 0.0
        %2233 = vmatpush.msra.mxu0 0.0
        %2234 = vmatpush.msra.mxu0 0.0
        %2235 = vmatpush.msra.mxu0 0.0
        %2236 = vmatpush.msra.mxu0 0.0
        %2237 = vmatpush.msra.mxu0 0.0
        %2238 = vmatpush.msra.mxu0 0.0
        %2239 = vmatpush.msra.mxu0 %v2073
        %2240 = vmatpush.msra.mxu0 %v2072
        %2241 = vmatmul.f32.gmra.mxu0 %v489
        %v2242 = vpop.f32.mrf.mxu0
        %v2243 = vadd.f32 0.0, %v2242
        %2244 = vmatmul.f32.gmra.mxu0 %v492
        %v2245 = vpop.f32.mrf.mxu0
        %v2246 = vadd.f32 0.0, %v2245
        %2247 = vdwg.mxu0
        %2248 = vmatpush.msra.mxu0 0.0
        %2249 = vmatpush.msra.mxu0 0.0
        %2250 = vmatpush.msra.mxu0 0.0
        %2251 = vmatpush.msra.mxu0 0.0
        %2252 = vmatpush.msra.mxu0 0.0
        %2253 = vmatpush.msra.mxu0 0.0
        %2254 = vmatpush.msra.mxu0 0.0
        %2255 = vmatpush.msra.mxu0 0.0
        %2256 = vmatpush.msra.mxu0 0.0
        %2257 = vmatpush.msra.mxu0 0.0
        %2258 = vmatpush.msra.mxu0 0.0
        %2259 = vmatpush.msra.mxu0 0.0
        %2260 = vmatpush.msra.mxu0 0.0
        %2261 = vmatpush.msra.mxu0 0.0
        %2262 = vmatpush.msra.mxu0 %v2075
        %2263 = vmatpush.msra.mxu0 %v2074
        %2264 = vmatmul.f32.gmra.mxu0 %v541
        %v2265 = vpop.f32.mrf.mxu0
        %v2266 = vadd.f32 0.0, %v2265
        %2267 = vmatmul.f32.gmra.mxu0 %v544
        %v2268 = vpop.f32.mrf.mxu0
        %v2269 = vadd.f32 0.0, %v2268
        %2270 = vdwg.mxu0
        %2271 = vmatpush.msra.mxu0 0.0
        %2272 = vmatpush.msra.mxu0 0.0
        %2273 = vmatpush.msra.mxu0 0.0
        %2274 = vmatpush.msra.mxu0 0.0
        %2275 = vmatpush.msra.mxu0 0.0
        %2276 = vmatpush.msra.mxu0 0.0
        %2277 = vmatpush.msra.mxu0 0.0
        %2278 = vmatpush.msra.mxu0 0.0
        %2279 = vmatpush.msra.mxu0 0.0
        %2280 = vmatpush.msra.mxu0 0.0
        %2281 = vmatpush.msra.mxu0 0.0
        %2282 = vmatpush.msra.mxu0 0.0
        %2283 = vmatpush.msra.mxu0 0.0
        %2284 = vmatpush.msra.mxu0 0.0
        %2285 = vmatpush.msra.mxu0 %v2077
        %2286 = vmatpush.msra.mxu0 %v2076
        %2287 = vmatmul.f32.gmra.mxu0 %v541
        %v2288 = vpop.f32.mrf.mxu0
        %v2289 = vadd.f32 0.0, %v2288
        %2290 = vmatmul.f32.gmra.mxu0 %v544
        %v2291 = vpop.f32.mrf.mxu0
        %v2292 = vadd.f32 0.0, %v2291
        %2293 = vdwg.mxu0
        %2294 = vmatpush.msra.mxu0 0.0
        %2295 = vmatpush.msra.mxu0 0.0
        %2296 = vmatpush.msra.mxu0 0.0
        %2297 = vmatpush.msra.mxu0 0.0
        %2298 = vmatpush.msra.mxu0 0.0
        %2299 = vmatpush.msra.mxu0 0.0
        %2300 = vmatpush.msra.mxu0 0.0
        %2301 = vmatpush.msra.mxu0 0.0
        %2302 = vmatpush.msra.mxu0 0.0
        %2303 = vmatpush.msra.mxu0 0.0
        %2304 = vmatpush.msra.mxu0 0.0
        %2305 = vmatpush.msra.mxu0 0.0
        %2306 = vmatpush.msra.mxu0 0.0
        %2307 = vmatpush.msra.mxu0 0.0
        %2308 = vmatpush.msra.mxu0 %v2079
        %2309 = vmatpush.msra.mxu0 %v2078
        %2310 = vmatmul.f32.gmra.mxu0 %v593
        %v2311 = vpop.f32.mrf.mxu0
        %v2312 = vadd.f32 0.0, %v2311
        %2313 = vmatmul.f32.gmra.mxu0 %v596
        %v2314 = vpop.f32.mrf.mxu0
        %v2315 = vadd.f32 0.0, %v2314
        %2316 = vdwg.mxu0
        %2317 = vmatpush.msra.mxu0 0.0
        %2318 = vmatpush.msra.mxu0 0.0
        %2319 = vmatpush.msra.mxu0 0.0
        %2320 = vmatpush.msra.mxu0 0.0
        %2321 = vmatpush.msra.mxu0 0.0
        %2322 = vmatpush.msra.mxu0 0.0
        %2323 = vmatpush.msra.mxu0 0.0
        %2324 = vmatpush.msra.mxu0 0.0
        %2325 = vmatpush.msra.mxu0 0.0
        %2326 = vmatpush.msra.mxu0 0.0
        %2327 = vmatpush.msra.mxu0 0.0
        %2328 = vmatpush.msra.mxu0 0.0
        %2329 = vmatpush.msra.mxu0 0.0
        %2330 = vmatpush.msra.mxu0 0.0
        %2331 = vmatpush.msra.mxu0 %v2081
        %2332 = vmatpush.msra.mxu0 %v2080
        %2333 = vmatmul.f32.gmra.mxu0 %v593
        %v2334 = vpop.f32.mrf.mxu0
        %v2335 = vadd.f32 0.0, %v2334
        %2336 = vmatmul.f32.gmra.mxu0 %v596
        %v2337 = vpop.f32.mrf.mxu0
        %v2338 = vadd.f32 0.0, %v2337
        %2339 = vdwg.mxu0
        %2340 = vmatpush.msra.mxu0 0.0
        %2341 = vmatpush.msra.mxu0 0.0
        %2342 = vmatpush.msra.mxu0 0.0
        %2343 = vmatpush.msra.mxu0 0.0
        %2344 = vmatpush.msra.mxu0 0.0
        %2345 = vmatpush.msra.mxu0 0.0
        %2346 = vmatpush.msra.mxu0 0.0
        %2347 = vmatpush.msra.mxu0 0.0
        %2348 = vmatpush.msra.mxu0 0.0
        %2349 = vmatpush.msra.mxu0 0.0
        %2350 = vmatpush.msra.mxu0 0.0
        %2351 = vmatpush.msra.mxu0 0.0
        %2352 = vmatpush.msra.mxu0 0.0
        %2353 = vmatpush.msra.mxu0 0.0
        %2354 = vmatpush.msra.mxu0 %v2083
        %2355 = vmatpush.msra.mxu0 %v2082
        %2356 = vmatmul.f32.gmra.mxu0 %v645
        %v2357 = vpop.f32.mrf.mxu0
        %v2358 = vadd.f32 0.0, %v2357
        %2359 = vmatmul.f32.gmra.mxu0 %v648
        %v2360 = vpop.f32.mrf.mxu0
        %v2361 = vadd.f32 0.0, %v2360
        %2362 = vdwg.mxu0
        %2363 = vmatpush.msra.mxu0 0.0
        %2364 = vmatpush.msra.mxu0 0.0
        %2365 = vmatpush.msra.mxu0 0.0
        %2366 = vmatpush.msra.mxu0 0.0
        %2367 = vmatpush.msra.mxu0 0.0
        %2368 = vmatpush.msra.mxu0 0.0
        %2369 = vmatpush.msra.mxu0 0.0
        %2370 = vmatpush.msra.mxu0 0.0
        %2371 = vmatpush.msra.mxu0 0.0
        %2372 = vmatpush.msra.mxu0 0.0
        %2373 = vmatpush.msra.mxu0 0.0
        %2374 = vmatpush.msra.mxu0 0.0
        %2375 = vmatpush.msra.mxu0 0.0
        %2376 = vmatpush.msra.mxu0 0.0
        %2377 = vmatpush.msra.mxu0 %v2085
        %2378 = vmatpush.msra.mxu0 %v2084
        %2379 = vmatmul.f32.gmra.mxu0 %v645
        %v2380 = vpop.f32.mrf.mxu0
        %v2381 = vadd.f32 0.0, %v2380
        %2382 = vmatmul.f32.gmra.mxu0 %v648
        %v2383 = vpop.f32.mrf.mxu0
        %v2384 = vadd.f32 0.0, %v2383
        %2385 = vdwg.mxu0
        %2386 = vmatpush.msra.mxu0 0.0
        %2387 = vmatpush.msra.mxu0 0.0
        %2388 = vmatpush.msra.mxu0 0.0
        %2389 = vmatpush.msra.mxu0 0.0
        %2390 = vmatpush.msra.mxu0 0.0
        %2391 = vmatpush.msra.mxu0 0.0
        %2392 = vmatpush.msra.mxu0 0.0
        %2393 = vmatpush.msra.mxu0 0.0
        %2394 = vmatpush.msra.mxu0 0.0
        %2395 = vmatpush.msra.mxu0 0.0
        %2396 = vmatpush.msra.mxu0 0.0
        %2397 = vmatpush.msra.mxu0 0.0
        %2398 = vmatpush.msra.mxu0 0.0
        %2399 = vmatpush.msra.mxu0 0.0
        %2400 = vmatpush.msra.mxu0 %v2087
        %2401 = vmatpush.msra.mxu0 %v2086
        %2402 = vmatmul.f32.gmra.mxu0 %v697
        %v2403 = vpop.f32.mrf.mxu0
        %v2404 = vadd.f32 0.0, %v2403
        %2405 = vmatmul.f32.gmra.mxu0 %v700
        %v2406 = vpop.f32.mrf.mxu0
        %v2407 = vadd.f32 0.0, %v2406
        %2408 = vdwg.mxu0
        %2409 = vmatpush.msra.mxu0 0.0
        %2410 = vmatpush.msra.mxu0 0.0
        %2411 = vmatpush.msra.mxu0 0.0
        %2412 = vmatpush.msra.mxu0 0.0
        %2413 = vmatpush.msra.mxu0 0.0
        %2414 = vmatpush.msra.mxu0 0.0
        %2415 = vmatpush.msra.mxu0 0.0
        %2416 = vmatpush.msra.mxu0 0.0
        %2417 = vmatpush.msra.mxu0 0.0
        %2418 = vmatpush.msra.mxu0 0.0
        %2419 = vmatpush.msra.mxu0 0.0
        %2420 = vmatpush.msra.mxu0 0.0
        %2421 = vmatpush.msra.mxu0 0.0
        %2422 = vmatpush.msra.mxu0 0.0
        %2423 = vmatpush.msra.mxu0 %v2089
        %2424 = vmatpush.msra.mxu0 %v2088
        %2425 = vmatmul.f32.gmra.mxu0 %v697
        %v2426 = vpop.f32.mrf.mxu0
        %v2427 = vadd.f32 0.0, %v2426
        %2428 = vmatmul.f32.gmra.mxu0 %v700
        %v2429 = vpop.f32.mrf.mxu0
        %v2430 = vadd.f32 0.0, %v2429
        %2431 = vdwg.mxu0
        %2432 = vmatpush.msra.mxu0 0.0
        %2433 = vmatpush.msra.mxu0 0.0
        %2434 = vmatpush.msra.mxu0 0.0
        %2435 = vmatpush.msra.mxu0 0.0
        %2436 = vmatpush.msra.mxu0 0.0
        %2437 = vmatpush.msra.mxu0 0.0
        %2438 = vmatpush.msra.mxu0 0.0
        %2439 = vmatpush.msra.mxu0 0.0
        %2440 = vmatpush.msra.mxu0 0.0
        %2441 = vmatpush.msra.mxu0 0.0
        %2442 = vmatpush.msra.mxu0 0.0
        %2443 = vmatpush.msra.mxu0 0.0
        %2444 = vmatpush.msra.mxu0 0.0
        %2445 = vmatpush.msra.mxu0 0.0
        %2446 = vmatpush.msra.mxu0 %v2091
        %2447 = vmatpush.msra.mxu0 %v2090
        %2448 = vmatmul.f32.gmra.mxu0 %v749
        %v2449 = vpop.f32.mrf.mxu0
        %v2450 = vadd.f32 0.0, %v2449
        %2451 = vmatmul.f32.gmra.mxu0 %v752
        %v2452 = vpop.f32.mrf.mxu0
        %v2453 = vadd.f32 0.0, %v2452
        %2454 = vdwg.mxu0
        %2455 = vmatpush.msra.mxu0 0.0
        %2456 = vmatpush.msra.mxu0 0.0
        %2457 = vmatpush.msra.mxu0 0.0
        %2458 = vmatpush.msra.mxu0 0.0
        %2459 = vmatpush.msra.mxu0 0.0
        %2460 = vmatpush.msra.mxu0 0.0
        %2461 = vmatpush.msra.mxu0 0.0
        %2462 = vmatpush.msra.mxu0 0.0
        %2463 = vmatpush.msra.mxu0 0.0
        %2464 = vmatpush.msra.mxu0 0.0
        %2465 = vmatpush.msra.mxu0 0.0
        %2466 = vmatpush.msra.mxu0 0.0
        %2467 = vmatpush.msra.mxu0 0.0
        %2468 = vmatpush.msra.mxu0 0.0
        %2469 = vmatpush.msra.mxu0 %v2093
        %2470 = vmatpush.msra.mxu0 %v2092
        %2471 = vmatmul.f32.gmra.mxu0 %v749
        %v2472 = vpop.f32.mrf.mxu0
        %v2473 = vadd.f32 0.0, %v2472
        %2474 = vmatmul.f32.gmra.mxu0 %v752
        %v2475 = vpop.f32.mrf.mxu0
        %v2476 = vadd.f32 0.0, %v2475
        %2477 = vdwg.mxu0
        %v2478 = vadd.f32 %v2062, %v2128
        %v2479 = vadd.f32 %v2063, %v2131
        %v2480 = vadd.f32 %v2064, %v2151
        %v2481 = vadd.f32 %v2065, %v2154
        %v2482 = vadd.f32 %v2066, %v2174
        %v2483 = vadd.f32 %v2067, %v2177
        %v2484 = vadd.f32 %v2068, %v2197
        %v2485 = vadd.f32 %v2069, %v2200
        %v2486 = vadd.f32 %v2070, %v2220
        %v2487 = vadd.f32 %v2071, %v2223
        %v2488 = vadd.f32 %v2072, %v2243
        %v2489 = vadd.f32 %v2073, %v2246
        %v2490 = vadd.f32 %v2074, %v2266
        %v2491 = vadd.f32 %v2075, %v2269
        %v2492 = vadd.f32 %v2076, %v2289
        %v2493 = vadd.f32 %v2077, %v2292
        %v2494 = vadd.f32 %v2078, %v2312
        %v2495 = vadd.f32 %v2079, %v2315
        %v2496 = vadd.f32 %v2080, %v2335
        %v2497 = vadd.f32 %v2081, %v2338
        %v2498 = vadd.f32 %v2082, %v2358
        %v2499 = vadd.f32 %v2083, %v2361
        %v2500 = vadd.f32 %v2084, %v2381
        %v2501 = vadd.f32 %v2085, %v2384
        %v2502 = vadd.f32 %v2086, %v2404
        %v2503 = vadd.f32 %v2087, %v2407
        %v2504 = vadd.f32 %v2088, %v2427
        %v2505 = vadd.f32 %v2089, %v2430
        %v2506 = vadd.f32 %v2090, %v2450
        %v2507 = vadd.f32 %v2091, %v2453
        %v2508 = vadd.f32 %v2092, %v2473
        %v2509 = vadd.f32 %v2093, %v2476
        %v2510 = vperm.slane %v2106, 0
        %v2512 = vsel %vm833, %v2478, 0
        %v2515 = vsel %vm833, %v2479, 0
        %v2518 = vsel %vm833, %v2480, 0
        %v2521 = vsel %vm833, %v2481, 0
        %v2524 = vsel %vm833, %v2482, 0
        %v2527 = vsel %vm833, %v2483, 0
        %v2530 = vsel %vm833, %v2484, 0
        %v2533 = vsel %vm833, %v2485, 0
        %v2536 = vsel %vm833, %v2486, 0
        %v2539 = vsel %vm833, %v2487, 0
        %v2542 = vsel %vm833, %v2488, 0
        %v2545 = vsel %vm833, %v2489, 0
        %v2548 = vsel %vm833, %v2490, 0
        %v2551 = vsel %vm833, %v2491, 0
        %v2554 = vsel %vm833, %v2492, 0
        %v2557 = vsel %vm833, %v2493, 0
        %v2560 = vsel %vm833, %v2494, 0
        %v2563 = vsel %vm833, %v2495, 0
        %v2566 = vsel %vm833, %v2496, 0
        %v2569 = vsel %vm833, %v2497, 0
        %v2572 = vsel %vm833, %v2498, 0
        %v2575 = vsel %vm833, %v2499, 0
        %v2578 = vsel %vm833, %v2500, 0
        %v2581 = vsel %vm833, %v2501, 0
        %v2584 = vsel %vm833, %v2502, 0
        %v2587 = vsel %vm833, %v2503, 0
        %v2590 = vsel %vm833, %v2504, 0
        %v2593 = vsel %vm833, %v2505, 0
        %v2596 = vsel %vm833, %v2506, 0
        %v2599 = vsel %vm833, %v2507, 0
        %v2602 = vsel %vm833, %v2508, 0
        %v2605 = vsel %vm833, %v2509, 0
        %2607 = vmatpush.msra.mxu0 0.0
        %2608 = vmatpush.msra.mxu0 0.0
        %2609 = vmatpush.msra.mxu0 0.0
        %2610 = vmatpush.msra.mxu0 0.0
        %2611 = vmatpush.msra.mxu0 0.0
        %2612 = vmatpush.msra.mxu0 0.0
        %2613 = vmatpush.msra.mxu0 0.0
        %2614 = vmatpush.msra.mxu0 0.0
        %2615 = vmatpush.msra.mxu0 0.0
        %2616 = vmatpush.msra.mxu0 0.0
        %2617 = vmatpush.msra.mxu0 0.0
        %2618 = vmatpush.msra.mxu0 0.0
        %2619 = vmatpush.msra.mxu0 %v2097
        %2620 = vmatpush.msra.mxu0 %v2096
        %2621 = vmatpush.msra.mxu0 %v2095
        %2622 = vmatpush.msra.mxu0 %v2094
        %2623 = vmatmul.f32.gmra.mxu0 %v2512
        %v2624 = vpop.f32.mrf.mxu0
        %v2625 = vadd.f32 %v2510, %v2624
        %2626 = vmatmul.f32.gmra.mxu0 %v2515
        %v2627 = vpop.f32.mrf.mxu0
        %v2628 = vadd.f32 %v2510, %v2627
        %2629 = vmatmul.f32.gmra.mxu0 %v2518
        %v2630 = vpop.f32.mrf.mxu0
        %v2631 = vadd.f32 %v2510, %v2630
        %2632 = vmatmul.f32.gmra.mxu0 %v2521
        %v2633 = vpop.f32.mrf.mxu0
        %v2634 = vadd.f32 %v2510, %v2633
        %2635 = vmatmul.f32.gmra.mxu0 %v2524
        %v2636 = vpop.f32.mrf.mxu0
        %v2637 = vadd.f32 %v2510, %v2636
        %2638 = vmatmul.f32.gmra.mxu0 %v2527
        %v2639 = vpop.f32.mrf.mxu0
        %v2640 = vadd.f32 %v2510, %v2639
        %2641 = vmatmul.f32.gmra.mxu0 %v2530
        %v2642 = vpop.f32.mrf.mxu0
        %v2643 = vadd.f32 %v2510, %v2642
        %2644 = vmatmul.f32.gmra.mxu0 %v2533
        %v2645 = vpop.f32.mrf.mxu0
        %v2646 = vadd.f32 %v2510, %v2645
        %2647 = vmatmul.f32.gmra.mxu0 %v2536
        %v2648 = vpop.f32.mrf.mxu0
        %v2649 = vadd.f32 %v2510, %v2648
        %2650 = vmatmul.f32.gmra.mxu0 %v2539
        %v2651 = vpop.f32.mrf.mxu0
        %v2652 = vadd.f32 %v2510, %v2651
        %2653 = vmatmul.f32.gmra.mxu0 %v2542
        %v2654 = vpop.f32.mrf.mxu0
        %v2655 = vadd.f32 %v2510, %v2654
        %2656 = vmatmul.f32.gmra.mxu0 %v2545
        %v2657 = vpop.f32.mrf.mxu0
        %v2658 = vadd.f32 %v2510, %v2657
        %2659 = vmatmul.f32.gmra.mxu0 %v2548
        %v2660 = vpop.f32.mrf.mxu0
        %v2661 = vadd.f32 %v2510, %v2660
        %2662 = vmatmul.f32.gmra.mxu0 %v2551
        %v2663 = vpop.f32.mrf.mxu0
        %v2664 = vadd.f32 %v2510, %v2663
        %2665 = vmatmul.f32.gmra.mxu0 %v2554
        %v2666 = vpop.f32.mrf.mxu0
        %v2667 = vadd.f32 %v2510, %v2666
        %2668 = vmatmul.f32.gmra.mxu0 %v2557
        %v2669 = vpop.f32.mrf.mxu0
        %v2670 = vadd.f32 %v2510, %v2669
        %2671 = vmatmul.f32.gmra.mxu0 %v2560
        %v2672 = vpop.f32.mrf.mxu0
        %v2673 = vadd.f32 %v2510, %v2672
        %2674 = vmatmul.f32.gmra.mxu0 %v2563
        %v2675 = vpop.f32.mrf.mxu0
        %v2676 = vadd.f32 %v2510, %v2675
        %2677 = vmatmul.f32.gmra.mxu0 %v2566
        %v2678 = vpop.f32.mrf.mxu0
        %v2679 = vadd.f32 %v2510, %v2678
        %2680 = vmatmul.f32.gmra.mxu0 %v2569
        %v2681 = vpop.f32.mrf.mxu0
        %v2682 = vadd.f32 %v2510, %v2681
        %2683 = vmatmul.f32.gmra.mxu0 %v2572
        %v2684 = vpop.f32.mrf.mxu0
        %v2685 = vadd.f32 %v2510, %v2684
        %2686 = vmatmul.f32.gmra.mxu0 %v2575
        %v2687 = vpop.f32.mrf.mxu0
        %v2688 = vadd.f32 %v2510, %v2687
        %2689 = vmatmul.f32.gmra.mxu0 %v2578
        %v2690 = vpop.f32.mrf.mxu0
        %v2691 = vadd.f32 %v2510, %v2690
        %2692 = vmatmul.f32.gmra.mxu0 %v2581
        %v2693 = vpop.f32.mrf.mxu0
        %v2694 = vadd.f32 %v2510, %v2693
        %2695 = vmatmul.f32.gmra.mxu0 %v2584
        %v2696 = vpop.f32.mrf.mxu0
        %v2697 = vadd.f32 %v2510, %v2696
        %2698 = vmatmul.f32.gmra.mxu0 %v2587
        %v2699 = vpop.f32.mrf.mxu0
        %v2700 = vadd.f32 %v2510, %v2699
        %2701 = vmatmul.f32.gmra.mxu0 %v2590
        %v2702 = vpop.f32.mrf.mxu0
        %v2703 = vadd.f32 %v2510, %v2702
        %2704 = vmatmul.f32.gmra.mxu0 %v2593
        %v2705 = vpop.f32.mrf.mxu0
        %v2706 = vadd.f32 %v2510, %v2705
        %2707 = vmatmul.f32.gmra.mxu0 %v2596
        %v2708 = vpop.f32.mrf.mxu0
        %v2709 = vadd.f32 %v2510, %v2708
        %2710 = vmatmul.f32.gmra.mxu0 %v2599
        %v2711 = vpop.f32.mrf.mxu0
        %v2712 = vadd.f32 %v2510, %v2711
        %2713 = vmatmul.f32.gmra.mxu0 %v2602
        %v2714 = vpop.f32.mrf.mxu0
        %v2715 = vadd.f32 %v2510, %v2714
        %2716 = vmatmul.f32.gmra.mxu0 %v2605
        %v2717 = vpop.f32.mrf.mxu0
        %v2718 = vadd.f32 %v2510, %v2717
        %2719 = vdwg.mxu0
        %v2720 = vmax.f32 %v2625, 0.0
        %v2721 = vmax.f32 %v2628, 0.0
        %v2722 = vmax.f32 %v2631, 0.0
        %v2723 = vmax.f32 %v2634, 0.0
        %v2724 = vmax.f32 %v2637, 0.0
        %v2725 = vmax.f32 %v2640, 0.0
        %v2726 = vmax.f32 %v2643, 0.0
        %v2727 = vmax.f32 %v2646, 0.0
        %v2728 = vmax.f32 %v2649, 0.0
        %v2729 = vmax.f32 %v2652, 0.0
        %v2730 = vmax.f32 %v2655, 0.0
        %v2731 = vmax.f32 %v2658, 0.0
        %v2732 = vmax.f32 %v2661, 0.0
        %v2733 = vmax.f32 %v2664, 0.0
        %v2734 = vmax.f32 %v2667, 0.0
        %v2735 = vmax.f32 %v2670, 0.0
        %v2736 = vmax.f32 %v2673, 0.0
        %v2737 = vmax.f32 %v2676, 0.0
        %v2738 = vmax.f32 %v2679, 0.0
        %v2739 = vmax.f32 %v2682, 0.0
        %v2740 = vmax.f32 %v2685, 0.0
        %v2741 = vmax.f32 %v2688, 0.0
        %v2742 = vmax.f32 %v2691, 0.0
        %v2743 = vmax.f32 %v2694, 0.0
        %v2744 = vmax.f32 %v2697, 0.0
        %v2745 = vmax.f32 %v2700, 0.0
        %v2746 = vmax.f32 %v2703, 0.0
        %v2747 = vmax.f32 %v2706, 0.0
        %v2748 = vmax.f32 %v2709, 0.0
        %v2749 = vmax.f32 %v2712, 0.0
        %v2750 = vmax.f32 %v2715, 0.0
        %v2751 = vmax.f32 %v2718, 0.0
        %v2752 = vperm.slane %v2107, 0
        %v2754 = vsel %vm833, %v2720, 0
        %v2757 = vsel %vm833, %v2721, 0
        %v2760 = vsel %vm833, %v2722, 0
        %v2763 = vsel %vm833, %v2723, 0
        %v2766 = vsel %vm833, %v2724, 0
        %v2769 = vsel %vm833, %v2725, 0
        %v2772 = vsel %vm833, %v2726, 0
        %v2775 = vsel %vm833, %v2727, 0
        %v2778 = vsel %vm833, %v2728, 0
        %v2781 = vsel %vm833, %v2729, 0
        %v2784 = vsel %vm833, %v2730, 0
        %v2787 = vsel %vm833, %v2731, 0
        %v2790 = vsel %vm833, %v2732, 0
        %v2793 = vsel %vm833, %v2733, 0
        %v2796 = vsel %vm833, %v2734, 0
        %v2799 = vsel %vm833, %v2735, 0
        %v2802 = vsel %vm833, %v2736, 0
        %v2805 = vsel %vm833, %v2737, 0
        %v2808 = vsel %vm833, %v2738, 0
        %v2811 = vsel %vm833, %v2739, 0
        %v2814 = vsel %vm833, %v2740, 0
        %v2817 = vsel %vm833, %v2741, 0
        %v2820 = vsel %vm833, %v2742, 0
        %v2823 = vsel %vm833, %v2743, 0
        %v2826 = vsel %vm833, %v2744, 0
        %v2829 = vsel %vm833, %v2745, 0
        %v2832 = vsel %vm833, %v2746, 0
        %v2835 = vsel %vm833, %v2747, 0
        %v2838 = vsel %vm833, %v2748, 0
        %v2841 = vsel %vm833, %v2749, 0
        %v2844 = vsel %vm833, %v2750, 0
        %v2847 = vsel %vm833, %v2751, 0
        %2849 = vmatpush.msra.mxu0 0.0
        %2850 = vmatpush.msra.mxu0 0.0
        %2851 = vmatpush.msra.mxu0 0.0
        %2852 = vmatpush.msra.mxu0 0.0
        %2853 = vmatpush.msra.mxu0 0.0
        %2854 = vmatpush.msra.mxu0 0.0
        %2855 = vmatpush.msra.mxu0 0.0
        %2856 = vmatpush.msra.mxu0 0.0
        %2857 = vmatpush.msra.mxu0 0.0
        %2858 = vmatpush.msra.mxu0 0.0
        %2859 = vmatpush.msra.mxu0 0.0
        %2860 = vmatpush.msra.mxu0 0.0
        %2861 = vmatpush.msra.mxu0 %v2101
        %2862 = vmatpush.msra.mxu0 %v2100
        %2863 = vmatpush.msra.mxu0 %v2099
        %2864 = vmatpush.msra.mxu0 %v2098
        %2865 = vmatmul.f32.gmra.mxu0 %v2754
        %v2866 = vpop.f32.mrf.mxu0
        %v2867 = vadd.f32 %v2752, %v2866
        %2868 = vmatmul.f32.gmra.mxu0 %v2757
        %v2869 = vpop.f32.mrf.mxu0
        %v2870 = vadd.f32 %v2752, %v2869
        %2871 = vmatmul.f32.gmra.mxu0 %v2760
        %v2872 = vpop.f32.mrf.mxu0
        %v2873 = vadd.f32 %v2752, %v2872
        %2874 = vmatmul.f32.gmra.mxu0 %v2763
        %v2875 = vpop.f32.mrf.mxu0
        %v2876 = vadd.f32 %v2752, %v2875
        %2877 = vmatmul.f32.gmra.mxu0 %v2766
        %v2878 = vpop.f32.mrf.mxu0
        %v2879 = vadd.f32 %v2752, %v2878
        %2880 = vmatmul.f32.gmra.mxu0 %v2769
        %v2881 = vpop.f32.mrf.mxu0
        %v2882 = vadd.f32 %v2752, %v2881
        %2883 = vmatmul.f32.gmra.mxu0 %v2772
        %v2884 = vpop.f32.mrf.mxu0
        %v2885 = vadd.f32 %v2752, %v2884
        %2886 = vmatmul.f32.gmra.mxu0 %v2775
        %v2887 = vpop.f32.mrf.mxu0
        %v2888 = vadd.f32 %v2752, %v2887
        %2889 = vmatmul.f32.gmra.mxu0 %v2778
        %v2890 = vpop.f32.mrf.mxu0
        %v2891 = vadd.f32 %v2752, %v2890
        %2892 = vmatmul.f32.gmra.mxu0 %v2781
        %v2893 = vpop.f32.mrf.mxu0
        %v2894 = vadd.f32 %v2752, %v2893
        %2895 = vmatmul.f32.gmra.mxu0 %v2784
        %v2896 = vpop.f32.mrf.mxu0
        %v2897 = vadd.f32 %v2752, %v2896
        %2898 = vmatmul.f32.gmra.mxu0 %v2787
        %v2899 = vpop.f32.mrf.mxu0
        %v2900 = vadd.f32 %v2752, %v2899
        %2901 = vmatmul.f32.gmra.mxu0 %v2790
        %v2902 = vpop.f32.mrf.mxu0
        %v2903 = vadd.f32 %v2752, %v2902
        %2904 = vmatmul.f32.gmra.mxu0 %v2793
        %v2905 = vpop.f32.mrf.mxu0
        %v2906 = vadd.f32 %v2752, %v2905
        %2907 = vmatmul.f32.gmra.mxu0 %v2796
        %v2908 = vpop.f32.mrf.mxu0
        %v2909 = vadd.f32 %v2752, %v2908
        %2910 = vmatmul.f32.gmra.mxu0 %v2799
        %v2911 = vpop.f32.mrf.mxu0
        %v2912 = vadd.f32 %v2752, %v2911
        %2913 = vmatmul.f32.gmra.mxu0 %v2802
        %v2914 = vpop.f32.mrf.mxu0
        %v2915 = vadd.f32 %v2752, %v2914
        %2916 = vmatmul.f32.gmra.mxu0 %v2805
        %v2917 = vpop.f32.mrf.mxu0
        %v2918 = vadd.f32 %v2752, %v2917
        %2919 = vmatmul.f32.gmra.mxu0 %v2808
        %v2920 = vpop.f32.mrf.mxu0
        %v2921 = vadd.f32 %v2752, %v2920
        %2922 = vmatmul.f32.gmra.mxu0 %v2811
        %v2923 = vpop.f32.mrf.mxu0
        %v2924 = vadd.f32 %v2752, %v2923
        %2925 = vmatmul.f32.gmra.mxu0 %v2814
        %v2926 = vpop.f32.mrf.mxu0
        %v2927 = vadd.f32 %v2752, %v2926
        %2928 = vmatmul.f32.gmra.mxu0 %v2817
        %v2929 = vpop.f32.mrf.mxu0
        %v2930 = vadd.f32 %v2752, %v2929
        %2931 = vmatmul.f32.gmra.mxu0 %v2820
        %v2932 = vpop.f32.mrf.mxu0
        %v2933 = vadd.f32 %v2752, %v2932
        %2934 = vmatmul.f32.gmra.mxu0 %v2823
        %v2935 = vpop.f32.mrf.mxu0
        %v2936 = vadd.f32 %v2752, %v2935
        %2937 = vmatmul.f32.gmra.mxu0 %v2826
        %v2938 = vpop.f32.mrf.mxu0
        %v2939 = vadd.f32 %v2752, %v2938
        %2940 = vmatmul.f32.gmra.mxu0 %v2829
        %v2941 = vpop.f32.mrf.mxu0
        %v2942 = vadd.f32 %v2752, %v2941
        %2943 = vmatmul.f32.gmra.mxu0 %v2832
        %v2944 = vpop.f32.mrf.mxu0
        %v2945 = vadd.f32 %v2752, %v2944
        %2946 = vmatmul.f32.gmra.mxu0 %v2835
        %v2947 = vpop.f32.mrf.mxu0
        %v2948 = vadd.f32 %v2752, %v2947
        %2949 = vmatmul.f32.gmra.mxu0 %v2838
        %v2950 = vpop.f32.mrf.mxu0
        %v2951 = vadd.f32 %v2752, %v2950
        %2952 = vmatmul.f32.gmra.mxu0 %v2841
        %v2953 = vpop.f32.mrf.mxu0
        %v2954 = vadd.f32 %v2752, %v2953
        %2955 = vmatmul.f32.gmra.mxu0 %v2844
        %v2956 = vpop.f32.mrf.mxu0
        %v2957 = vadd.f32 %v2752, %v2956
        %2958 = vmatmul.f32.gmra.mxu0 %v2847
        %v2959 = vpop.f32.mrf.mxu0
        %v2960 = vadd.f32 %v2752, %v2959
        %2961 = vdwg.mxu0
        %v2962 = vmax.f32 %v2867, 0.0
        %v2963 = vmax.f32 %v2870, 0.0
        %v2964 = vmax.f32 %v2873, 0.0
        %v2965 = vmax.f32 %v2876, 0.0
        %v2966 = vmax.f32 %v2879, 0.0
        %v2967 = vmax.f32 %v2882, 0.0
        %v2968 = vmax.f32 %v2885, 0.0
        %v2969 = vmax.f32 %v2888, 0.0
        %v2970 = vmax.f32 %v2891, 0.0
        %v2971 = vmax.f32 %v2894, 0.0
        %v2972 = vmax.f32 %v2897, 0.0
        %v2973 = vmax.f32 %v2900, 0.0
        %v2974 = vmax.f32 %v2903, 0.0
        %v2975 = vmax.f32 %v2906, 0.0
        %v2976 = vmax.f32 %v2909, 0.0
        %v2977 = vmax.f32 %v2912, 0.0
        %v2978 = vmax.f32 %v2915, 0.0
        %v2979 = vmax.f32 %v2918, 0.0
        %v2980 = vmax.f32 %v2921, 0.0
        %v2981 = vmax.f32 %v2924, 0.0
        %v2982 = vmax.f32 %v2927, 0.0
        %v2983 = vmax.f32 %v2930, 0.0
        %v2984 = vmax.f32 %v2933, 0.0
        %v2985 = vmax.f32 %v2936, 0.0
        %v2986 = vmax.f32 %v2939, 0.0
        %v2987 = vmax.f32 %v2942, 0.0
        %v2988 = vmax.f32 %v2945, 0.0
        %v2989 = vmax.f32 %v2948, 0.0
        %v2990 = vmax.f32 %v2951, 0.0
        %v2991 = vmax.f32 %v2954, 0.0
        %v2992 = vmax.f32 %v2957, 0.0
        %v2993 = vmax.f32 %v2960, 0.0
        %v2994 = vsel %vm833, %v2962, 0.0
        %2995 = vadd.xlane.f32.xlu0 %v2994
        %v2996 = vpop.xlane.xlu0 %2995
        %v2997 = vsel %vm833, %v2963, 0.0
        %2998 = vadd.xlane.f32.xlu0 %v2997
        %v2999 = vpop.xlane.xlu0 %2998
        %v3000 = vsel %vm833, %v2964, 0.0
        %3001 = vadd.xlane.f32.xlu0 %v3000
        %v3002 = vpop.xlane.xlu0 %3001
        %v3003 = vsel %vm833, %v2965, 0.0
        %3004 = vadd.xlane.f32.xlu0 %v3003
        %v3005 = vpop.xlane.xlu0 %3004
        %v3006 = vsel %vm833, %v2966, 0.0
        %3007 = vadd.xlane.f32.xlu0 %v3006
        %v3008 = vpop.xlane.xlu0 %3007
        %v3009 = vsel %vm833, %v2967, 0.0
        %3010 = vadd.xlane.f32.xlu0 %v3009
        %v3011 = vpop.xlane.xlu0 %3010
        %v3012 = vsel %vm833, %v2968, 0.0
        %3013 = vadd.xlane.f32.xlu0 %v3012
        %v3014 = vpop.xlane.xlu0 %3013
        %v3015 = vsel %vm833, %v2969, 0.0
        %3016 = vadd.xlane.f32.xlu0 %v3015
        %v3017 = vpop.xlane.xlu0 %3016
        %v3018 = vsel %vm833, %v2970, 0.0
        %3019 = vadd.xlane.f32.xlu0 %v3018
        %v3020 = vpop.xlane.xlu0 %3019
        %v3021 = vsel %vm833, %v2971, 0.0
        %3022 = vadd.xlane.f32.xlu0 %v3021
        %v3023 = vpop.xlane.xlu0 %3022
        %v3024 = vsel %vm833, %v2972, 0.0
        %3025 = vadd.xlane.f32.xlu0 %v3024
        %v3026 = vpop.xlane.xlu0 %3025
        %v3027 = vsel %vm833, %v2973, 0.0
        %3028 = vadd.xlane.f32.xlu0 %v3027
        %v3029 = vpop.xlane.xlu0 %3028
        %v3030 = vsel %vm833, %v2974, 0.0
        %3031 = vadd.xlane.f32.xlu0 %v3030
        %v3032 = vpop.xlane.xlu0 %3031
        %v3033 = vsel %vm833, %v2975, 0.0
        %3034 = vadd.xlane.f32.xlu0 %v3033
        %v3035 = vpop.xlane.xlu0 %3034
        %v3036 = vsel %vm833, %v2976, 0.0
        %3037 = vadd.xlane.f32.xlu0 %v3036
        %v3038 = vpop.xlane.xlu0 %3037
        %v3039 = vsel %vm833, %v2977, 0.0
        %3040 = vadd.xlane.f32.xlu0 %v3039
        %v3041 = vpop.xlane.xlu0 %3040
        %v3042 = vsel %vm833, %v2978, 0.0
        %3043 = vadd.xlane.f32.xlu0 %v3042
        %v3044 = vpop.xlane.xlu0 %3043
        %v3045 = vsel %vm833, %v2979, 0.0
        %3046 = vadd.xlane.f32.xlu0 %v3045
        %v3047 = vpop.xlane.xlu0 %3046
        %v3048 = vsel %vm833, %v2980, 0.0
        %3049 = vadd.xlane.f32.xlu0 %v3048
        %v3050 = vpop.xlane.xlu0 %3049
        %v3051 = vsel %vm833, %v2981, 0.0
        %3052 = vadd.xlane.f32.xlu0 %v3051
        %v3053 = vpop.xlane.xlu0 %3052
        %v3054 = vsel %vm833, %v2982, 0.0
        %3055 = vadd.xlane.f32.xlu0 %v3054
        %v3056 = vpop.xlane.xlu0 %3055
        %v3057 = vsel %vm833, %v2983, 0.0
        %3058 = vadd.xlane.f32.xlu0 %v3057
        %v3059 = vpop.xlane.xlu0 %3058
        %v3060 = vsel %vm833, %v2984, 0.0
        %3061 = vadd.xlane.f32.xlu0 %v3060
        %v3062 = vpop.xlane.xlu0 %3061
        %v3063 = vsel %vm833, %v2985, 0.0
        %3064 = vadd.xlane.f32.xlu0 %v3063
        %v3065 = vpop.xlane.xlu0 %3064
        %v3066 = vsel %vm833, %v2986, 0.0
        %3067 = vadd.xlane.f32.xlu0 %v3066
        %v3068 = vpop.xlane.xlu0 %3067
        %v3069 = vsel %vm833, %v2987, 0.0
        %3070 = vadd.xlane.f32.xlu0 %v3069
        %v3071 = vpop.xlane.xlu0 %3070
        %v3072 = vsel %vm833, %v2988, 0.0
        %3073 = vadd.xlane.f32.xlu0 %v3072
        %v3074 = vpop.xlane.xlu0 %3073
        %v3075 = vsel %vm833, %v2989, 0.0
        %3076 = vadd.xlane.f32.xlu0 %v3075
        %v3077 = vpop.xlane.xlu0 %3076
        %v3078 = vsel %vm833, %v2990, 0.0
        %3079 = vadd.xlane.f32.xlu0 %v3078
        %v3080 = vpop.xlane.xlu0 %3079
        %v3081 = vsel %vm833, %v2991, 0.0
        %3082 = vadd.xlane.f32.xlu0 %v3081
        %v3083 = vpop.xlane.xlu0 %3082
        %v3084 = vsel %vm833, %v2992, 0.0
        %3085 = vadd.xlane.f32.xlu0 %v3084
        %v3086 = vpop.xlane.xlu0 %3085
        %v3087 = vsel %vm833, %v2993, 0.0
        %3088 = vadd.xlane.f32.xlu0 %v3087
        %v3089 = vpop.xlane.xlu0 %3088
        %v3090 = vmul.f32 %v2996, %v1419
        %v3091 = vmul.f32 %v2999, %v1419
        %v3092 = vmul.f32 %v3002, %v1419
        %v3093 = vmul.f32 %v3005, %v1419
        %v3094 = vmul.f32 %v3008, %v1419
        %v3095 = vmul.f32 %v3011, %v1419
        %v3096 = vmul.f32 %v3014, %v1419
        %v3097 = vmul.f32 %v3017, %v1419
        %v3098 = vmul.f32 %v3020, %v1419
        %v3099 = vmul.f32 %v3023, %v1419
        %v3100 = vmul.f32 %v3026, %v1419
        %v3101 = vmul.f32 %v3029, %v1419
        %v3102 = vmul.f32 %v3032, %v1419
        %v3103 = vmul.f32 %v3035, %v1419
        %v3104 = vmul.f32 %v3038, %v1419
        %v3105 = vmul.f32 %v3041, %v1419
        %v3106 = vmul.f32 %v3044, %v1419
        %v3107 = vmul.f32 %v3047, %v1419
        %v3108 = vmul.f32 %v3050, %v1419
        %v3109 = vmul.f32 %v3053, %v1419
        %v3110 = vmul.f32 %v3056, %v1419
        %v3111 = vmul.f32 %v3059, %v1419
        %v3112 = vmul.f32 %v3062, %v1419
        %v3113 = vmul.f32 %v3065, %v1419
        %v3114 = vmul.f32 %v3068, %v1419
        %v3115 = vmul.f32 %v3071, %v1419
        %v3116 = vmul.f32 %v3074, %v1419
        %v3117 = vmul.f32 %v3077, %v1419
        %v3118 = vmul.f32 %v3080, %v1419
        %v3119 = vmul.f32 %v3083, %v1419
        %v3120 = vmul.f32 %v3086, %v1419
        %v3121 = vmul.f32 %v3089, %v1419
        %v3122 = vsub.f32 %v2962, %v3090
        %v3123 = vsub.f32 %v2963, %v3091
        %v3124 = vsub.f32 %v2964, %v3092
        %v3125 = vsub.f32 %v2965, %v3093
        %v3126 = vsub.f32 %v2966, %v3094
        %v3127 = vsub.f32 %v2967, %v3095
        %v3128 = vsub.f32 %v2968, %v3096
        %v3129 = vsub.f32 %v2969, %v3097
        %v3130 = vsub.f32 %v2970, %v3098
        %v3131 = vsub.f32 %v2971, %v3099
        %v3132 = vsub.f32 %v2972, %v3100
        %v3133 = vsub.f32 %v2973, %v3101
        %v3134 = vsub.f32 %v2974, %v3102
        %v3135 = vsub.f32 %v2975, %v3103
        %v3136 = vsub.f32 %v2976, %v3104
        %v3137 = vsub.f32 %v2977, %v3105
        %v3138 = vsub.f32 %v2978, %v3106
        %v3139 = vsub.f32 %v2979, %v3107
        %v3140 = vsub.f32 %v2980, %v3108
        %v3141 = vsub.f32 %v2981, %v3109
        %v3142 = vsub.f32 %v2982, %v3110
        %v3143 = vsub.f32 %v2983, %v3111
        %v3144 = vsub.f32 %v2984, %v3112
        %v3145 = vsub.f32 %v2985, %v3113
        %v3146 = vsub.f32 %v2986, %v3114
        %v3147 = vsub.f32 %v2987, %v3115
        %v3148 = vsub.f32 %v2988, %v3116
        %v3149 = vsub.f32 %v2989, %v3117
        %v3150 = vsub.f32 %v2990, %v3118
        %v3151 = vsub.f32 %v2991, %v3119
        %v3152 = vsub.f32 %v2992, %v3120
        %v3153 = vsub.f32 %v2993, %v3121
        %v3154 = vmul.f32 %v3122, %v3122
        %v3155 = vmul.f32 %v3123, %v3123
        %v3156 = vmul.f32 %v3124, %v3124
        %v3157 = vmul.f32 %v3125, %v3125
        %v3158 = vmul.f32 %v3126, %v3126
        %v3159 = vmul.f32 %v3127, %v3127
        %v3160 = vmul.f32 %v3128, %v3128
        %v3161 = vmul.f32 %v3129, %v3129
        %v3162 = vmul.f32 %v3130, %v3130
        %v3163 = vmul.f32 %v3131, %v3131
        %v3164 = vmul.f32 %v3132, %v3132
        %v3165 = vmul.f32 %v3133, %v3133
        %v3166 = vmul.f32 %v3134, %v3134
        %v3167 = vmul.f32 %v3135, %v3135
        %v3168 = vmul.f32 %v3136, %v3136
        %v3169 = vmul.f32 %v3137, %v3137
        %v3170 = vmul.f32 %v3138, %v3138
        %v3171 = vmul.f32 %v3139, %v3139
        %v3172 = vmul.f32 %v3140, %v3140
        %v3173 = vmul.f32 %v3141, %v3141
        %v3174 = vmul.f32 %v3142, %v3142
        %v3175 = vmul.f32 %v3143, %v3143
        %v3176 = vmul.f32 %v3144, %v3144
        %v3177 = vmul.f32 %v3145, %v3145
        %v3178 = vmul.f32 %v3146, %v3146
        %v3179 = vmul.f32 %v3147, %v3147
        %v3180 = vmul.f32 %v3148, %v3148
        %v3181 = vmul.f32 %v3149, %v3149
        %v3182 = vmul.f32 %v3150, %v3150
        %v3183 = vmul.f32 %v3151, %v3151
        %v3184 = vmul.f32 %v3152, %v3152
        %v3185 = vmul.f32 %v3153, %v3153
        %v3186 = vsel %vm833, %v3154, 0.0
        %3187 = vadd.xlane.f32.xlu0 %v3186
        %v3188 = vpop.xlane.xlu0 %3187
        %v3189 = vsel %vm833, %v3155, 0.0
        %3190 = vadd.xlane.f32.xlu0 %v3189
        %v3191 = vpop.xlane.xlu0 %3190
        %v3192 = vsel %vm833, %v3156, 0.0
        %3193 = vadd.xlane.f32.xlu0 %v3192
        %v3194 = vpop.xlane.xlu0 %3193
        %v3195 = vsel %vm833, %v3157, 0.0
        %3196 = vadd.xlane.f32.xlu0 %v3195
        %v3197 = vpop.xlane.xlu0 %3196
        %v3198 = vsel %vm833, %v3158, 0.0
        %3199 = vadd.xlane.f32.xlu0 %v3198
        %v3200 = vpop.xlane.xlu0 %3199
        %v3201 = vsel %vm833, %v3159, 0.0
        %3202 = vadd.xlane.f32.xlu0 %v3201
        %v3203 = vpop.xlane.xlu0 %3202
        %v3204 = vsel %vm833, %v3160, 0.0
        %3205 = vadd.xlane.f32.xlu0 %v3204
        %v3206 = vpop.xlane.xlu0 %3205
        %v3207 = vsel %vm833, %v3161, 0.0
        %3208 = vadd.xlane.f32.xlu0 %v3207
        %v3209 = vpop.xlane.xlu0 %3208
        %v3210 = vsel %vm833, %v3162, 0.0
        %3211 = vadd.xlane.f32.xlu0 %v3210
        %v3212 = vpop.xlane.xlu0 %3211
        %v3213 = vsel %vm833, %v3163, 0.0
        %3214 = vadd.xlane.f32.xlu0 %v3213
        %v3215 = vpop.xlane.xlu0 %3214
        %v3216 = vsel %vm833, %v3164, 0.0
        %3217 = vadd.xlane.f32.xlu0 %v3216
        %v3218 = vpop.xlane.xlu0 %3217
        %v3219 = vsel %vm833, %v3165, 0.0
        %3220 = vadd.xlane.f32.xlu0 %v3219
        %v3221 = vpop.xlane.xlu0 %3220
        %v3222 = vsel %vm833, %v3166, 0.0
        %3223 = vadd.xlane.f32.xlu0 %v3222
        %v3224 = vpop.xlane.xlu0 %3223
        %v3225 = vsel %vm833, %v3167, 0.0
        %3226 = vadd.xlane.f32.xlu0 %v3225
        %v3227 = vpop.xlane.xlu0 %3226
        %v3228 = vsel %vm833, %v3168, 0.0
        %3229 = vadd.xlane.f32.xlu0 %v3228
        %v3230 = vpop.xlane.xlu0 %3229
        %v3231 = vsel %vm833, %v3169, 0.0
        %3232 = vadd.xlane.f32.xlu0 %v3231
        %v3233 = vpop.xlane.xlu0 %3232
        %v3234 = vsel %vm833, %v3170, 0.0
        %3235 = vadd.xlane.f32.xlu0 %v3234
        %v3236 = vpop.xlane.xlu0 %3235
        %v3237 = vsel %vm833, %v3171, 0.0
        %3238 = vadd.xlane.f32.xlu0 %v3237
        %v3239 = vpop.xlane.xlu0 %3238
        %v3240 = vsel %vm833, %v3172, 0.0
        %3241 = vadd.xlane.f32.xlu0 %v3240
        %v3242 = vpop.xlane.xlu0 %3241
        %v3243 = vsel %vm833, %v3173, 0.0
        %3244 = vadd.xlane.f32.xlu0 %v3243
        %v3245 = vpop.xlane.xlu0 %3244
        %v3246 = vsel %vm833, %v3174, 0.0
        %3247 = vadd.xlane.f32.xlu0 %v3246
        %v3248 = vpop.xlane.xlu0 %3247
        %v3249 = vsel %vm833, %v3175, 0.0
        %3250 = vadd.xlane.f32.xlu0 %v3249
        %v3251 = vpop.xlane.xlu0 %3250
        %v3252 = vsel %vm833, %v3176, 0.0
        %3253 = vadd.xlane.f32.xlu0 %v3252
        %v3254 = vpop.xlane.xlu0 %3253
        %v3255 = vsel %vm833, %v3177, 0.0
        %3256 = vadd.xlane.f32.xlu0 %v3255
        %v3257 = vpop.xlane.xlu0 %3256
        %v3258 = vsel %vm833, %v3178, 0.0
        %3259 = vadd.xlane.f32.xlu0 %v3258
        %v3260 = vpop.xlane.xlu0 %3259
        %v3261 = vsel %vm833, %v3179, 0.0
        %3262 = vadd.xlane.f32.xlu0 %v3261
        %v3263 = vpop.xlane.xlu0 %3262
        %v3264 = vsel %vm833, %v3180, 0.0
        %3265 = vadd.xlane.f32.xlu0 %v3264
        %v3266 = vpop.xlane.xlu0 %3265
        %v3267 = vsel %vm833, %v3181, 0.0
        %3268 = vadd.xlane.f32.xlu0 %v3267
        %v3269 = vpop.xlane.xlu0 %3268
        %v3270 = vsel %vm833, %v3182, 0.0
        %3271 = vadd.xlane.f32.xlu0 %v3270
        %v3272 = vpop.xlane.xlu0 %3271
        %v3273 = vsel %vm833, %v3183, 0.0
        %3274 = vadd.xlane.f32.xlu0 %v3273
        %v3275 = vpop.xlane.xlu0 %3274
        %v3276 = vsel %vm833, %v3184, 0.0
        %3277 = vadd.xlane.f32.xlu0 %v3276
        %v3278 = vpop.xlane.xlu0 %3277
        %v3279 = vsel %vm833, %v3185, 0.0
        %3280 = vadd.xlane.f32.xlu0 %v3279
        %v3281 = vpop.xlane.xlu0 %3280
        %v3282 = vmul.f32 %v3188, %v1419
        %v3283 = vmul.f32 %v3191, %v1419
        %v3284 = vmul.f32 %v3194, %v1419
        %v3285 = vmul.f32 %v3197, %v1419
        %v3286 = vmul.f32 %v3200, %v1419
        %v3287 = vmul.f32 %v3203, %v1419
        %v3288 = vmul.f32 %v3206, %v1419
        %v3289 = vmul.f32 %v3209, %v1419
        %v3290 = vmul.f32 %v3212, %v1419
        %v3291 = vmul.f32 %v3215, %v1419
        %v3292 = vmul.f32 %v3218, %v1419
        %v3293 = vmul.f32 %v3221, %v1419
        %v3294 = vmul.f32 %v3224, %v1419
        %v3295 = vmul.f32 %v3227, %v1419
        %v3296 = vmul.f32 %v3230, %v1419
        %v3297 = vmul.f32 %v3233, %v1419
        %v3298 = vmul.f32 %v3236, %v1419
        %v3299 = vmul.f32 %v3239, %v1419
        %v3300 = vmul.f32 %v3242, %v1419
        %v3301 = vmul.f32 %v3245, %v1419
        %v3302 = vmul.f32 %v3248, %v1419
        %v3303 = vmul.f32 %v3251, %v1419
        %v3304 = vmul.f32 %v3254, %v1419
        %v3305 = vmul.f32 %v3257, %v1419
        %v3306 = vmul.f32 %v3260, %v1419
        %v3307 = vmul.f32 %v3263, %v1419
        %v3308 = vmul.f32 %v3266, %v1419
        %v3309 = vmul.f32 %v3269, %v1419
        %v3310 = vmul.f32 %v3272, %v1419
        %v3311 = vmul.f32 %v3275, %v1419
        %v3312 = vmul.f32 %v3278, %v1419
        %v3313 = vmul.f32 %v3281, %v1419
        %v3314 = vadd.f32 %v3282, 1e-05
        %v3315 = vadd.f32 %v3283, 1e-05
        %v3316 = vadd.f32 %v3284, 1e-05
        %v3317 = vadd.f32 %v3285, 1e-05
        %v3318 = vadd.f32 %v3286, 1e-05
        %v3319 = vadd.f32 %v3287, 1e-05
        %v3320 = vadd.f32 %v3288, 1e-05
        %v3321 = vadd.f32 %v3289, 1e-05
        %v3322 = vadd.f32 %v3290, 1e-05
        %v3323 = vadd.f32 %v3291, 1e-05
        %v3324 = vadd.f32 %v3292, 1e-05
        %v3325 = vadd.f32 %v3293, 1e-05
        %v3326 = vadd.f32 %v3294, 1e-05
        %v3327 = vadd.f32 %v3295, 1e-05
        %v3328 = vadd.f32 %v3296, 1e-05
        %v3329 = vadd.f32 %v3297, 1e-05
        %v3330 = vadd.f32 %v3298, 1e-05
        %v3331 = vadd.f32 %v3299, 1e-05
        %v3332 = vadd.f32 %v3300, 1e-05
        %v3333 = vadd.f32 %v3301, 1e-05
        %v3334 = vadd.f32 %v3302, 1e-05
        %v3335 = vadd.f32 %v3303, 1e-05
        %v3336 = vadd.f32 %v3304, 1e-05
        %v3337 = vadd.f32 %v3305, 1e-05
        %v3338 = vadd.f32 %v3306, 1e-05
        %v3339 = vadd.f32 %v3307, 1e-05
        %v3340 = vadd.f32 %v3308, 1e-05
        %v3341 = vadd.f32 %v3309, 1e-05
        %v3342 = vadd.f32 %v3310, 1e-05
        %v3343 = vadd.f32 %v3311, 1e-05
        %v3344 = vadd.f32 %v3312, 1e-05
        %v3345 = vadd.f32 %v3313, 1e-05
        %v3346 = vrsqrt.pop %v3314
        %v3347 = vmul.f32 %v3346, %v3314
        %v3348 = vmul.f32 %v3347, %v3346
        %v3349 = vmul.f32 0.5, %v3348
        %v3350 = vsub.f32 1.5, %v3349
        %v3351 = vmul.f32 %v3346, %v3350
        %vm3352 = vweird.f32 %v3314
        %vm3353 = vweird.f32 %v3346
        %vm3354 = vmor %vm3352, %vm3353
        %v3355 = vsel %vm3354, %v3346, %v3351
        %v3356 = vrsqrt.pop %v3315
        %v3357 = vmul.f32 %v3356, %v3315
        %v3358 = vmul.f32 %v3357, %v3356
        %v3359 = vmul.f32 0.5, %v3358
        %v3360 = vsub.f32 1.5, %v3359
        %v3361 = vmul.f32 %v3356, %v3360
        %vm3362 = vweird.f32 %v3315
        %vm3363 = vweird.f32 %v3356
        %vm3364 = vmor %vm3362, %vm3363
        %v3365 = vsel %vm3364, %v3356, %v3361
        %v3366 = vrsqrt.pop %v3316
        %v3367 = vmul.f32 %v3366, %v3316
        %v3368 = vmul.f32 %v3367, %v3366
        %v3369 = vmul.f32 0.5, %v3368
        %v3370 = vsub.f32 1.5, %v3369
        %v3371 = vmul.f32 %v3366, %v3370
        %vm3372 = vweird.f32 %v3316
        %vm3373 = vweird.f32 %v3366
        %vm3374 = vmor %vm3372, %vm3373
        %v3375 = vsel %vm3374, %v3366, %v3371
        %v3376 = vrsqrt.pop %v3317
        %v3377 = vmul.f32 %v3376, %v3317
        %v3378 = vmul.f32 %v3377, %v3376
        %v3379 = vmul.f32 0.5, %v3378
        %v3380 = vsub.f32 1.5, %v3379
        %v3381 = vmul.f32 %v3376, %v3380
        %vm3382 = vweird.f32 %v3317
        %vm3383 = vweird.f32 %v3376
        %vm3384 = vmor %vm3382, %vm3383
        %v3385 = vsel %vm3384, %v3376, %v3381
        %v3386 = vrsqrt.pop %v3318
        %v3387 = vmul.f32 %v3386, %v3318
        %v3388 = vmul.f32 %v3387, %v3386
        %v3389 = vmul.f32 0.5, %v3388
        %v3390 = vsub.f32 1.5, %v3389
        %v3391 = vmul.f32 %v3386, %v3390
        %vm3392 = vweird.f32 %v3318
        %vm3393 = vweird.f32 %v3386
        %vm3394 = vmor %vm3392, %vm3393
        %v3395 = vsel %vm3394, %v3386, %v3391
        %v3396 = vrsqrt.pop %v3319
        %v3397 = vmul.f32 %v3396, %v3319
        %v3398 = vmul.f32 %v3397, %v3396
        %v3399 = vmul.f32 0.5, %v3398
        %v3400 = vsub.f32 1.5, %v3399
        %v3401 = vmul.f32 %v3396, %v3400
        %vm3402 = vweird.f32 %v3319
        %vm3403 = vweird.f32 %v3396
        %vm3404 = vmor %vm3402, %vm3403
        %v3405 = vsel %vm3404, %v3396, %v3401
        %v3406 = vrsqrt.pop %v3320
        %v3407 = vmul.f32 %v3406, %v3320
        %v3408 = vmul.f32 %v3407, %v3406
        %v3409 = vmul.f32 0.5, %v3408
        %v3410 = vsub.f32 1.5, %v3409
        %v3411 = vmul.f32 %v3406, %v3410
        %vm3412 = vweird.f32 %v3320
        %vm3413 = vweird.f32 %v3406
        %vm3414 = vmor %vm3412, %vm3413
        %v3415 = vsel %vm3414, %v3406, %v3411
        %v3416 = vrsqrt.pop %v3321
        %v3417 = vmul.f32 %v3416, %v3321
        %v3418 = vmul.f32 %v3417, %v3416
        %v3419 = vmul.f32 0.5, %v3418
        %v3420 = vsub.f32 1.5, %v3419
        %v3421 = vmul.f32 %v3416, %v3420
        %vm3422 = vweird.f32 %v3321
        %vm3423 = vweird.f32 %v3416
        %vm3424 = vmor %vm3422, %vm3423
        %v3425 = vsel %vm3424, %v3416, %v3421
        %v3426 = vrsqrt.pop %v3322
        %v3427 = vmul.f32 %v3426, %v3322
        %v3428 = vmul.f32 %v3427, %v3426
        %v3429 = vmul.f32 0.5, %v3428
        %v3430 = vsub.f32 1.5, %v3429
        %v3431 = vmul.f32 %v3426, %v3430
        %vm3432 = vweird.f32 %v3322
        %vm3433 = vweird.f32 %v3426
        %vm3434 = vmor %vm3432, %vm3433
        %v3435 = vsel %vm3434, %v3426, %v3431
        %v3436 = vrsqrt.pop %v3323
        %v3437 = vmul.f32 %v3436, %v3323
        %v3438 = vmul.f32 %v3437, %v3436
        %v3439 = vmul.f32 0.5, %v3438
        %v3440 = vsub.f32 1.5, %v3439
        %v3441 = vmul.f32 %v3436, %v3440
        %vm3442 = vweird.f32 %v3323
        %vm3443 = vweird.f32 %v3436
        %vm3444 = vmor %vm3442, %vm3443
        %v3445 = vsel %vm3444, %v3436, %v3441
        %v3446 = vrsqrt.pop %v3324
        %v3447 = vmul.f32 %v3446, %v3324
        %v3448 = vmul.f32 %v3447, %v3446
        %v3449 = vmul.f32 0.5, %v3448
        %v3450 = vsub.f32 1.5, %v3449
        %v3451 = vmul.f32 %v3446, %v3450
        %vm3452 = vweird.f32 %v3324
        %vm3453 = vweird.f32 %v3446
        %vm3454 = vmor %vm3452, %vm3453
        %v3455 = vsel %vm3454, %v3446, %v3451
        %v3456 = vrsqrt.pop %v3325
        %v3457 = vmul.f32 %v3456, %v3325
        %v3458 = vmul.f32 %v3457, %v3456
        %v3459 = vmul.f32 0.5, %v3458
        %v3460 = vsub.f32 1.5, %v3459
        %v3461 = vmul.f32 %v3456, %v3460
        %vm3462 = vweird.f32 %v3325
        %vm3463 = vweird.f32 %v3456
        %vm3464 = vmor %vm3462, %vm3463
        %v3465 = vsel %vm3464, %v3456, %v3461
        %v3466 = vrsqrt.pop %v3326
        %v3467 = vmul.f32 %v3466, %v3326
        %v3468 = vmul.f32 %v3467, %v3466
        %v3469 = vmul.f32 0.5, %v3468
        %v3470 = vsub.f32 1.5, %v3469
        %v3471 = vmul.f32 %v3466, %v3470
        %vm3472 = vweird.f32 %v3326
        %vm3473 = vweird.f32 %v3466
        %vm3474 = vmor %vm3472, %vm3473
        %v3475 = vsel %vm3474, %v3466, %v3471
        %v3476 = vrsqrt.pop %v3327
        %v3477 = vmul.f32 %v3476, %v3327
        %v3478 = vmul.f32 %v3477, %v3476
        %v3479 = vmul.f32 0.5, %v3478
        %v3480 = vsub.f32 1.5, %v3479
        %v3481 = vmul.f32 %v3476, %v3480
        %vm3482 = vweird.f32 %v3327
        %vm3483 = vweird.f32 %v3476
        %vm3484 = vmor %vm3482, %vm3483
        %v3485 = vsel %vm3484, %v3476, %v3481
        %v3486 = vrsqrt.pop %v3328
        %v3487 = vmul.f32 %v3486, %v3328
        %v3488 = vmul.f32 %v3487, %v3486
        %v3489 = vmul.f32 0.5, %v3488
        %v3490 = vsub.f32 1.5, %v3489
        %v3491 = vmul.f32 %v3486, %v3490
        %vm3492 = vweird.f32 %v3328
        %vm3493 = vweird.f32 %v3486
        %vm3494 = vmor %vm3492, %vm3493
        %v3495 = vsel %vm3494, %v3486, %v3491
        %v3496 = vrsqrt.pop %v3329
        %v3497 = vmul.f32 %v3496, %v3329
        %v3498 = vmul.f32 %v3497, %v3496
        %v3499 = vmul.f32 0.5, %v3498
        %v3500 = vsub.f32 1.5, %v3499
        %v3501 = vmul.f32 %v3496, %v3500
        %vm3502 = vweird.f32 %v3329
        %vm3503 = vweird.f32 %v3496
        %vm3504 = vmor %vm3502, %vm3503
        %v3505 = vsel %vm3504, %v3496, %v3501
        %v3506 = vrsqrt.pop %v3330
        %v3507 = vmul.f32 %v3506, %v3330
        %v3508 = vmul.f32 %v3507, %v3506
        %v3509 = vmul.f32 0.5, %v3508
        %v3510 = vsub.f32 1.5, %v3509
        %v3511 = vmul.f32 %v3506, %v3510
        %vm3512 = vweird.f32 %v3330
        %vm3513 = vweird.f32 %v3506
        %vm3514 = vmor %vm3512, %vm3513
        %v3515 = vsel %vm3514, %v3506, %v3511
        %v3516 = vrsqrt.pop %v3331
        %v3517 = vmul.f32 %v3516, %v3331
        %v3518 = vmul.f32 %v3517, %v3516
        %v3519 = vmul.f32 0.5, %v3518
        %v3520 = vsub.f32 1.5, %v3519
        %v3521 = vmul.f32 %v3516, %v3520
        %vm3522 = vweird.f32 %v3331
        %vm3523 = vweird.f32 %v3516
        %vm3524 = vmor %vm3522, %vm3523
        %v3525 = vsel %vm3524, %v3516, %v3521
        %v3526 = vrsqrt.pop %v3332
        %v3527 = vmul.f32 %v3526, %v3332
        %v3528 = vmul.f32 %v3527, %v3526
        %v3529 = vmul.f32 0.5, %v3528
        %v3530 = vsub.f32 1.5, %v3529
        %v3531 = vmul.f32 %v3526, %v3530
        %vm3532 = vweird.f32 %v3332
        %vm3533 = vweird.f32 %v3526
        %vm3534 = vmor %vm3532, %vm3533
        %v3535 = vsel %vm3534, %v3526, %v3531
        %v3536 = vrsqrt.pop %v3333
        %v3537 = vmul.f32 %v3536, %v3333
        %v3538 = vmul.f32 %v3537, %v3536
        %v3539 = vmul.f32 0.5, %v3538
        %v3540 = vsub.f32 1.5, %v3539
        %v3541 = vmul.f32 %v3536, %v3540
        %vm3542 = vweird.f32 %v3333
        %vm3543 = vweird.f32 %v3536
        %vm3544 = vmor %vm3542, %vm3543
        %v3545 = vsel %vm3544, %v3536, %v3541
        %v3546 = vrsqrt.pop %v3334
        %v3547 = vmul.f32 %v3546, %v3334
        %v3548 = vmul.f32 %v3547, %v3546
        %v3549 = vmul.f32 0.5, %v3548
        %v3550 = vsub.f32 1.5, %v3549
        %v3551 = vmul.f32 %v3546, %v3550
        %vm3552 = vweird.f32 %v3334
        %vm3553 = vweird.f32 %v3546
        %vm3554 = vmor %vm3552, %vm3553
        %v3555 = vsel %vm3554, %v3546, %v3551
        %v3556 = vrsqrt.pop %v3335
        %v3557 = vmul.f32 %v3556, %v3335
        %v3558 = vmul.f32 %v3557, %v3556
        %v3559 = vmul.f32 0.5, %v3558
        %v3560 = vsub.f32 1.5, %v3559
        %v3561 = vmul.f32 %v3556, %v3560
        %vm3562 = vweird.f32 %v3335
        %vm3563 = vweird.f32 %v3556
        %vm3564 = vmor %vm3562, %vm3563
        %v3565 = vsel %vm3564, %v3556, %v3561
        %v3566 = vrsqrt.pop %v3336
        %v3567 = vmul.f32 %v3566, %v3336
        %v3568 = vmul.f32 %v3567, %v3566
        %v3569 = vmul.f32 0.5, %v3568
        %v3570 = vsub.f32 1.5, %v3569
        %v3571 = vmul.f32 %v3566, %v3570
        %vm3572 = vweird.f32 %v3336
        %vm3573 = vweird.f32 %v3566
        %vm3574 = vmor %vm3572, %vm3573
        %v3575 = vsel %vm3574, %v3566, %v3571
        %v3576 = vrsqrt.pop %v3337
        %v3577 = vmul.f32 %v3576, %v3337
        %v3578 = vmul.f32 %v3577, %v3576
        %v3579 = vmul.f32 0.5, %v3578
        %v3580 = vsub.f32 1.5, %v3579
        %v3581 = vmul.f32 %v3576, %v3580
        %vm3582 = vweird.f32 %v3337
        %vm3583 = vweird.f32 %v3576
        %vm3584 = vmor %vm3582, %vm3583
        %v3585 = vsel %vm3584, %v3576, %v3581
        %v3586 = vrsqrt.pop %v3338
        %v3587 = vmul.f32 %v3586, %v3338
        %v3588 = vmul.f32 %v3587, %v3586
        %v3589 = vmul.f32 0.5, %v3588
        %v3590 = vsub.f32 1.5, %v3589
        %v3591 = vmul.f32 %v3586, %v3590
        %vm3592 = vweird.f32 %v3338
        %vm3593 = vweird.f32 %v3586
        %vm3594 = vmor %vm3592, %vm3593
        %v3595 = vsel %vm3594, %v3586, %v3591
        %v3596 = vrsqrt.pop %v3339
        %v3597 = vmul.f32 %v3596, %v3339
        %v3598 = vmul.f32 %v3597, %v3596
        %v3599 = vmul.f32 0.5, %v3598
        %v3600 = vsub.f32 1.5, %v3599
        %v3601 = vmul.f32 %v3596, %v3600
        %vm3602 = vweird.f32 %v3339
        %vm3603 = vweird.f32 %v3596
        %vm3604 = vmor %vm3602, %vm3603
        %v3605 = vsel %vm3604, %v3596, %v3601
        %v3606 = vrsqrt.pop %v3340
        %v3607 = vmul.f32 %v3606, %v3340
        %v3608 = vmul.f32 %v3607, %v3606
        %v3609 = vmul.f32 0.5, %v3608
        %v3610 = vsub.f32 1.5, %v3609
        %v3611 = vmul.f32 %v3606, %v3610
        %vm3612 = vweird.f32 %v3340
        %vm3613 = vweird.f32 %v3606
        %vm3614 = vmor %vm3612, %vm3613
        %v3615 = vsel %vm3614, %v3606, %v3611
        %v3616 = vrsqrt.pop %v3341
        %v3617 = vmul.f32 %v3616, %v3341
        %v3618 = vmul.f32 %v3617, %v3616
        %v3619 = vmul.f32 0.5, %v3618
        %v3620 = vsub.f32 1.5, %v3619
        %v3621 = vmul.f32 %v3616, %v3620
        %vm3622 = vweird.f32 %v3341
        %vm3623 = vweird.f32 %v3616
        %vm3624 = vmor %vm3622, %vm3623
        %v3625 = vsel %vm3624, %v3616, %v3621
        %v3626 = vrsqrt.pop %v3342
        %v3627 = vmul.f32 %v3626, %v3342
        %v3628 = vmul.f32 %v3627, %v3626
        %v3629 = vmul.f32 0.5, %v3628
        %v3630 = vsub.f32 1.5, %v3629
        %v3631 = vmul.f32 %v3626, %v3630
        %vm3632 = vweird.f32 %v3342
        %vm3633 = vweird.f32 %v3626
        %vm3634 = vmor %vm3632, %vm3633
        %v3635 = vsel %vm3634, %v3626, %v3631
        %v3636 = vrsqrt.pop %v3343
        %v3637 = vmul.f32 %v3636, %v3343
        %v3638 = vmul.f32 %v3637, %v3636
        %v3639 = vmul.f32 0.5, %v3638
        %v3640 = vsub.f32 1.5, %v3639
        %v3641 = vmul.f32 %v3636, %v3640
        %vm3642 = vweird.f32 %v3343
        %vm3643 = vweird.f32 %v3636
        %vm3644 = vmor %vm3642, %vm3643
        %v3645 = vsel %vm3644, %v3636, %v3641
        %v3646 = vrsqrt.pop %v3344
        %v3647 = vmul.f32 %v3646, %v3344
        %v3648 = vmul.f32 %v3647, %v3646
        %v3649 = vmul.f32 0.5, %v3648
        %v3650 = vsub.f32 1.5, %v3649
        %v3651 = vmul.f32 %v3646, %v3650
        %vm3652 = vweird.f32 %v3344
        %vm3653 = vweird.f32 %v3646
        %vm3654 = vmor %vm3652, %vm3653
        %v3655 = vsel %vm3654, %v3646, %v3651
        %v3656 = vrsqrt.pop %v3345
        %v3657 = vmul.f32 %v3656, %v3345
        %v3658 = vmul.f32 %v3657, %v3656
        %v3659 = vmul.f32 0.5, %v3658
        %v3660 = vsub.f32 1.5, %v3659
        %v3661 = vmul.f32 %v3656, %v3660
        %vm3662 = vweird.f32 %v3345
        %vm3663 = vweird.f32 %v3656
        %vm3664 = vmor %vm3662, %vm3663
        %v3665 = vsel %vm3664, %v3656, %v3661
        %v3666 = vmul.f32 %v3122, %v3355
        %v3667 = vmul.f32 %v3123, %v3365
        %v3668 = vmul.f32 %v3124, %v3375
        %v3669 = vmul.f32 %v3125, %v3385
        %v3670 = vmul.f32 %v3126, %v3395
        %v3671 = vmul.f32 %v3127, %v3405
        %v3672 = vmul.f32 %v3128, %v3415
        %v3673 = vmul.f32 %v3129, %v3425
        %v3674 = vmul.f32 %v3130, %v3435
        %v3675 = vmul.f32 %v3131, %v3445
        %v3676 = vmul.f32 %v3132, %v3455
        %v3677 = vmul.f32 %v3133, %v3465
        %v3678 = vmul.f32 %v3134, %v3475
        %v3679 = vmul.f32 %v3135, %v3485
        %v3680 = vmul.f32 %v3136, %v3495
        %v3681 = vmul.f32 %v3137, %v3505
        %v3682 = vmul.f32 %v3138, %v3515
        %v3683 = vmul.f32 %v3139, %v3525
        %v3684 = vmul.f32 %v3140, %v3535
        %v3685 = vmul.f32 %v3141, %v3545
        %v3686 = vmul.f32 %v3142, %v3555
        %v3687 = vmul.f32 %v3143, %v3565
        %v3688 = vmul.f32 %v3144, %v3575
        %v3689 = vmul.f32 %v3145, %v3585
        %v3690 = vmul.f32 %v3146, %v3595
        %v3691 = vmul.f32 %v3147, %v3605
        %v3692 = vmul.f32 %v3148, %v3615
        %v3693 = vmul.f32 %v3149, %v3625
        %v3694 = vmul.f32 %v3150, %v3635
        %v3695 = vmul.f32 %v3151, %v3645
        %v3696 = vmul.f32 %v3152, %v3655
        %v3697 = vmul.f32 %v3153, %v3665
        %v3698 = vperm.slane %v2108, 0
        %v3699 = vmul.f32 %v3666, %v3698
        %v3700 = vmul.f32 %v3667, %v3698
        %v3701 = vmul.f32 %v3668, %v3698
        %v3702 = vmul.f32 %v3669, %v3698
        %v3703 = vmul.f32 %v3670, %v3698
        %v3704 = vmul.f32 %v3671, %v3698
        %v3705 = vmul.f32 %v3672, %v3698
        %v3706 = vmul.f32 %v3673, %v3698
        %v3707 = vmul.f32 %v3674, %v3698
        %v3708 = vmul.f32 %v3675, %v3698
        %v3709 = vmul.f32 %v3676, %v3698
        %v3710 = vmul.f32 %v3677, %v3698
        %v3711 = vmul.f32 %v3678, %v3698
        %v3712 = vmul.f32 %v3679, %v3698
        %v3713 = vmul.f32 %v3680, %v3698
        %v3714 = vmul.f32 %v3681, %v3698
        %v3715 = vmul.f32 %v3682, %v3698
        %v3716 = vmul.f32 %v3683, %v3698
        %v3717 = vmul.f32 %v3684, %v3698
        %v3718 = vmul.f32 %v3685, %v3698
        %v3719 = vmul.f32 %v3686, %v3698
        %v3720 = vmul.f32 %v3687, %v3698
        %v3721 = vmul.f32 %v3688, %v3698
        %v3722 = vmul.f32 %v3689, %v3698
        %v3723 = vmul.f32 %v3690, %v3698
        %v3724 = vmul.f32 %v3691, %v3698
        %v3725 = vmul.f32 %v3692, %v3698
        %v3726 = vmul.f32 %v3693, %v3698
        %v3727 = vmul.f32 %v3694, %v3698
        %v3728 = vmul.f32 %v3695, %v3698
        %v3729 = vmul.f32 %v3696, %v3698
        %v3730 = vmul.f32 %v3697, %v3698
        %v3731 = vperm.slane %v2109, 0
        %v3732 = vadd.f32 %v3699, %v3731
        %v3733 = vadd.f32 %v3700, %v3731
        %v3734 = vadd.f32 %v3701, %v3731
        %v3735 = vadd.f32 %v3702, %v3731
        %v3736 = vadd.f32 %v3703, %v3731
        %v3737 = vadd.f32 %v3704, %v3731
        %v3738 = vadd.f32 %v3705, %v3731
        %v3739 = vadd.f32 %v3706, %v3731
        %v3740 = vadd.f32 %v3707, %v3731
        %v3741 = vadd.f32 %v3708, %v3731
        %v3742 = vadd.f32 %v3709, %v3731
        %v3743 = vadd.f32 %v3710, %v3731
        %v3744 = vadd.f32 %v3711, %v3731
        %v3745 = vadd.f32 %v3712, %v3731
        %v3746 = vadd.f32 %v3713, %v3731
        %v3747 = vadd.f32 %v3714, %v3731
        %v3748 = vadd.f32 %v3715, %v3731
        %v3749 = vadd.f32 %v3716, %v3731
        %v3750 = vadd.f32 %v3717, %v3731
        %v3751 = vadd.f32 %v3718, %v3731
        %v3752 = vadd.f32 %v3719, %v3731
        %v3753 = vadd.f32 %v3720, %v3731
        %v3754 = vadd.f32 %v3721, %v3731
        %v3755 = vadd.f32 %v3722, %v3731
        %v3756 = vadd.f32 %v3723, %v3731
        %v3757 = vadd.f32 %v3724, %v3731
        %v3758 = vadd.f32 %v3725, %v3731
        %v3759 = vadd.f32 %v3726, %v3731
        %v3760 = vadd.f32 %v3727, %v3731
        %v3761 = vadd.f32 %v3728, %v3731
        %v3762 = vadd.f32 %v3729, %v3731
        %v3763 = vadd.f32 %v3730, %v3731
        %v3765 = vsel %vm833, %v3732, 0
        %v3768 = vsel %vm833, %v3733, 0
        %v3771 = vsel %vm833, %v3734, 0
        %v3774 = vsel %vm833, %v3735, 0
        %v3777 = vsel %vm833, %v3736, 0
        %v3780 = vsel %vm833, %v3737, 0
        %v3783 = vsel %vm833, %v3738, 0
        %v3786 = vsel %vm833, %v3739, 0
        %v3789 = vsel %vm833, %v3740, 0
        %v3792 = vsel %vm833, %v3741, 0
        %v3795 = vsel %vm833, %v3742, 0
        %v3798 = vsel %vm833, %v3743, 0
        %v3801 = vsel %vm833, %v3744, 0
        %v3804 = vsel %vm833, %v3745, 0
        %v3807 = vsel %vm833, %v3746, 0
        %v3810 = vsel %vm833, %v3747, 0
        %v3813 = vsel %vm833, %v3748, 0
        %v3816 = vsel %vm833, %v3749, 0
        %v3819 = vsel %vm833, %v3750, 0
        %v3822 = vsel %vm833, %v3751, 0
        %v3825 = vsel %vm833, %v3752, 0
        %v3828 = vsel %vm833, %v3753, 0
        %v3831 = vsel %vm833, %v3754, 0
        %v3834 = vsel %vm833, %v3755, 0
        %v3837 = vsel %vm833, %v3756, 0
        %v3840 = vsel %vm833, %v3757, 0
        %v3843 = vsel %vm833, %v3758, 0
        %v3846 = vsel %vm833, %v3759, 0
        %v3849 = vsel %vm833, %v3760, 0
        %v3852 = vsel %vm833, %v3761, 0
        %v3855 = vsel %vm833, %v3762, 0
        %v3858 = vsel %vm833, %v3763, 0
        %3860 = vmatpush.msra.mxu0 0.0
        %3861 = vmatpush.msra.mxu0 0.0
        %3862 = vmatpush.msra.mxu0 0.0
        %3863 = vmatpush.msra.mxu0 0.0
        %3864 = vmatpush.msra.mxu0 0.0
        %3865 = vmatpush.msra.mxu0 0.0
        %3866 = vmatpush.msra.mxu0 0.0
        %3867 = vmatpush.msra.mxu0 0.0
        %3868 = vmatpush.msra.mxu0 0.0
        %3869 = vmatpush.msra.mxu0 0.0
        %3870 = vmatpush.msra.mxu0 0.0
        %3871 = vmatpush.msra.mxu0 0.0
        %3872 = vmatpush.msra.mxu0 %v2105
        %3873 = vmatpush.msra.mxu0 %v2104
        %3874 = vmatpush.msra.mxu0 %v2103
        %3875 = vmatpush.msra.mxu0 %v2102
        %3876 = vmatmul.f32.gmra.mxu0 %v3765
        %v3877 = vpop.f32.mrf.mxu0
        %v3878 = vadd.f32 0.0, %v3877
        %3879 = vmatmul.f32.gmra.mxu0 %v3768
        %v3880 = vpop.f32.mrf.mxu0
        %v3881 = vadd.f32 0.0, %v3880
        %3882 = vmatmul.f32.gmra.mxu0 %v3771
        %v3883 = vpop.f32.mrf.mxu0
        %v3884 = vadd.f32 0.0, %v3883
        %3885 = vmatmul.f32.gmra.mxu0 %v3774
        %v3886 = vpop.f32.mrf.mxu0
        %v3887 = vadd.f32 0.0, %v3886
        %3888 = vmatmul.f32.gmra.mxu0 %v3777
        %v3889 = vpop.f32.mrf.mxu0
        %v3890 = vadd.f32 0.0, %v3889
        %3891 = vmatmul.f32.gmra.mxu0 %v3780
        %v3892 = vpop.f32.mrf.mxu0
        %v3893 = vadd.f32 0.0, %v3892
        %3894 = vmatmul.f32.gmra.mxu0 %v3783
        %v3895 = vpop.f32.mrf.mxu0
        %v3896 = vadd.f32 0.0, %v3895
        %3897 = vmatmul.f32.gmra.mxu0 %v3786
        %v3898 = vpop.f32.mrf.mxu0
        %v3899 = vadd.f32 0.0, %v3898
        %3900 = vmatmul.f32.gmra.mxu0 %v3789
        %v3901 = vpop.f32.mrf.mxu0
        %v3902 = vadd.f32 0.0, %v3901
        %3903 = vmatmul.f32.gmra.mxu0 %v3792
        %v3904 = vpop.f32.mrf.mxu0
        %v3905 = vadd.f32 0.0, %v3904
        %3906 = vmatmul.f32.gmra.mxu0 %v3795
        %v3907 = vpop.f32.mrf.mxu0
        %v3908 = vadd.f32 0.0, %v3907
        %3909 = vmatmul.f32.gmra.mxu0 %v3798
        %v3910 = vpop.f32.mrf.mxu0
        %v3911 = vadd.f32 0.0, %v3910
        %3912 = vmatmul.f32.gmra.mxu0 %v3801
        %v3913 = vpop.f32.mrf.mxu0
        %v3914 = vadd.f32 0.0, %v3913
        %3915 = vmatmul.f32.gmra.mxu0 %v3804
        %v3916 = vpop.f32.mrf.mxu0
        %v3917 = vadd.f32 0.0, %v3916
        %3918 = vmatmul.f32.gmra.mxu0 %v3807
        %v3919 = vpop.f32.mrf.mxu0
        %v3920 = vadd.f32 0.0, %v3919
        %3921 = vmatmul.f32.gmra.mxu0 %v3810
        %v3922 = vpop.f32.mrf.mxu0
        %v3923 = vadd.f32 0.0, %v3922
        %3924 = vmatmul.f32.gmra.mxu0 %v3813
        %v3925 = vpop.f32.mrf.mxu0
        %v3926 = vadd.f32 0.0, %v3925
        %3927 = vmatmul.f32.gmra.mxu0 %v3816
        %v3928 = vpop.f32.mrf.mxu0
        %v3929 = vadd.f32 0.0, %v3928
        %3930 = vmatmul.f32.gmra.mxu0 %v3819
        %v3931 = vpop.f32.mrf.mxu0
        %v3932 = vadd.f32 0.0, %v3931
        %3933 = vmatmul.f32.gmra.mxu0 %v3822
        %v3934 = vpop.f32.mrf.mxu0
        %v3935 = vadd.f32 0.0, %v3934
        %3936 = vmatmul.f32.gmra.mxu0 %v3825
        %v3937 = vpop.f32.mrf.mxu0
        %v3938 = vadd.f32 0.0, %v3937
        %3939 = vmatmul.f32.gmra.mxu0 %v3828
        %v3940 = vpop.f32.mrf.mxu0
        %v3941 = vadd.f32 0.0, %v3940
        %3942 = vmatmul.f32.gmra.mxu0 %v3831
        %v3943 = vpop.f32.mrf.mxu0
        %v3944 = vadd.f32 0.0, %v3943
        %3945 = vmatmul.f32.gmra.mxu0 %v3834
        %v3946 = vpop.f32.mrf.mxu0
        %v3947 = vadd.f32 0.0, %v3946
        %3948 = vmatmul.f32.gmra.mxu0 %v3837
        %v3949 = vpop.f32.mrf.mxu0
        %v3950 = vadd.f32 0.0, %v3949
        %3951 = vmatmul.f32.gmra.mxu0 %v3840
        %v3952 = vpop.f32.mrf.mxu0
        %v3953 = vadd.f32 0.0, %v3952
        %3954 = vmatmul.f32.gmra.mxu0 %v3843
        %v3955 = vpop.f32.mrf.mxu0
        %v3956 = vadd.f32 0.0, %v3955
        %3957 = vmatmul.f32.gmra.mxu0 %v3846
        %v3958 = vpop.f32.mrf.mxu0
        %v3959 = vadd.f32 0.0, %v3958
        %3960 = vmatmul.f32.gmra.mxu0 %v3849
        %v3961 = vpop.f32.mrf.mxu0
        %v3962 = vadd.f32 0.0, %v3961
        %3963 = vmatmul.f32.gmra.mxu0 %v3852
        %v3964 = vpop.f32.mrf.mxu0
        %v3965 = vadd.f32 0.0, %v3964
        %3966 = vmatmul.f32.gmra.mxu0 %v3855
        %v3967 = vpop.f32.mrf.mxu0
        %v3968 = vadd.f32 0.0, %v3967
        %3969 = vmatmul.f32.gmra.mxu0 %v3858
        %v3970 = vpop.f32.mrf.mxu0
        %v3971 = vadd.f32 0.0, %v3970
        %3972 = vdwg.mxu0
        %v3974 = vsel %vm833, %v2062, 0
        %v3977 = vsel %vm833, %v2063, 0
        %v3980 = vsel %vm833, %v2064, 0
        %v3983 = vsel %vm833, %v2065, 0
        %v3986 = vsel %vm833, %v2066, 0
        %v3989 = vsel %vm833, %v2067, 0
        %v3992 = vsel %vm833, %v2068, 0
        %v3995 = vsel %vm833, %v2069, 0
        %v3998 = vsel %vm833, %v2070, 0
        %v4001 = vsel %vm833, %v2071, 0
        %v4004 = vsel %vm833, %v2072, 0
        %v4007 = vsel %vm833, %v2073, 0
        %v4010 = vsel %vm833, %v2074, 0
        %v4013 = vsel %vm833, %v2075, 0
        %v4016 = vsel %vm833, %v2076, 0
        %v4019 = vsel %vm833, %v2077, 0
        %v4022 = vsel %vm833, %v2078, 0
        %v4025 = vsel %vm833, %v2079, 0
        %v4028 = vsel %vm833, %v2080, 0
        %v4031 = vsel %vm833, %v2081, 0
        %v4034 = vsel %vm833, %v2082, 0
        %v4037 = vsel %vm833, %v2083, 0
        %v4040 = vsel %vm833, %v2084, 0
        %v4043 = vsel %vm833, %v2085, 0
        %v4046 = vsel %vm833, %v2086, 0
        %v4049 = vsel %vm833, %v2087, 0
        %v4052 = vsel %vm833, %v2088, 0
        %v4055 = vsel %vm833, %v2089, 0
        %v4058 = vsel %vm833, %v2090, 0
        %v4061 = vsel %vm833, %v2091, 0
        %v4064 = vsel %vm833, %v2092, 0
        %v4067 = vsel %vm833, %v2093, 0
        %4069 = vmatpush.msra.mxu0 0.0
        %4070 = vmatpush.msra.mxu0 0.0
        %4071 = vmatpush.msra.mxu0 0.0
        %4072 = vmatpush.msra.mxu0 0.0
        %4073 = vmatpush.msra.mxu0 0.0
        %4074 = vmatpush.msra.mxu0 0.0
        %4075 = vmatpush.msra.mxu0 0.0
        %4076 = vmatpush.msra.mxu0 0.0
        %4077 = vmatpush.msra.mxu0 0.0
        %4078 = vmatpush.msra.mxu0 0.0
        %4079 = vmatpush.msra.mxu0 0.0
        %4080 = vmatpush.msra.mxu0 0.0
        %4081 = vmatpush.msra.mxu0 %v378
        %4082 = vmatpush.msra.mxu0 %v377
        %4083 = vmatpush.msra.mxu0 %v376
        %4084 = vmatpush.msra.mxu0 %v375
        %4085 = vmatmul.f32.gmra.mxu0 %v3974
        %v4086 = vpop.f32.mrf.mxu0
        %v4087 = vadd.f32 %v3878, %v4086
        %4088 = vmatmul.f32.gmra.mxu0 %v3977
        %v4089 = vpop.f32.mrf.mxu0
        %v4090 = vadd.f32 %v3881, %v4089
        %4091 = vmatmul.f32.gmra.mxu0 %v3980
        %v4092 = vpop.f32.mrf.mxu0
        %v4093 = vadd.f32 %v3884, %v4092
        %4094 = vmatmul.f32.gmra.mxu0 %v3983
        %v4095 = vpop.f32.mrf.mxu0
        %v4096 = vadd.f32 %v3887, %v4095
        %4097 = vmatmul.f32.gmra.mxu0 %v3986
        %v4098 = vpop.f32.mrf.mxu0
        %v4099 = vadd.f32 %v3890, %v4098
        %4100 = vmatmul.f32.gmra.mxu0 %v3989
        %v4101 = vpop.f32.mrf.mxu0
        %v4102 = vadd.f32 %v3893, %v4101
        %4103 = vmatmul.f32.gmra.mxu0 %v3992
        %v4104 = vpop.f32.mrf.mxu0
        %v4105 = vadd.f32 %v3896, %v4104
        %4106 = vmatmul.f32.gmra.mxu0 %v3995
        %v4107 = vpop.f32.mrf.mxu0
        %v4108 = vadd.f32 %v3899, %v4107
        %4109 = vmatmul.f32.gmra.mxu0 %v3998
        %v4110 = vpop.f32.mrf.mxu0
        %v4111 = vadd.f32 %v3902, %v4110
        %4112 = vmatmul.f32.gmra.mxu0 %v4001
        %v4113 = vpop.f32.mrf.mxu0
        %v4114 = vadd.f32 %v3905, %v4113
        %4115 = vmatmul.f32.gmra.mxu0 %v4004
        %v4116 = vpop.f32.mrf.mxu0
        %v4117 = vadd.f32 %v3908, %v4116
        %4118 = vmatmul.f32.gmra.mxu0 %v4007
        %v4119 = vpop.f32.mrf.mxu0
        %v4120 = vadd.f32 %v3911, %v4119
        %4121 = vmatmul.f32.gmra.mxu0 %v4010
        %v4122 = vpop.f32.mrf.mxu0
        %v4123 = vadd.f32 %v3914, %v4122
        %4124 = vmatmul.f32.gmra.mxu0 %v4013
        %v4125 = vpop.f32.mrf.mxu0
        %v4126 = vadd.f32 %v3917, %v4125
        %4127 = vmatmul.f32.gmra.mxu0 %v4016
        %v4128 = vpop.f32.mrf.mxu0
        %v4129 = vadd.f32 %v3920, %v4128
        %4130 = vmatmul.f32.gmra.mxu0 %v4019
        %v4131 = vpop.f32.mrf.mxu0
        %v4132 = vadd.f32 %v3923, %v4131
        %4133 = vmatmul.f32.gmra.mxu0 %v4022
        %v4134 = vpop.f32.mrf.mxu0
        %v4135 = vadd.f32 %v3926, %v4134
        %4136 = vmatmul.f32.gmra.mxu0 %v4025
        %v4137 = vpop.f32.mrf.mxu0
        %v4138 = vadd.f32 %v3929, %v4137
        %4139 = vmatmul.f32.gmra.mxu0 %v4028
        %v4140 = vpop.f32.mrf.mxu0
        %v4141 = vadd.f32 %v3932, %v4140
        %4142 = vmatmul.f32.gmra.mxu0 %v4031
        %v4143 = vpop.f32.mrf.mxu0
        %v4144 = vadd.f32 %v3935, %v4143
        %4145 = vmatmul.f32.gmra.mxu0 %v4034
        %v4146 = vpop.f32.mrf.mxu0
        %v4147 = vadd.f32 %v3938, %v4146
        %4148 = vmatmul.f32.gmra.mxu0 %v4037
        %v4149 = vpop.f32.mrf.mxu0
        %v4150 = vadd.f32 %v3941, %v4149
        %4151 = vmatmul.f32.gmra.mxu0 %v4040
        %v4152 = vpop.f32.mrf.mxu0
        %v4153 = vadd.f32 %v3944, %v4152
        %4154 = vmatmul.f32.gmra.mxu0 %v4043
        %v4155 = vpop.f32.mrf.mxu0
        %v4156 = vadd.f32 %v3947, %v4155
        %4157 = vmatmul.f32.gmra.mxu0 %v4046
        %v4158 = vpop.f32.mrf.mxu0
        %v4159 = vadd.f32 %v3950, %v4158
        %4160 = vmatmul.f32.gmra.mxu0 %v4049
        %v4161 = vpop.f32.mrf.mxu0
        %v4162 = vadd.f32 %v3953, %v4161
        %4163 = vmatmul.f32.gmra.mxu0 %v4052
        %v4164 = vpop.f32.mrf.mxu0
        %v4165 = vadd.f32 %v3956, %v4164
        %4166 = vmatmul.f32.gmra.mxu0 %v4055
        %v4167 = vpop.f32.mrf.mxu0
        %v4168 = vadd.f32 %v3959, %v4167
        %4169 = vmatmul.f32.gmra.mxu0 %v4058
        %v4170 = vpop.f32.mrf.mxu0
        %v4171 = vadd.f32 %v3962, %v4170
        %4172 = vmatmul.f32.gmra.mxu0 %v4061
        %v4173 = vpop.f32.mrf.mxu0
        %v4174 = vadd.f32 %v3965, %v4173
        %4175 = vmatmul.f32.gmra.mxu0 %v4064
        %v4176 = vpop.f32.mrf.mxu0
        %v4177 = vadd.f32 %v3968, %v4176
        %4178 = vmatmul.f32.gmra.mxu0 %v4067
        %v4179 = vpop.f32.mrf.mxu0
        %v4180 = vadd.f32 %v3971, %v4179
        %4181 = vdwg.mxu0
        %v4182 = vld [vmem:[%s3 + $0x40] sm:$0xff]
        %v4183 = vld [vmem:[%s3 + $0x48] sm:$0xff]
        %v4184 = vld [vmem:[%s3 + $0x50] sm:$0xff]
        %v4185 = vld [vmem:[%s3 + $0x58] sm:$0xff]
        %v4186 = vld [vmem:[%s3 + $0xa0] sm:$0xff]
        %v4187 = vld [vmem:[%s3 + $0xa8] sm:$0xff]
        %v4188 = vld [vmem:[%s3 + $0xb0] sm:$0xff]
        %v4189 = vld [vmem:[%s3 + $0xb8] sm:$0xff]
        %v4190 = vld [vmem:[%s3 + $0x100] sm:$0xff]
        %v4191 = vld [vmem:[%s3 + $0x108] sm:$0xff]
        %v4192 = vld [vmem:[%s3 + $0x110] sm:$0xff]
        %v4193 = vld [vmem:[%s3 + $0x118] sm:$0xff]
        %v4194 = vld [vmem:[%s4 + $0x2] sm:$0x1]
        %v4195 = vld [vmem:[%s4 + $0x5] sm:$0x1]
        %v4196 = vld [vmem:[%s4 + $0x8] sm:$0x1]
        %v4197 = vld [vmem:[%s4 + $0xb] sm:$0x1]
        %4198 = vmatpush.msra.mxu0 0.0
        %4199 = vmatpush.msra.mxu0 0.0
        %4200 = vmatpush.msra.mxu0 0.0
        %4201 = vmatpush.msra.mxu0 0.0
        %4202 = vmatpush.msra.mxu0 0.0
        %4203 = vmatpush.msra.mxu0 0.0
        %4204 = vmatpush.msra.mxu0 0.0
        %4205 = vmatpush.msra.mxu0 0.0
        %4206 = vmatpush.msra.mxu0 0.0
        %4207 = vmatpush.msra.mxu0 0.0
        %4208 = vmatpush.msra.mxu0 0.0
        %4209 = vmatpush.msra.mxu0 0.0
        %4210 = vmatpush.msra.mxu0 0.0
        %4211 = vmatpush.msra.mxu0 0.0
        %4212 = vmatpush.msra.mxu0 %v3733
        %4213 = vmatpush.msra.mxu0 %v3732
        %4214 = vmatmul.f32.gmra.mxu0 %v385
        %v4215 = vpop.f32.mrf.mxu0
        %v4216 = vadd.f32 0.0, %v4215
        %4217 = vmatmul.f32.gmra.mxu0 %v388
        %v4218 = vpop.f32.mrf.mxu0
        %v4219 = vadd.f32 0.0, %v4218
        %4220 = vdwg.mxu0
        %4221 = vmatpush.msra.mxu0 0.0
        %4222 = vmatpush.msra.mxu0 0.0
        %4223 = vmatpush.msra.mxu0 0.0
        %4224 = vmatpush.msra.mxu0 0.0
        %4225 = vmatpush.msra.mxu0 0.0
        %4226 = vmatpush.msra.mxu0 0.0
        %4227 = vmatpush.msra.mxu0 0.0
        %4228 = vmatpush.msra.mxu0 0.0
        %4229 = vmatpush.msra.mxu0 0.0
        %4230 = vmatpush.msra.mxu0 0.0
        %4231 = vmatpush.msra.mxu0 0.0
        %4232 = vmatpush.msra.mxu0 0.0
        %4233 = vmatpush.msra.mxu0 0.0
        %4234 = vmatpush.msra.mxu0 0.0
        %4235 = vmatpush.msra.mxu0 %v3735
        %4236 = vmatpush.msra.mxu0 %v3734
        %4237 = vmatmul.f32.gmra.mxu0 %v385
        %v4238 = vpop.f32.mrf.mxu0
        %v4239 = vadd.f32 0.0, %v4238
        %4240 = vmatmul.f32.gmra.mxu0 %v388
        %v4241 = vpop.f32.mrf.mxu0
        %v4242 = vadd.f32 0.0, %v4241
        %4243 = vdwg.mxu0
        %4244 = vmatpush.msra.mxu0 0.0
        %4245 = vmatpush.msra.mxu0 0.0
        %4246 = vmatpush.msra.mxu0 0.0
        %4247 = vmatpush.msra.mxu0 0.0
        %4248 = vmatpush.msra.mxu0 0.0
        %4249 = vmatpush.msra.mxu0 0.0
        %4250 = vmatpush.msra.mxu0 0.0
        %4251 = vmatpush.msra.mxu0 0.0
        %4252 = vmatpush.msra.mxu0 0.0
        %4253 = vmatpush.msra.mxu0 0.0
        %4254 = vmatpush.msra.mxu0 0.0
        %4255 = vmatpush.msra.mxu0 0.0
        %4256 = vmatpush.msra.mxu0 0.0
        %4257 = vmatpush.msra.mxu0 0.0
        %4258 = vmatpush.msra.mxu0 %v3737
        %4259 = vmatpush.msra.mxu0 %v3736
        %4260 = vmatmul.f32.gmra.mxu0 %v437
        %v4261 = vpop.f32.mrf.mxu0
        %v4262 = vadd.f32 0.0, %v4261
        %4263 = vmatmul.f32.gmra.mxu0 %v440
        %v4264 = vpop.f32.mrf.mxu0
        %v4265 = vadd.f32 0.0, %v4264
        %4266 = vdwg.mxu0
        %4267 = vmatpush.msra.mxu0 0.0
        %4268 = vmatpush.msra.mxu0 0.0
        %4269 = vmatpush.msra.mxu0 0.0
        %4270 = vmatpush.msra.mxu0 0.0
        %4271 = vmatpush.msra.mxu0 0.0
        %4272 = vmatpush.msra.mxu0 0.0
        %4273 = vmatpush.msra.mxu0 0.0
        %4274 = vmatpush.msra.mxu0 0.0
        %4275 = vmatpush.msra.mxu0 0.0
        %4276 = vmatpush.msra.mxu0 0.0
        %4277 = vmatpush.msra.mxu0 0.0
        %4278 = vmatpush.msra.mxu0 0.0
        %4279 = vmatpush.msra.mxu0 0.0
        %4280 = vmatpush.msra.mxu0 0.0
        %4281 = vmatpush.msra.mxu0 %v3739
        %4282 = vmatpush.msra.mxu0 %v3738
        %4283 = vmatmul.f32.gmra.mxu0 %v437
        %v4284 = vpop.f32.mrf.mxu0
        %v4285 = vadd.f32 0.0, %v4284
        %4286 = vmatmul.f32.gmra.mxu0 %v440
        %v4287 = vpop.f32.mrf.mxu0
        %v4288 = vadd.f32 0.0, %v4287
        %4289 = vdwg.mxu0
        %4290 = vmatpush.msra.mxu0 0.0
        %4291 = vmatpush.msra.mxu0 0.0
        %4292 = vmatpush.msra.mxu0 0.0
        %4293 = vmatpush.msra.mxu0 0.0
        %4294 = vmatpush.msra.mxu0 0.0
        %4295 = vmatpush.msra.mxu0 0.0
        %4296 = vmatpush.msra.mxu0 0.0
        %4297 = vmatpush.msra.mxu0 0.0
        %4298 = vmatpush.msra.mxu0 0.0
        %4299 = vmatpush.msra.mxu0 0.0
        %4300 = vmatpush.msra.mxu0 0.0
        %4301 = vmatpush.msra.mxu0 0.0
        %4302 = vmatpush.msra.mxu0 0.0
        %4303 = vmatpush.msra.mxu0 0.0
        %4304 = vmatpush.msra.mxu0 %v3741
        %4305 = vmatpush.msra.mxu0 %v3740
        %4306 = vmatmul.f32.gmra.mxu0 %v489
        %v4307 = vpop.f32.mrf.mxu0
        %v4308 = vadd.f32 0.0, %v4307
        %4309 = vmatmul.f32.gmra.mxu0 %v492
        %v4310 = vpop.f32.mrf.mxu0
        %v4311 = vadd.f32 0.0, %v4310
        %4312 = vdwg.mxu0
        %4313 = vmatpush.msra.mxu0 0.0
        %4314 = vmatpush.msra.mxu0 0.0
        %4315 = vmatpush.msra.mxu0 0.0
        %4316 = vmatpush.msra.mxu0 0.0
        %4317 = vmatpush.msra.mxu0 0.0
        %4318 = vmatpush.msra.mxu0 0.0
        %4319 = vmatpush.msra.mxu0 0.0
        %4320 = vmatpush.msra.mxu0 0.0
        %4321 = vmatpush.msra.mxu0 0.0
        %4322 = vmatpush.msra.mxu0 0.0
        %4323 = vmatpush.msra.mxu0 0.0
        %4324 = vmatpush.msra.mxu0 0.0
        %4325 = vmatpush.msra.mxu0 0.0
        %4326 = vmatpush.msra.mxu0 0.0
        %4327 = vmatpush.msra.mxu0 %v3743
        %4328 = vmatpush.msra.mxu0 %v3742
        %4329 = vmatmul.f32.gmra.mxu0 %v489
        %v4330 = vpop.f32.mrf.mxu0
        %v4331 = vadd.f32 0.0, %v4330
        %4332 = vmatmul.f32.gmra.mxu0 %v492
        %v4333 = vpop.f32.mrf.mxu0
        %v4334 = vadd.f32 0.0, %v4333
        %4335 = vdwg.mxu0
        %4336 = vmatpush.msra.mxu0 0.0
        %4337 = vmatpush.msra.mxu0 0.0
        %4338 = vmatpush.msra.mxu0 0.0
        %4339 = vmatpush.msra.mxu0 0.0
        %4340 = vmatpush.msra.mxu0 0.0
        %4341 = vmatpush.msra.mxu0 0.0
        %4342 = vmatpush.msra.mxu0 0.0
        %4343 = vmatpush.msra.mxu0 0.0
        %4344 = vmatpush.msra.mxu0 0.0
        %4345 = vmatpush.msra.mxu0 0.0
        %4346 = vmatpush.msra.mxu0 0.0
        %4347 = vmatpush.msra.mxu0 0.0
        %4348 = vmatpush.msra.mxu0 0.0
        %4349 = vmatpush.msra.mxu0 0.0
        %4350 = vmatpush.msra.mxu0 %v3745
        %4351 = vmatpush.msra.mxu0 %v3744
        %4352 = vmatmul.f32.gmra.mxu0 %v541
        %v4353 = vpop.f32.mrf.mxu0
        %v4354 = vadd.f32 0.0, %v4353
        %4355 = vmatmul.f32.gmra.mxu0 %v544
        %v4356 = vpop.f32.mrf.mxu0
        %v4357 = vadd.f32 0.0, %v4356
        %4358 = vdwg.mxu0
        %4359 = vmatpush.msra.mxu0 0.0
        %4360 = vmatpush.msra.mxu0 0.0
        %4361 = vmatpush.msra.mxu0 0.0
        %4362 = vmatpush.msra.mxu0 0.0
        %4363 = vmatpush.msra.mxu0 0.0
        %4364 = vmatpush.msra.mxu0 0.0
        %4365 = vmatpush.msra.mxu0 0.0
        %4366 = vmatpush.msra.mxu0 0.0
        %4367 = vmatpush.msra.mxu0 0.0
        %4368 = vmatpush.msra.mxu0 0.0
        %4369 = vmatpush.msra.mxu0 0.0
        %4370 = vmatpush.msra.mxu0 0.0
        %4371 = vmatpush.msra.mxu0 0.0
        %4372 = vmatpush.msra.mxu0 0.0
        %4373 = vmatpush.msra.mxu0 %v3747
        %4374 = vmatpush.msra.mxu0 %v3746
        %4375 = vmatmul.f32.gmra.mxu0 %v541
        %v4376 = vpop.f32.mrf.mxu0
        %v4377 = vadd.f32 0.0, %v4376
        %4378 = vmatmul.f32.gmra.mxu0 %v544
        %v4379 = vpop.f32.mrf.mxu0
        %v4380 = vadd.f32 0.0, %v4379
        %4381 = vdwg.mxu0
        %4382 = vmatpush.msra.mxu0 0.0
        %4383 = vmatpush.msra.mxu0 0.0
        %4384 = vmatpush.msra.mxu0 0.0
        %4385 = vmatpush.msra.mxu0 0.0
        %4386 = vmatpush.msra.mxu0 0.0
        %4387 = vmatpush.msra.mxu0 0.0
        %4388 = vmatpush.msra.mxu0 0.0
        %4389 = vmatpush.msra.mxu0 0.0
        %4390 = vmatpush.msra.mxu0 0.0
        %4391 = vmatpush.msra.mxu0 0.0
        %4392 = vmatpush.msra.mxu0 0.0
        %4393 = vmatpush.msra.mxu0 0.0
        %4394 = vmatpush.msra.mxu0 0.0
        %4395 = vmatpush.msra.mxu0 0.0
        %4396 = vmatpush.msra.mxu0 %v3749
        %4397 = vmatpush.msra.mxu0 %v3748
        %4398 = vmatmul.f32.gmra.mxu0 %v593
        %v4399 = vpop.f32.mrf.mxu0
        %v4400 = vadd.f32 0.0, %v4399
        %4401 = vmatmul.f32.gmra.mxu0 %v596
        %v4402 = vpop.f32.mrf.mxu0
        %v4403 = vadd.f32 0.0, %v4402
        %4404 = vdwg.mxu0
        %4405 = vmatpush.msra.mxu0 0.0
        %4406 = vmatpush.msra.mxu0 0.0
        %4407 = vmatpush.msra.mxu0 0.0
        %4408 = vmatpush.msra.mxu0 0.0
        %4409 = vmatpush.msra.mxu0 0.0
        %4410 = vmatpush.msra.mxu0 0.0
        %4411 = vmatpush.msra.mxu0 0.0
        %4412 = vmatpush.msra.mxu0 0.0
        %4413 = vmatpush.msra.mxu0 0.0
        %4414 = vmatpush.msra.mxu0 0.0
        %4415 = vmatpush.msra.mxu0 0.0
        %4416 = vmatpush.msra.mxu0 0.0
        %4417 = vmatpush.msra.mxu0 0.0
        %4418 = vmatpush.msra.mxu0 0.0
        %4419 = vmatpush.msra.mxu0 %v3751
        %4420 = vmatpush.msra.mxu0 %v3750
        %4421 = vmatmul.f32.gmra.mxu0 %v593
        %v4422 = vpop.f32.mrf.mxu0
        %v4423 = vadd.f32 0.0, %v4422
        %4424 = vmatmul.f32.gmra.mxu0 %v596
        %v4425 = vpop.f32.mrf.mxu0
        %v4426 = vadd.f32 0.0, %v4425
        %4427 = vdwg.mxu0
        %4428 = vmatpush.msra.mxu0 0.0
        %4429 = vmatpush.msra.mxu0 0.0
        %4430 = vmatpush.msra.mxu0 0.0
        %4431 = vmatpush.msra.mxu0 0.0
        %4432 = vmatpush.msra.mxu0 0.0
        %4433 = vmatpush.msra.mxu0 0.0
        %4434 = vmatpush.msra.mxu0 0.0
        %4435 = vmatpush.msra.mxu0 0.0
        %4436 = vmatpush.msra.mxu0 0.0
        %4437 = vmatpush.msra.mxu0 0.0
        %4438 = vmatpush.msra.mxu0 0.0
        %4439 = vmatpush.msra.mxu0 0.0
        %4440 = vmatpush.msra.mxu0 0.0
        %4441 = vmatpush.msra.mxu0 0.0
        %4442 = vmatpush.msra.mxu0 %v3753
        %4443 = vmatpush.msra.mxu0 %v3752
        %4444 = vmatmul.f32.gmra.mxu0 %v645
        %v4445 = vpop.f32.mrf.mxu0
        %v4446 = vadd.f32 0.0, %v4445
        %4447 = vmatmul.f32.gmra.mxu0 %v648
        %v4448 = vpop.f32.mrf.mxu0
        %v4449 = vadd.f32 0.0, %v4448
        %4450 = vdwg.mxu0
        %4451 = vmatpush.msra.mxu0 0.0
        %4452 = vmatpush.msra.mxu0 0.0
        %4453 = vmatpush.msra.mxu0 0.0
        %4454 = vmatpush.msra.mxu0 0.0
        %4455 = vmatpush.msra.mxu0 0.0
        %4456 = vmatpush.msra.mxu0 0.0
        %4457 = vmatpush.msra.mxu0 0.0
        %4458 = vmatpush.msra.mxu0 0.0
        %4459 = vmatpush.msra.mxu0 0.0
        %4460 = vmatpush.msra.mxu0 0.0
        %4461 = vmatpush.msra.mxu0 0.0
        %4462 = vmatpush.msra.mxu0 0.0
        %4463 = vmatpush.msra.mxu0 0.0
        %4464 = vmatpush.msra.mxu0 0.0
        %4465 = vmatpush.msra.mxu0 %v3755
        %4466 = vmatpush.msra.mxu0 %v3754
        %4467 = vmatmul.f32.gmra.mxu0 %v645
        %v4468 = vpop.f32.mrf.mxu0
        %v4469 = vadd.f32 0.0, %v4468
        %4470 = vmatmul.f32.gmra.mxu0 %v648
        %v4471 = vpop.f32.mrf.mxu0
        %v4472 = vadd.f32 0.0, %v4471
        %4473 = vdwg.mxu0
        %4474 = vmatpush.msra.mxu0 0.0
        %4475 = vmatpush.msra.mxu0 0.0
        %4476 = vmatpush.msra.mxu0 0.0
        %4477 = vmatpush.msra.mxu0 0.0
        %4478 = vmatpush.msra.mxu0 0.0
        %4479 = vmatpush.msra.mxu0 0.0
        %4480 = vmatpush.msra.mxu0 0.0
        %4481 = vmatpush.msra.mxu0 0.0
        %4482 = vmatpush.msra.mxu0 0.0
        %4483 = vmatpush.msra.mxu0 0.0
        %4484 = vmatpush.msra.mxu0 0.0
        %4485 = vmatpush.msra.mxu0 0.0
        %4486 = vmatpush.msra.mxu0 0.0
        %4487 = vmatpush.msra.mxu0 0.0
        %4488 = vmatpush.msra.mxu0 %v3757
        %4489 = vmatpush.msra.mxu0 %v3756
        %4490 = vmatmul.f32.gmra.mxu0 %v697
        %v4491 = vpop.f32.mrf.mxu0
        %v4492 = vadd.f32 0.0, %v4491
        %4493 = vmatmul.f32.gmra.mxu0 %v700
        %v4494 = vpop.f32.mrf.mxu0
        %v4495 = vadd.f32 0.0, %v4494
        %4496 = vdwg.mxu0
        %4497 = vmatpush.msra.mxu0 0.0
        %4498 = vmatpush.msra.mxu0 0.0
        %4499 = vmatpush.msra.mxu0 0.0
        %4500 = vmatpush.msra.mxu0 0.0
        %4501 = vmatpush.msra.mxu0 0.0
        %4502 = vmatpush.msra.mxu0 0.0
        %4503 = vmatpush.msra.mxu0 0.0
        %4504 = vmatpush.msra.mxu0 0.0
        %4505 = vmatpush.msra.mxu0 0.0
        %4506 = vmatpush.msra.mxu0 0.0
        %4507 = vmatpush.msra.mxu0 0.0
        %4508 = vmatpush.msra.mxu0 0.0
        %4509 = vmatpush.msra.mxu0 0.0
        %4510 = vmatpush.msra.mxu0 0.0
        %4511 = vmatpush.msra.mxu0 %v3759
        %4512 = vmatpush.msra.mxu0 %v3758
        %4513 = vmatmul.f32.gmra.mxu0 %v697
        %v4514 = vpop.f32.mrf.mxu0
        %v4515 = vadd.f32 0.0, %v4514
        %4516 = vmatmul.f32.gmra.mxu0 %v700
        %v4517 = vpop.f32.mrf.mxu0
        %v4518 = vadd.f32 0.0, %v4517
        %4519 = vdwg.mxu0
        %4520 = vmatpush.msra.mxu0 0.0
        %4521 = vmatpush.msra.mxu0 0.0
        %4522 = vmatpush.msra.mxu0 0.0
        %4523 = vmatpush.msra.mxu0 0.0
        %4524 = vmatpush.msra.mxu0 0.0
        %4525 = vmatpush.msra.mxu0 0.0
        %4526 = vmatpush.msra.mxu0 0.0
        %4527 = vmatpush.msra.mxu0 0.0
        %4528 = vmatpush.msra.mxu0 0.0
        %4529 = vmatpush.msra.mxu0 0.0
        %4530 = vmatpush.msra.mxu0 0.0
        %4531 = vmatpush.msra.mxu0 0.0
        %4532 = vmatpush.msra.mxu0 0.0
        %4533 = vmatpush.msra.mxu0 0.0
        %4534 = vmatpush.msra.mxu0 %v3761
        %4535 = vmatpush.msra.mxu0 %v3760
        %4536 = vmatmul.f32.gmra.mxu0 %v749
        %v4537 = vpop.f32.mrf.mxu0
        %v4538 = vadd.f32 0.0, %v4537
        %4539 = vmatmul.f32.gmra.mxu0 %v752
        %v4540 = vpop.f32.mrf.mxu0
        %v4541 = vadd.f32 0.0, %v4540
        %4542 = vdwg.mxu0
        %4543 = vmatpush.msra.mxu0 0.0
        %4544 = vmatpush.msra.mxu0 0.0
        %4545 = vmatpush.msra.mxu0 0.0
        %4546 = vmatpush.msra.mxu0 0.0
        %4547 = vmatpush.msra.mxu0 0.0
        %4548 = vmatpush.msra.mxu0 0.0
        %4549 = vmatpush.msra.mxu0 0.0
        %4550 = vmatpush.msra.mxu0 0.0
        %4551 = vmatpush.msra.mxu0 0.0
        %4552 = vmatpush.msra.mxu0 0.0
        %4553 = vmatpush.msra.mxu0 0.0
        %4554 = vmatpush.msra.mxu0 0.0
        %4555 = vmatpush.msra.mxu0 0.0
        %4556 = vmatpush.msra.mxu0 0.0
        %4557 = vmatpush.msra.mxu0 %v3763
        %4558 = vmatpush.msra.mxu0 %v3762
        %4559 = vmatmul.f32.gmra.mxu0 %v749
        %v4560 = vpop.f32.mrf.mxu0
        %v4561 = vadd.f32 0.0, %v4560
        %4562 = vmatmul.f32.gmra.mxu0 %v752
        %v4563 = vpop.f32.mrf.mxu0
        %v4564 = vadd.f32 0.0, %v4563
        %4565 = vdwg.mxu0
        %v4566 = vadd.f32 %v3732, %v4216
        %v4567 = vadd.f32 %v3733, %v4219
        %v4568 = vadd.f32 %v3734, %v4239
        %v4569 = vadd.f32 %v3735, %v4242
        %v4570 = vadd.f32 %v3736, %v4262
        %v4571 = vadd.f32 %v3737, %v4265
        %v4572 = vadd.f32 %v3738, %v4285
        %v4573 = vadd.f32 %v3739, %v4288
        %v4574 = vadd.f32 %v3740, %v4308
        %v4575 = vadd.f32 %v3741, %v4311
        %v4576 = vadd.f32 %v3742, %v4331
        %v4577 = vadd.f32 %v3743, %v4334
        %v4578 = vadd.f32 %v3744, %v4354
        %v4579 = vadd.f32 %v3745, %v4357
        %v4580 = vadd.f32 %v3746, %v4377
        %v4581 = vadd.f32 %v3747, %v4380
        %v4582 = vadd.f32 %v3748, %v4400
        %v4583 = vadd.f32 %v3749, %v4403
        %v4584 = vadd.f32 %v3750, %v4423
        %v4585 = vadd.f32 %v3751, %v4426
        %v4586 = vadd.f32 %v3752, %v4446
        %v4587 = vadd.f32 %v3753, %v4449
        %v4588 = vadd.f32 %v3754, %v4469
        %v4589 = vadd.f32 %v3755, %v4472
        %v4590 = vadd.f32 %v3756, %v4492
        %v4591 = vadd.f32 %v3757, %v4495
        %v4592 = vadd.f32 %v3758, %v4515
        %v4593 = vadd.f32 %v3759, %v4518
        %v4594 = vadd.f32 %v3760, %v4538
        %v4595 = vadd.f32 %v3761, %v4541
        %v4596 = vadd.f32 %v3762, %v4561
        %v4597 = vadd.f32 %v3763, %v4564
        %v4598 = vperm.slane %v4194, 0
        %v4600 = vsel %vm833, %v4566, 0
        %v4603 = vsel %vm833, %v4567, 0
        %v4606 = vsel %vm833, %v4568, 0
        %v4609 = vsel %vm833, %v4569, 0
        %v4612 = vsel %vm833, %v4570, 0
        %v4615 = vsel %vm833, %v4571, 0
        %v4618 = vsel %vm833, %v4572, 0
        %v4621 = vsel %vm833, %v4573, 0
        %v4624 = vsel %vm833, %v4574, 0
        %v4627 = vsel %vm833, %v4575, 0
        %v4630 = vsel %vm833, %v4576, 0
        %v4633 = vsel %vm833, %v4577, 0
        %v4636 = vsel %vm833, %v4578, 0
        %v4639 = vsel %vm833, %v4579, 0
        %v4642 = vsel %vm833, %v4580, 0
        %v4645 = vsel %vm833, %v4581, 0
        %v4648 = vsel %vm833, %v4582, 0
        %v4651 = vsel %vm833, %v4583, 0
        %v4654 = vsel %vm833, %v4584, 0
        %v4657 = vsel %vm833, %v4585, 0
        %v4660 = vsel %vm833, %v4586, 0
        %v4663 = vsel %vm833, %v4587, 0
        %v4666 = vsel %vm833, %v4588, 0
        %v4669 = vsel %vm833, %v4589, 0
        %v4672 = vsel %vm833, %v4590, 0
        %v4675 = vsel %vm833, %v4591, 0
        %v4678 = vsel %vm833, %v4592, 0
        %v4681 = vsel %vm833, %v4593, 0
        %v4684 = vsel %vm833, %v4594, 0
        %v4687 = vsel %vm833, %v4595, 0
        %v4690 = vsel %vm833, %v4596, 0
        %v4693 = vsel %vm833, %v4597, 0
        %4695 = vmatpush.msra.mxu0 0.0
        %4696 = vmatpush.msra.mxu0 0.0
        %4697 = vmatpush.msra.mxu0 0.0
        %4698 = vmatpush.msra.mxu0 0.0
        %4699 = vmatpush.msra.mxu0 0.0
        %4700 = vmatpush.msra.mxu0 0.0
        %4701 = vmatpush.msra.mxu0 0.0
        %4702 = vmatpush.msra.mxu0 0.0
        %4703 = vmatpush.msra.mxu0 0.0
        %4704 = vmatpush.msra.mxu0 0.0
        %4705 = vmatpush.msra.mxu0 0.0
        %4706 = vmatpush.msra.mxu0 0.0
        %4707 = vmatpush.msra.mxu0 %v4185
        %4708 = vmatpush.msra.mxu0 %v4184
        %4709 = vmatpush.msra.mxu0 %v4183
        %4710 = vmatpush.msra.mxu0 %v4182
        %4711 = vmatmul.f32.gmra.mxu0 %v4600
        %v4712 = vpop.f32.mrf.mxu0
        %v4713 = vadd.f32 %v4598, %v4712
        %4714 = vmatmul.f32.gmra.mxu0 %v4603
        %v4715 = vpop.f32.mrf.mxu0
        %v4716 = vadd.f32 %v4598, %v4715
        %4717 = vmatmul.f32.gmra.mxu0 %v4606
        %v4718 = vpop.f32.mrf.mxu0
        %v4719 = vadd.f32 %v4598, %v4718
        %4720 = vmatmul.f32.gmra.mxu0 %v4609
        %v4721 = vpop.f32.mrf.mxu0
        %v4722 = vadd.f32 %v4598, %v4721
        %4723 = vmatmul.f32.gmra.mxu0 %v4612
        %v4724 = vpop.f32.mrf.mxu0
        %v4725 = vadd.f32 %v4598, %v4724
        %4726 = vmatmul.f32.gmra.mxu0 %v4615
        %v4727 = vpop.f32.mrf.mxu0
        %v4728 = vadd.f32 %v4598, %v4727
        %4729 = vmatmul.f32.gmra.mxu0 %v4618
        %v4730 = vpop.f32.mrf.mxu0
        %v4731 = vadd.f32 %v4598, %v4730
        %4732 = vmatmul.f32.gmra.mxu0 %v4621
        %v4733 = vpop.f32.mrf.mxu0
        %v4734 = vadd.f32 %v4598, %v4733
        %4735 = vmatmul.f32.gmra.mxu0 %v4624
        %v4736 = vpop.f32.mrf.mxu0
        %v4737 = vadd.f32 %v4598, %v4736
        %4738 = vmatmul.f32.gmra.mxu0 %v4627
        %v4739 = vpop.f32.mrf.mxu0
        %v4740 = vadd.f32 %v4598, %v4739
        %4741 = vmatmul.f32.gmra.mxu0 %v4630
        %v4742 = vpop.f32.mrf.mxu0
        %v4743 = vadd.f32 %v4598, %v4742
        %4744 = vmatmul.f32.gmra.mxu0 %v4633
        %v4745 = vpop.f32.mrf.mxu0
        %v4746 = vadd.f32 %v4598, %v4745
        %4747 = vmatmul.f32.gmra.mxu0 %v4636
        %v4748 = vpop.f32.mrf.mxu0
        %v4749 = vadd.f32 %v4598, %v4748
        %4750 = vmatmul.f32.gmra.mxu0 %v4639
        %v4751 = vpop.f32.mrf.mxu0
        %v4752 = vadd.f32 %v4598, %v4751
        %4753 = vmatmul.f32.gmra.mxu0 %v4642
        %v4754 = vpop.f32.mrf.mxu0
        %v4755 = vadd.f32 %v4598, %v4754
        %4756 = vmatmul.f32.gmra.mxu0 %v4645
        %v4757 = vpop.f32.mrf.mxu0
        %v4758 = vadd.f32 %v4598, %v4757
        %4759 = vmatmul.f32.gmra.mxu0 %v4648
        %v4760 = vpop.f32.mrf.mxu0
        %v4761 = vadd.f32 %v4598, %v4760
        %4762 = vmatmul.f32.gmra.mxu0 %v4651
        %v4763 = vpop.f32.mrf.mxu0
        %v4764 = vadd.f32 %v4598, %v4763
        %4765 = vmatmul.f32.gmra.mxu0 %v4654
        %v4766 = vpop.f32.mrf.mxu0
        %v4767 = vadd.f32 %v4598, %v4766
        %4768 = vmatmul.f32.gmra.mxu0 %v4657
        %v4769 = vpop.f32.mrf.mxu0
        %v4770 = vadd.f32 %v4598, %v4769
        %4771 = vmatmul.f32.gmra.mxu0 %v4660
        %v4772 = vpop.f32.mrf.mxu0
        %v4773 = vadd.f32 %v4598, %v4772
        %4774 = vmatmul.f32.gmra.mxu0 %v4663
        %v4775 = vpop.f32.mrf.mxu0
        %v4776 = vadd.f32 %v4598, %v4775
        %4777 = vmatmul.f32.gmra.mxu0 %v4666
        %v4778 = vpop.f32.mrf.mxu0
        %v4779 = vadd.f32 %v4598, %v4778
        %4780 = vmatmul.f32.gmra.mxu0 %v4669
        %v4781 = vpop.f32.mrf.mxu0
        %v4782 = vadd.f32 %v4598, %v4781
        %4783 = vmatmul.f32.gmra.mxu0 %v4672
        %v4784 = vpop.f32.mrf.mxu0
        %v4785 = vadd.f32 %v4598, %v4784
        %4786 = vmatmul.f32.gmra.mxu0 %v4675
        %v4787 = vpop.f32.mrf.mxu0
        %v4788 = vadd.f32 %v4598, %v4787
        %4789 = vmatmul.f32.gmra.mxu0 %v4678
        %v4790 = vpop.f32.mrf.mxu0
        %v4791 = vadd.f32 %v4598, %v4790
        %4792 = vmatmul.f32.gmra.mxu0 %v4681
        %v4793 = vpop.f32.mrf.mxu0
        %v4794 = vadd.f32 %v4598, %v4793
        %4795 = vmatmul.f32.gmra.mxu0 %v4684
        %v4796 = vpop.f32.mrf.mxu0
        %v4797 = vadd.f32 %v4598, %v4796
        %4798 = vmatmul.f32.gmra.mxu0 %v4687
        %v4799 = vpop.f32.mrf.mxu0
        %v4800 = vadd.f32 %v4598, %v4799
        %4801 = vmatmul.f32.gmra.mxu0 %v4690
        %v4802 = vpop.f32.mrf.mxu0
        %v4803 = vadd.f32 %v4598, %v4802
        %4804 = vmatmul.f32.gmra.mxu0 %v4693
        %v4805 = vpop.f32.mrf.mxu0
        %v4806 = vadd.f32 %v4598, %v4805
        %4807 = vdwg.mxu0
        %v4808 = vmax.f32 %v4713, 0.0
        %v4809 = vmax.f32 %v4716, 0.0
        %v4810 = vmax.f32 %v4719, 0.0
        %v4811 = vmax.f32 %v4722, 0.0
        %v4812 = vmax.f32 %v4725, 0.0
        %v4813 = vmax.f32 %v4728, 0.0
        %v4814 = vmax.f32 %v4731, 0.0
        %v4815 = vmax.f32 %v4734, 0.0
        %v4816 = vmax.f32 %v4737, 0.0
        %v4817 = vmax.f32 %v4740, 0.0
        %v4818 = vmax.f32 %v4743, 0.0
        %v4819 = vmax.f32 %v4746, 0.0
        %v4820 = vmax.f32 %v4749, 0.0
        %v4821 = vmax.f32 %v4752, 0.0
        %v4822 = vmax.f32 %v4755, 0.0
        %v4823 = vmax.f32 %v4758, 0.0
        %v4824 = vmax.f32 %v4761, 0.0
        %v4825 = vmax.f32 %v4764, 0.0
        %v4826 = vmax.f32 %v4767, 0.0
        %v4827 = vmax.f32 %v4770, 0.0
        %v4828 = vmax.f32 %v4773, 0.0
        %v4829 = vmax.f32 %v4776, 0.0
        %v4830 = vmax.f32 %v4779, 0.0
        %v4831 = vmax.f32 %v4782, 0.0
        %v4832 = vmax.f32 %v4785, 0.0
        %v4833 = vmax.f32 %v4788, 0.0
        %v4834 = vmax.f32 %v4791, 0.0
        %v4835 = vmax.f32 %v4794, 0.0
        %v4836 = vmax.f32 %v4797, 0.0
        %v4837 = vmax.f32 %v4800, 0.0
        %v4838 = vmax.f32 %v4803, 0.0
        %v4839 = vmax.f32 %v4806, 0.0
        %v4840 = vperm.slane %v4195, 0
        %v4842 = vsel %vm833, %v4808, 0
        %v4845 = vsel %vm833, %v4809, 0
        %v4848 = vsel %vm833, %v4810, 0
        %v4851 = vsel %vm833, %v4811, 0
        %v4854 = vsel %vm833, %v4812, 0
        %v4857 = vsel %vm833, %v4813, 0
        %v4860 = vsel %vm833, %v4814, 0
        %v4863 = vsel %vm833, %v4815, 0
        %v4866 = vsel %vm833, %v4816, 0
        %v4869 = vsel %vm833, %v4817, 0
        %v4872 = vsel %vm833, %v4818, 0
        %v4875 = vsel %vm833, %v4819, 0
        %v4878 = vsel %vm833, %v4820, 0
        %v4881 = vsel %vm833, %v4821, 0
        %v4884 = vsel %vm833, %v4822, 0
        %v4887 = vsel %vm833, %v4823, 0
        %v4890 = vsel %vm833, %v4824, 0
        %v4893 = vsel %vm833, %v4825, 0
        %v4896 = vsel %vm833, %v4826, 0
        %v4899 = vsel %vm833, %v4827, 0
        %v4902 = vsel %vm833, %v4828, 0
        %v4905 = vsel %vm833, %v4829, 0
        %v4908 = vsel %vm833, %v4830, 0
        %v4911 = vsel %vm833, %v4831, 0
        %v4914 = vsel %vm833, %v4832, 0
        %v4917 = vsel %vm833, %v4833, 0
        %v4920 = vsel %vm833, %v4834, 0
        %v4923 = vsel %vm833, %v4835, 0
        %v4926 = vsel %vm833, %v4836, 0
        %v4929 = vsel %vm833, %v4837, 0
        %v4932 = vsel %vm833, %v4838, 0
        %v4935 = vsel %vm833, %v4839, 0
        %4937 = vmatpush.msra.mxu0 0.0
        %4938 = vmatpush.msra.mxu0 0.0
        %4939 = vmatpush.msra.mxu0 0.0
        %4940 = vmatpush.msra.mxu0 0.0
        %4941 = vmatpush.msra.mxu0 0.0
        %4942 = vmatpush.msra.mxu0 0.0
        %4943 = vmatpush.msra.mxu0 0.0
        %4944 = vmatpush.msra.mxu0 0.0
        %4945 = vmatpush.msra.mxu0 0.0
        %4946 = vmatpush.msra.mxu0 0.0
        %4947 = vmatpush.msra.mxu0 0.0
        %4948 = vmatpush.msra.mxu0 0.0
        %4949 = vmatpush.msra.mxu0 %v4189
        %4950 = vmatpush.msra.mxu0 %v4188
        %4951 = vmatpush.msra.mxu0 %v4187
        %4952 = vmatpush.msra.mxu0 %v4186
        %4953 = vmatmul.f32.gmra.mxu0 %v4842
        %v4954 = vpop.f32.mrf.mxu0
        %v4955 = vadd.f32 %v4840, %v4954
        %4956 = vmatmul.f32.gmra.mxu0 %v4845
        %v4957 = vpop.f32.mrf.mxu0
        %v4958 = vadd.f32 %v4840, %v4957
        %4959 = vmatmul.f32.gmra.mxu0 %v4848
        %v4960 = vpop.f32.mrf.mxu0
        %v4961 = vadd.f32 %v4840, %v4960
        %4962 = vmatmul.f32.gmra.mxu0 %v4851
        %v4963 = vpop.f32.mrf.mxu0
        %v4964 = vadd.f32 %v4840, %v4963
        %4965 = vmatmul.f32.gmra.mxu0 %v4854
        %v4966 = vpop.f32.mrf.mxu0
        %v4967 = vadd.f32 %v4840, %v4966
        %4968 = vmatmul.f32.gmra.mxu0 %v4857
        %v4969 = vpop.f32.mrf.mxu0
        %v4970 = vadd.f32 %v4840, %v4969
        %4971 = vmatmul.f32.gmra.mxu0 %v4860
        %v4972 = vpop.f32.mrf.mxu0
        %v4973 = vadd.f32 %v4840, %v4972
        %4974 = vmatmul.f32.gmra.mxu0 %v4863
        %v4975 = vpop.f32.mrf.mxu0
        %v4976 = vadd.f32 %v4840, %v4975
        %4977 = vmatmul.f32.gmra.mxu0 %v4866
        %v4978 = vpop.f32.mrf.mxu0
        %v4979 = vadd.f32 %v4840, %v4978
        %4980 = vmatmul.f32.gmra.mxu0 %v4869
        %v4981 = vpop.f32.mrf.mxu0
        %v4982 = vadd.f32 %v4840, %v4981
        %4983 = vmatmul.f32.gmra.mxu0 %v4872
        %v4984 = vpop.f32.mrf.mxu0
        %v4985 = vadd.f32 %v4840, %v4984
        %4986 = vmatmul.f32.gmra.mxu0 %v4875
        %v4987 = vpop.f32.mrf.mxu0
        %v4988 = vadd.f32 %v4840, %v4987
        %4989 = vmatmul.f32.gmra.mxu0 %v4878
        %v4990 = vpop.f32.mrf.mxu0
        %v4991 = vadd.f32 %v4840, %v4990
        %4992 = vmatmul.f32.gmra.mxu0 %v4881
        %v4993 = vpop.f32.mrf.mxu0
        %v4994 = vadd.f32 %v4840, %v4993
        %4995 = vmatmul.f32.gmra.mxu0 %v4884
        %v4996 = vpop.f32.mrf.mxu0
        %v4997 = vadd.f32 %v4840, %v4996
        %4998 = vmatmul.f32.gmra.mxu0 %v4887
        %v4999 = vpop.f32.mrf.mxu0
        %v5000 = vadd.f32 %v4840, %v4999
        %5001 = vmatmul.f32.gmra.mxu0 %v4890
        %v5002 = vpop.f32.mrf.mxu0
        %v5003 = vadd.f32 %v4840, %v5002
        %5004 = vmatmul.f32.gmra.mxu0 %v4893
        %v5005 = vpop.f32.mrf.mxu0
        %v5006 = vadd.f32 %v4840, %v5005
        %5007 = vmatmul.f32.gmra.mxu0 %v4896
        %v5008 = vpop.f32.mrf.mxu0
        %v5009 = vadd.f32 %v4840, %v5008
        %5010 = vmatmul.f32.gmra.mxu0 %v4899
        %v5011 = vpop.f32.mrf.mxu0
        %v5012 = vadd.f32 %v4840, %v5011
        %5013 = vmatmul.f32.gmra.mxu0 %v4902
        %v5014 = vpop.f32.mrf.mxu0
        %v5015 = vadd.f32 %v4840, %v5014
        %5016 = vmatmul.f32.gmra.mxu0 %v4905
        %v5017 = vpop.f32.mrf.mxu0
        %v5018 = vadd.f32 %v4840, %v5017
        %5019 = vmatmul.f32.gmra.mxu0 %v4908
        %v5020 = vpop.f32.mrf.mxu0
        %v5021 = vadd.f32 %v4840, %v5020
        %5022 = vmatmul.f32.gmra.mxu0 %v4911
        %v5023 = vpop.f32.mrf.mxu0
        %v5024 = vadd.f32 %v4840, %v5023
        %5025 = vmatmul.f32.gmra.mxu0 %v4914
        %v5026 = vpop.f32.mrf.mxu0
        %v5027 = vadd.f32 %v4840, %v5026
        %5028 = vmatmul.f32.gmra.mxu0 %v4917
        %v5029 = vpop.f32.mrf.mxu0
        %v5030 = vadd.f32 %v4840, %v5029
        %5031 = vmatmul.f32.gmra.mxu0 %v4920
        %v5032 = vpop.f32.mrf.mxu0
        %v5033 = vadd.f32 %v4840, %v5032
        %5034 = vmatmul.f32.gmra.mxu0 %v4923
        %v5035 = vpop.f32.mrf.mxu0
        %v5036 = vadd.f32 %v4840, %v5035
        %5037 = vmatmul.f32.gmra.mxu0 %v4926
        %v5038 = vpop.f32.mrf.mxu0
        %v5039 = vadd.f32 %v4840, %v5038
        %5040 = vmatmul.f32.gmra.mxu0 %v4929
        %v5041 = vpop.f32.mrf.mxu0
        %v5042 = vadd.f32 %v4840, %v5041
        %5043 = vmatmul.f32.gmra.mxu0 %v4932
        %v5044 = vpop.f32.mrf.mxu0
        %v5045 = vadd.f32 %v4840, %v5044
        %5046 = vmatmul.f32.gmra.mxu0 %v4935
        %v5047 = vpop.f32.mrf.mxu0
        %v5048 = vadd.f32 %v4840, %v5047
        %5049 = vdwg.mxu0
        %v5050 = vmax.f32 %v4955, 0.0
        %v5051 = vmax.f32 %v4958, 0.0
        %v5052 = vmax.f32 %v4961, 0.0
        %v5053 = vmax.f32 %v4964, 0.0
        %v5054 = vmax.f32 %v4967, 0.0
        %v5055 = vmax.f32 %v4970, 0.0
        %v5056 = vmax.f32 %v4973, 0.0
        %v5057 = vmax.f32 %v4976, 0.0
        %v5058 = vmax.f32 %v4979, 0.0
        %v5059 = vmax.f32 %v4982, 0.0
        %v5060 = vmax.f32 %v4985, 0.0
        %v5061 = vmax.f32 %v4988, 0.0
        %v5062 = vmax.f32 %v4991, 0.0
        %v5063 = vmax.f32 %v4994, 0.0
        %v5064 = vmax.f32 %v4997, 0.0
        %v5065 = vmax.f32 %v5000, 0.0
        %v5066 = vmax.f32 %v5003, 0.0
        %v5067 = vmax.f32 %v5006, 0.0
        %v5068 = vmax.f32 %v5009, 0.0
        %v5069 = vmax.f32 %v5012, 0.0
        %v5070 = vmax.f32 %v5015, 0.0
        %v5071 = vmax.f32 %v5018, 0.0
        %v5072 = vmax.f32 %v5021, 0.0
        %v5073 = vmax.f32 %v5024, 0.0
        %v5074 = vmax.f32 %v5027, 0.0
        %v5075 = vmax.f32 %v5030, 0.0
        %v5076 = vmax.f32 %v5033, 0.0
        %v5077 = vmax.f32 %v5036, 0.0
        %v5078 = vmax.f32 %v5039, 0.0
        %v5079 = vmax.f32 %v5042, 0.0
        %v5080 = vmax.f32 %v5045, 0.0
        %v5081 = vmax.f32 %v5048, 0.0
        %v5082 = vsel %vm833, %v5050, 0.0
        %5083 = vadd.xlane.f32.xlu0 %v5082
        %v5084 = vpop.xlane.xlu0 %5083
        %v5085 = vsel %vm833, %v5051, 0.0
        %5086 = vadd.xlane.f32.xlu0 %v5085
        %v5087 = vpop.xlane.xlu0 %5086
        %v5088 = vsel %vm833, %v5052, 0.0
        %5089 = vadd.xlane.f32.xlu0 %v5088
        %v5090 = vpop.xlane.xlu0 %5089
        %v5091 = vsel %vm833, %v5053, 0.0
        %5092 = vadd.xlane.f32.xlu0 %v5091
        %v5093 = vpop.xlane.xlu0 %5092
        %v5094 = vsel %vm833, %v5054, 0.0
        %5095 = vadd.xlane.f32.xlu0 %v5094
        %v5096 = vpop.xlane.xlu0 %5095
        %v5097 = vsel %vm833, %v5055, 0.0
        %5098 = vadd.xlane.f32.xlu0 %v5097
        %v5099 = vpop.xlane.xlu0 %5098
        %v5100 = vsel %vm833, %v5056, 0.0
        %5101 = vadd.xlane.f32.xlu0 %v5100
        %v5102 = vpop.xlane.xlu0 %5101
        %v5103 = vsel %vm833, %v5057, 0.0
        %5104 = vadd.xlane.f32.xlu0 %v5103
        %v5105 = vpop.xlane.xlu0 %5104
        %v5106 = vsel %vm833, %v5058, 0.0
        %5107 = vadd.xlane.f32.xlu0 %v5106
        %v5108 = vpop.xlane.xlu0 %5107
        %v5109 = vsel %vm833, %v5059, 0.0
        %5110 = vadd.xlane.f32.xlu0 %v5109
        %v5111 = vpop.xlane.xlu0 %5110
        %v5112 = vsel %vm833, %v5060, 0.0
        %5113 = vadd.xlane.f32.xlu0 %v5112
        %v5114 = vpop.xlane.xlu0 %5113
        %v5115 = vsel %vm833, %v5061, 0.0
        %5116 = vadd.xlane.f32.xlu0 %v5115
        %v5117 = vpop.xlane.xlu0 %5116
        %v5118 = vsel %vm833, %v5062, 0.0
        %5119 = vadd.xlane.f32.xlu0 %v5118
        %v5120 = vpop.xlane.xlu0 %5119
        %v5121 = vsel %vm833, %v5063, 0.0
        %5122 = vadd.xlane.f32.xlu0 %v5121
        %v5123 = vpop.xlane.xlu0 %5122
        %v5124 = vsel %vm833, %v5064, 0.0
        %5125 = vadd.xlane.f32.xlu0 %v5124
        %v5126 = vpop.xlane.xlu0 %5125
        %v5127 = vsel %vm833, %v5065, 0.0
        %5128 = vadd.xlane.f32.xlu0 %v5127
        %v5129 = vpop.xlane.xlu0 %5128
        %v5130 = vsel %vm833, %v5066, 0.0
        %5131 = vadd.xlane.f32.xlu0 %v5130
        %v5132 = vpop.xlane.xlu0 %5131
        %v5133 = vsel %vm833, %v5067, 0.0
        %5134 = vadd.xlane.f32.xlu0 %v5133
        %v5135 = vpop.xlane.xlu0 %5134
        %v5136 = vsel %vm833, %v5068, 0.0
        %5137 = vadd.xlane.f32.xlu0 %v5136
        %v5138 = vpop.xlane.xlu0 %5137
        %v5139 = vsel %vm833, %v5069, 0.0
        %5140 = vadd.xlane.f32.xlu0 %v5139
        %v5141 = vpop.xlane.xlu0 %5140
        %v5142 = vsel %vm833, %v5070, 0.0
        %5143 = vadd.xlane.f32.xlu0 %v5142
        %v5144 = vpop.xlane.xlu0 %5143
        %v5145 = vsel %vm833, %v5071, 0.0
        %5146 = vadd.xlane.f32.xlu0 %v5145
        %v5147 = vpop.xlane.xlu0 %5146
        %v5148 = vsel %vm833, %v5072, 0.0
        %5149 = vadd.xlane.f32.xlu0 %v5148
        %v5150 = vpop.xlane.xlu0 %5149
        %v5151 = vsel %vm833, %v5073, 0.0
        %5152 = vadd.xlane.f32.xlu0 %v5151
        %v5153 = vpop.xlane.xlu0 %5152
        %v5154 = vsel %vm833, %v5074, 0.0
        %5155 = vadd.xlane.f32.xlu0 %v5154
        %v5156 = vpop.xlane.xlu0 %5155
        %v5157 = vsel %vm833, %v5075, 0.0
        %5158 = vadd.xlane.f32.xlu0 %v5157
        %v5159 = vpop.xlane.xlu0 %5158
        %v5160 = vsel %vm833, %v5076, 0.0
        %5161 = vadd.xlane.f32.xlu0 %v5160
        %v5162 = vpop.xlane.xlu0 %5161
        %v5163 = vsel %vm833, %v5077, 0.0
        %5164 = vadd.xlane.f32.xlu0 %v5163
        %v5165 = vpop.xlane.xlu0 %5164
        %v5166 = vsel %vm833, %v5078, 0.0
        %5167 = vadd.xlane.f32.xlu0 %v5166
        %v5168 = vpop.xlane.xlu0 %5167
        %v5169 = vsel %vm833, %v5079, 0.0
        %5170 = vadd.xlane.f32.xlu0 %v5169
        %v5171 = vpop.xlane.xlu0 %5170
        %v5172 = vsel %vm833, %v5080, 0.0
        %5173 = vadd.xlane.f32.xlu0 %v5172
        %v5174 = vpop.xlane.xlu0 %5173
        %v5175 = vsel %vm833, %v5081, 0.0
        %5176 = vadd.xlane.f32.xlu0 %v5175
        %v5177 = vpop.xlane.xlu0 %5176
        %v5178 = vmul.f32 %v5084, %v1419
        %v5179 = vmul.f32 %v5087, %v1419
        %v5180 = vmul.f32 %v5090, %v1419
        %v5181 = vmul.f32 %v5093, %v1419
        %v5182 = vmul.f32 %v5096, %v1419
        %v5183 = vmul.f32 %v5099, %v1419
        %v5184 = vmul.f32 %v5102, %v1419
        %v5185 = vmul.f32 %v5105, %v1419
        %v5186 = vmul.f32 %v5108, %v1419
        %v5187 = vmul.f32 %v5111, %v1419
        %v5188 = vmul.f32 %v5114, %v1419
        %v5189 = vmul.f32 %v5117, %v1419
        %v5190 = vmul.f32 %v5120, %v1419
        %v5191 = vmul.f32 %v5123, %v1419
        %v5192 = vmul.f32 %v5126, %v1419
        %v5193 = vmul.f32 %v5129, %v1419
        %v5194 = vmul.f32 %v5132, %v1419
        %v5195 = vmul.f32 %v5135, %v1419
        %v5196 = vmul.f32 %v5138, %v1419
        %v5197 = vmul.f32 %v5141, %v1419
        %v5198 = vmul.f32 %v5144, %v1419
        %v5199 = vmul.f32 %v5147, %v1419
        %v5200 = vmul.f32 %v5150, %v1419
        %v5201 = vmul.f32 %v5153, %v1419
        %v5202 = vmul.f32 %v5156, %v1419
        %v5203 = vmul.f32 %v5159, %v1419
        %v5204 = vmul.f32 %v5162, %v1419
        %v5205 = vmul.f32 %v5165, %v1419
        %v5206 = vmul.f32 %v5168, %v1419
        %v5207 = vmul.f32 %v5171, %v1419
        %v5208 = vmul.f32 %v5174, %v1419
        %v5209 = vmul.f32 %v5177, %v1419
        %v5210 = vsub.f32 %v5050, %v5178
        %v5211 = vsub.f32 %v5051, %v5179
        %v5212 = vsub.f32 %v5052, %v5180
        %v5213 = vsub.f32 %v5053, %v5181
        %v5214 = vsub.f32 %v5054, %v5182
        %v5215 = vsub.f32 %v5055, %v5183
        %v5216 = vsub.f32 %v5056, %v5184
        %v5217 = vsub.f32 %v5057, %v5185
        %v5218 = vsub.f32 %v5058, %v5186
        %v5219 = vsub.f32 %v5059, %v5187
        %v5220 = vsub.f32 %v5060, %v5188
        %v5221 = vsub.f32 %v5061, %v5189
        %v5222 = vsub.f32 %v5062, %v5190
        %v5223 = vsub.f32 %v5063, %v5191
        %v5224 = vsub.f32 %v5064, %v5192
        %v5225 = vsub.f32 %v5065, %v5193
        %v5226 = vsub.f32 %v5066, %v5194
        %v5227 = vsub.f32 %v5067, %v5195
        %v5228 = vsub.f32 %v5068, %v5196
        %v5229 = vsub.f32 %v5069, %v5197
        %v5230 = vsub.f32 %v5070, %v5198
        %v5231 = vsub.f32 %v5071, %v5199
        %v5232 = vsub.f32 %v5072, %v5200
        %v5233 = vsub.f32 %v5073, %v5201
        %v5234 = vsub.f32 %v5074, %v5202
        %v5235 = vsub.f32 %v5075, %v5203
        %v5236 = vsub.f32 %v5076, %v5204
        %v5237 = vsub.f32 %v5077, %v5205
        %v5238 = vsub.f32 %v5078, %v5206
        %v5239 = vsub.f32 %v5079, %v5207
        %v5240 = vsub.f32 %v5080, %v5208
        %v5241 = vsub.f32 %v5081, %v5209
        %v5242 = vmul.f32 %v5210, %v5210
        %v5243 = vmul.f32 %v5211, %v5211
        %v5244 = vmul.f32 %v5212, %v5212
        %v5245 = vmul.f32 %v5213, %v5213
        %v5246 = vmul.f32 %v5214, %v5214
        %v5247 = vmul.f32 %v5215, %v5215
        %v5248 = vmul.f32 %v5216, %v5216
        %v5249 = vmul.f32 %v5217, %v5217
        %v5250 = vmul.f32 %v5218, %v5218
        %v5251 = vmul.f32 %v5219, %v5219
        %v5252 = vmul.f32 %v5220, %v5220
        %v5253 = vmul.f32 %v5221, %v5221
        %v5254 = vmul.f32 %v5222, %v5222
        %v5255 = vmul.f32 %v5223, %v5223
        %v5256 = vmul.f32 %v5224, %v5224
        %v5257 = vmul.f32 %v5225, %v5225
        %v5258 = vmul.f32 %v5226, %v5226
        %v5259 = vmul.f32 %v5227, %v5227
        %v5260 = vmul.f32 %v5228, %v5228
        %v5261 = vmul.f32 %v5229, %v5229
        %v5262 = vmul.f32 %v5230, %v5230
        %v5263 = vmul.f32 %v5231, %v5231
        %v5264 = vmul.f32 %v5232, %v5232
        %v5265 = vmul.f32 %v5233, %v5233
        %v5266 = vmul.f32 %v5234, %v5234
        %v5267 = vmul.f32 %v5235, %v5235
        %v5268 = vmul.f32 %v5236, %v5236
        %v5269 = vmul.f32 %v5237, %v5237
        %v5270 = vmul.f32 %v5238, %v5238
        %v5271 = vmul.f32 %v5239, %v5239
        %v5272 = vmul.f32 %v5240, %v5240
        %v5273 = vmul.f32 %v5241, %v5241
        %v5274 = vsel %vm833, %v5242, 0.0
        %5275 = vadd.xlane.f32.xlu0 %v5274
        %v5276 = vpop.xlane.xlu0 %5275
        %v5277 = vsel %vm833, %v5243, 0.0
        %5278 = vadd.xlane.f32.xlu0 %v5277
        %v5279 = vpop.xlane.xlu0 %5278
        %v5280 = vsel %vm833, %v5244, 0.0
        %5281 = vadd.xlane.f32.xlu0 %v5280
        %v5282 = vpop.xlane.xlu0 %5281
        %v5283 = vsel %vm833, %v5245, 0.0
        %5284 = vadd.xlane.f32.xlu0 %v5283
        %v5285 = vpop.xlane.xlu0 %5284
        %v5286 = vsel %vm833, %v5246, 0.0
        %5287 = vadd.xlane.f32.xlu0 %v5286
        %v5288 = vpop.xlane.xlu0 %5287
        %v5289 = vsel %vm833, %v5247, 0.0
        %5290 = vadd.xlane.f32.xlu0 %v5289
        %v5291 = vpop.xlane.xlu0 %5290
        %v5292 = vsel %vm833, %v5248, 0.0
        %5293 = vadd.xlane.f32.xlu0 %v5292
        %v5294 = vpop.xlane.xlu0 %5293
        %v5295 = vsel %vm833, %v5249, 0.0
        %5296 = vadd.xlane.f32.xlu0 %v5295
        %v5297 = vpop.xlane.xlu0 %5296
        %v5298 = vsel %vm833, %v5250, 0.0
        %5299 = vadd.xlane.f32.xlu0 %v5298
        %v5300 = vpop.xlane.xlu0 %5299
        %v5301 = vsel %vm833, %v5251, 0.0
        %5302 = vadd.xlane.f32.xlu0 %v5301
        %v5303 = vpop.xlane.xlu0 %5302
        %v5304 = vsel %vm833, %v5252, 0.0
        %5305 = vadd.xlane.f32.xlu0 %v5304
        %v5306 = vpop.xlane.xlu0 %5305
        %v5307 = vsel %vm833, %v5253, 0.0
        %5308 = vadd.xlane.f32.xlu0 %v5307
        %v5309 = vpop.xlane.xlu0 %5308
        %v5310 = vsel %vm833, %v5254, 0.0
        %5311 = vadd.xlane.f32.xlu0 %v5310
        %v5312 = vpop.xlane.xlu0 %5311
        %v5313 = vsel %vm833, %v5255, 0.0
        %5314 = vadd.xlane.f32.xlu0 %v5313
        %v5315 = vpop.xlane.xlu0 %5314
        %v5316 = vsel %vm833, %v5256, 0.0
        %5317 = vadd.xlane.f32.xlu0 %v5316
        %v5318 = vpop.xlane.xlu0 %5317
        %v5319 = vsel %vm833, %v5257, 0.0
        %5320 = vadd.xlane.f32.xlu0 %v5319
        %v5321 = vpop.xlane.xlu0 %5320
        %v5322 = vsel %vm833, %v5258, 0.0
        %5323 = vadd.xlane.f32.xlu0 %v5322
        %v5324 = vpop.xlane.xlu0 %5323
        %v5325 = vsel %vm833, %v5259, 0.0
        %5326 = vadd.xlane.f32.xlu0 %v5325
        %v5327 = vpop.xlane.xlu0 %5326
        %v5328 = vsel %vm833, %v5260, 0.0
        %5329 = vadd.xlane.f32.xlu0 %v5328
        %v5330 = vpop.xlane.xlu0 %5329
        %v5331 = vsel %vm833, %v5261, 0.0
        %5332 = vadd.xlane.f32.xlu0 %v5331
        %v5333 = vpop.xlane.xlu0 %5332
        %v5334 = vsel %vm833, %v5262, 0.0
        %5335 = vadd.xlane.f32.xlu0 %v5334
        %v5336 = vpop.xlane.xlu0 %5335
        %v5337 = vsel %vm833, %v5263, 0.0
        %5338 = vadd.xlane.f32.xlu0 %v5337
        %v5339 = vpop.xlane.xlu0 %5338
        %v5340 = vsel %vm833, %v5264, 0.0
        %5341 = vadd.xlane.f32.xlu0 %v5340
        %v5342 = vpop.xlane.xlu0 %5341
        %v5343 = vsel %vm833, %v5265, 0.0
        %5344 = vadd.xlane.f32.xlu0 %v5343
        %v5345 = vpop.xlane.xlu0 %5344
        %v5346 = vsel %vm833, %v5266, 0.0
        %5347 = vadd.xlane.f32.xlu0 %v5346
        %v5348 = vpop.xlane.xlu0 %5347
        %v5349 = vsel %vm833, %v5267, 0.0
        %5350 = vadd.xlane.f32.xlu0 %v5349
        %v5351 = vpop.xlane.xlu0 %5350
        %v5352 = vsel %vm833, %v5268, 0.0
        %5353 = vadd.xlane.f32.xlu0 %v5352
        %v5354 = vpop.xlane.xlu0 %5353
        %v5355 = vsel %vm833, %v5269, 0.0
        %5356 = vadd.xlane.f32.xlu0 %v5355
        %v5357 = vpop.xlane.xlu0 %5356
        %v5358 = vsel %vm833, %v5270, 0.0
        %5359 = vadd.xlane.f32.xlu0 %v5358
        %v5360 = vpop.xlane.xlu0 %5359
        %v5361 = vsel %vm833, %v5271, 0.0
        %5362 = vadd.xlane.f32.xlu0 %v5361
        %v5363 = vpop.xlane.xlu0 %5362
        %v5364 = vsel %vm833, %v5272, 0.0
        %5365 = vadd.xlane.f32.xlu0 %v5364
        %v5366 = vpop.xlane.xlu0 %5365
        %v5367 = vsel %vm833, %v5273, 0.0
        %5368 = vadd.xlane.f32.xlu0 %v5367
        %v5369 = vpop.xlane.xlu0 %5368
        %v5370 = vmul.f32 %v5276, %v1419
        %v5371 = vmul.f32 %v5279, %v1419
        %v5372 = vmul.f32 %v5282, %v1419
        %v5373 = vmul.f32 %v5285, %v1419
        %v5374 = vmul.f32 %v5288, %v1419
        %v5375 = vmul.f32 %v5291, %v1419
        %v5376 = vmul.f32 %v5294, %v1419
        %v5377 = vmul.f32 %v5297, %v1419
        %v5378 = vmul.f32 %v5300, %v1419
        %v5379 = vmul.f32 %v5303, %v1419
        %v5380 = vmul.f32 %v5306, %v1419
        %v5381 = vmul.f32 %v5309, %v1419
        %v5382 = vmul.f32 %v5312, %v1419
        %v5383 = vmul.f32 %v5315, %v1419
        %v5384 = vmul.f32 %v5318, %v1419
        %v5385 = vmul.f32 %v5321, %v1419
        %v5386 = vmul.f32 %v5324, %v1419
        %v5387 = vmul.f32 %v5327, %v1419
        %v5388 = vmul.f32 %v5330, %v1419
        %v5389 = vmul.f32 %v5333, %v1419
        %v5390 = vmul.f32 %v5336, %v1419
        %v5391 = vmul.f32 %v5339, %v1419
        %v5392 = vmul.f32 %v5342, %v1419
        %v5393 = vmul.f32 %v5345, %v1419
        %v5394 = vmul.f32 %v5348, %v1419
        %v5395 = vmul.f32 %v5351, %v1419
        %v5396 = vmul.f32 %v5354, %v1419
        %v5397 = vmul.f32 %v5357, %v1419
        %v5398 = vmul.f32 %v5360, %v1419
        %v5399 = vmul.f32 %v5363, %v1419
        %v5400 = vmul.f32 %v5366, %v1419
        %v5401 = vmul.f32 %v5369, %v1419
        %v5402 = vadd.f32 %v5370, 1e-05
        %v5403 = vadd.f32 %v5371, 1e-05
        %v5404 = vadd.f32 %v5372, 1e-05
        %v5405 = vadd.f32 %v5373, 1e-05
        %v5406 = vadd.f32 %v5374, 1e-05
        %v5407 = vadd.f32 %v5375, 1e-05
        %v5408 = vadd.f32 %v5376, 1e-05
        %v5409 = vadd.f32 %v5377, 1e-05
        %v5410 = vadd.f32 %v5378, 1e-05
        %v5411 = vadd.f32 %v5379, 1e-05
        %v5412 = vadd.f32 %v5380, 1e-05
        %v5413 = vadd.f32 %v5381, 1e-05
        %v5414 = vadd.f32 %v5382, 1e-05
        %v5415 = vadd.f32 %v5383, 1e-05
        %v5416 = vadd.f32 %v5384, 1e-05
        %v5417 = vadd.f32 %v5385, 1e-05
        %v5418 = vadd.f32 %v5386, 1e-05
        %v5419 = vadd.f32 %v5387, 1e-05
        %v5420 = vadd.f32 %v5388, 1e-05
        %v5421 = vadd.f32 %v5389, 1e-05
        %v5422 = vadd.f32 %v5390, 1e-05
        %v5423 = vadd.f32 %v5391, 1e-05
        %v5424 = vadd.f32 %v5392, 1e-05
        %v5425 = vadd.f32 %v5393, 1e-05
        %v5426 = vadd.f32 %v5394, 1e-05
        %v5427 = vadd.f32 %v5395, 1e-05
        %v5428 = vadd.f32 %v5396, 1e-05
        %v5429 = vadd.f32 %v5397, 1e-05
        %v5430 = vadd.f32 %v5398, 1e-05
        %v5431 = vadd.f32 %v5399, 1e-05
        %v5432 = vadd.f32 %v5400, 1e-05
        %v5433 = vadd.f32 %v5401, 1e-05
        %v5434 = vrsqrt.pop %v5402
        %v5435 = vmul.f32 %v5434, %v5402
        %v5436 = vmul.f32 %v5435, %v5434
        %v5437 = vmul.f32 0.5, %v5436
        %v5438 = vsub.f32 1.5, %v5437
        %v5439 = vmul.f32 %v5434, %v5438
        %vm5440 = vweird.f32 %v5402
        %vm5441 = vweird.f32 %v5434
        %vm5442 = vmor %vm5440, %vm5441
        %v5443 = vsel %vm5442, %v5434, %v5439
        %v5444 = vrsqrt.pop %v5403
        %v5445 = vmul.f32 %v5444, %v5403
        %v5446 = vmul.f32 %v5445, %v5444
        %v5447 = vmul.f32 0.5, %v5446
        %v5448 = vsub.f32 1.5, %v5447
        %v5449 = vmul.f32 %v5444, %v5448
        %vm5450 = vweird.f32 %v5403
        %vm5451 = vweird.f32 %v5444
        %vm5452 = vmor %vm5450, %vm5451
        %v5453 = vsel %vm5452, %v5444, %v5449
        %v5454 = vrsqrt.pop %v5404
        %v5455 = vmul.f32 %v5454, %v5404
        %v5456 = vmul.f32 %v5455, %v5454
        %v5457 = vmul.f32 0.5, %v5456
        %v5458 = vsub.f32 1.5, %v5457
        %v5459 = vmul.f32 %v5454, %v5458
        %vm5460 = vweird.f32 %v5404
        %vm5461 = vweird.f32 %v5454
        %vm5462 = vmor %vm5460, %vm5461
        %v5463 = vsel %vm5462, %v5454, %v5459
        %v5464 = vrsqrt.pop %v5405
        %v5465 = vmul.f32 %v5464, %v5405
        %v5466 = vmul.f32 %v5465, %v5464
        %v5467 = vmul.f32 0.5, %v5466
        %v5468 = vsub.f32 1.5, %v5467
        %v5469 = vmul.f32 %v5464, %v5468
        %vm5470 = vweird.f32 %v5405
        %vm5471 = vweird.f32 %v5464
        %vm5472 = vmor %vm5470, %vm5471
        %v5473 = vsel %vm5472, %v5464, %v5469
        %v5474 = vrsqrt.pop %v5406
        %v5475 = vmul.f32 %v5474, %v5406
        %v5476 = vmul.f32 %v5475, %v5474
        %v5477 = vmul.f32 0.5, %v5476
        %v5478 = vsub.f32 1.5, %v5477
        %v5479 = vmul.f32 %v5474, %v5478
        %vm5480 = vweird.f32 %v5406
        %vm5481 = vweird.f32 %v5474
        %vm5482 = vmor %vm5480, %vm5481
        %v5483 = vsel %vm5482, %v5474, %v5479
        %v5484 = vrsqrt.pop %v5407
        %v5485 = vmul.f32 %v5484, %v5407
        %v5486 = vmul.f32 %v5485, %v5484
        %v5487 = vmul.f32 0.5, %v5486
        %v5488 = vsub.f32 1.5, %v5487
        %v5489 = vmul.f32 %v5484, %v5488
        %vm5490 = vweird.f32 %v5407
        %vm5491 = vweird.f32 %v5484
        %vm5492 = vmor %vm5490, %vm5491
        %v5493 = vsel %vm5492, %v5484, %v5489
        %v5494 = vrsqrt.pop %v5408
        %v5495 = vmul.f32 %v5494, %v5408
        %v5496 = vmul.f32 %v5495, %v5494
        %v5497 = vmul.f32 0.5, %v5496
        %v5498 = vsub.f32 1.5, %v5497
        %v5499 = vmul.f32 %v5494, %v5498
        %vm5500 = vweird.f32 %v5408
        %vm5501 = vweird.f32 %v5494
        %vm5502 = vmor %vm5500, %vm5501
        %v5503 = vsel %vm5502, %v5494, %v5499
        %v5504 = vrsqrt.pop %v5409
        %v5505 = vmul.f32 %v5504, %v5409
        %v5506 = vmul.f32 %v5505, %v5504
        %v5507 = vmul.f32 0.5, %v5506
        %v5508 = vsub.f32 1.5, %v5507
        %v5509 = vmul.f32 %v5504, %v5508
        %vm5510 = vweird.f32 %v5409
        %vm5511 = vweird.f32 %v5504
        %vm5512 = vmor %vm5510, %vm5511
        %v5513 = vsel %vm5512, %v5504, %v5509
        %v5514 = vrsqrt.pop %v5410
        %v5515 = vmul.f32 %v5514, %v5410
        %v5516 = vmul.f32 %v5515, %v5514
        %v5517 = vmul.f32 0.5, %v5516
        %v5518 = vsub.f32 1.5, %v5517
        %v5519 = vmul.f32 %v5514, %v5518
        %vm5520 = vweird.f32 %v5410
        %vm5521 = vweird.f32 %v5514
        %vm5522 = vmor %vm5520, %vm5521
        %v5523 = vsel %vm5522, %v5514, %v5519
        %v5524 = vrsqrt.pop %v5411
        %v5525 = vmul.f32 %v5524, %v5411
        %v5526 = vmul.f32 %v5525, %v5524
        %v5527 = vmul.f32 0.5, %v5526
        %v5528 = vsub.f32 1.5, %v5527
        %v5529 = vmul.f32 %v5524, %v5528
        %vm5530 = vweird.f32 %v5411
        %vm5531 = vweird.f32 %v5524
        %vm5532 = vmor %vm5530, %vm5531
        %v5533 = vsel %vm5532, %v5524, %v5529
        %v5534 = vrsqrt.pop %v5412
        %v5535 = vmul.f32 %v5534, %v5412
        %v5536 = vmul.f32 %v5535, %v5534
        %v5537 = vmul.f32 0.5, %v5536
        %v5538 = vsub.f32 1.5, %v5537
        %v5539 = vmul.f32 %v5534, %v5538
        %vm5540 = vweird.f32 %v5412
        %vm5541 = vweird.f32 %v5534
        %vm5542 = vmor %vm5540, %vm5541
        %v5543 = vsel %vm5542, %v5534, %v5539
        %v5544 = vrsqrt.pop %v5413
        %v5545 = vmul.f32 %v5544, %v5413
        %v5546 = vmul.f32 %v5545, %v5544
        %v5547 = vmul.f32 0.5, %v5546
        %v5548 = vsub.f32 1.5, %v5547
        %v5549 = vmul.f32 %v5544, %v5548
        %vm5550 = vweird.f32 %v5413
        %vm5551 = vweird.f32 %v5544
        %vm5552 = vmor %vm5550, %vm5551
        %v5553 = vsel %vm5552, %v5544, %v5549
        %v5554 = vrsqrt.pop %v5414
        %v5555 = vmul.f32 %v5554, %v5414
        %v5556 = vmul.f32 %v5555, %v5554
        %v5557 = vmul.f32 0.5, %v5556
        %v5558 = vsub.f32 1.5, %v5557
        %v5559 = vmul.f32 %v5554, %v5558
        %vm5560 = vweird.f32 %v5414
        %vm5561 = vweird.f32 %v5554
        %vm5562 = vmor %vm5560, %vm5561
        %v5563 = vsel %vm5562, %v5554, %v5559
        %v5564 = vrsqrt.pop %v5415
        %v5565 = vmul.f32 %v5564, %v5415
        %v5566 = vmul.f32 %v5565, %v5564
        %v5567 = vmul.f32 0.5, %v5566
        %v5568 = vsub.f32 1.5, %v5567
        %v5569 = vmul.f32 %v5564, %v5568
        %vm5570 = vweird.f32 %v5415
        %vm5571 = vweird.f32 %v5564
        %vm5572 = vmor %vm5570, %vm5571
        %v5573 = vsel %vm5572, %v5564, %v5569
        %v5574 = vrsqrt.pop %v5416
        %v5575 = vmul.f32 %v5574, %v5416
        %v5576 = vmul.f32 %v5575, %v5574
        %v5577 = vmul.f32 0.5, %v5576
        %v5578 = vsub.f32 1.5, %v5577
        %v5579 = vmul.f32 %v5574, %v5578
        %vm5580 = vweird.f32 %v5416
        %vm5581 = vweird.f32 %v5574
        %vm5582 = vmor %vm5580, %vm5581
        %v5583 = vsel %vm5582, %v5574, %v5579
        %v5584 = vrsqrt.pop %v5417
        %v5585 = vmul.f32 %v5584, %v5417
        %v5586 = vmul.f32 %v5585, %v5584
        %v5587 = vmul.f32 0.5, %v5586
        %v5588 = vsub.f32 1.5, %v5587
        %v5589 = vmul.f32 %v5584, %v5588
        %vm5590 = vweird.f32 %v5417
        %vm5591 = vweird.f32 %v5584
        %vm5592 = vmor %vm5590, %vm5591
        %v5593 = vsel %vm5592, %v5584, %v5589
        %v5594 = vrsqrt.pop %v5418
        %v5595 = vmul.f32 %v5594, %v5418
        %v5596 = vmul.f32 %v5595, %v5594
        %v5597 = vmul.f32 0.5, %v5596
        %v5598 = vsub.f32 1.5, %v5597
        %v5599 = vmul.f32 %v5594, %v5598
        %vm5600 = vweird.f32 %v5418
        %vm5601 = vweird.f32 %v5594
        %vm5602 = vmor %vm5600, %vm5601
        %v5603 = vsel %vm5602, %v5594, %v5599
        %v5604 = vrsqrt.pop %v5419
        %v5605 = vmul.f32 %v5604, %v5419
        %v5606 = vmul.f32 %v5605, %v5604
        %v5607 = vmul.f32 0.5, %v5606
        %v5608 = vsub.f32 1.5, %v5607
        %v5609 = vmul.f32 %v5604, %v5608
        %vm5610 = vweird.f32 %v5419
        %vm5611 = vweird.f32 %v5604
        %vm5612 = vmor %vm5610, %vm5611
        %v5613 = vsel %vm5612, %v5604, %v5609
        %v5614 = vrsqrt.pop %v5420
        %v5615 = vmul.f32 %v5614, %v5420
        %v5616 = vmul.f32 %v5615, %v5614
        %v5617 = vmul.f32 0.5, %v5616
        %v5618 = vsub.f32 1.5, %v5617
        %v5619 = vmul.f32 %v5614, %v5618
        %vm5620 = vweird.f32 %v5420
        %vm5621 = vweird.f32 %v5614
        %vm5622 = vmor %vm5620, %vm5621
        %v5623 = vsel %vm5622, %v5614, %v5619
        %v5624 = vrsqrt.pop %v5421
        %v5625 = vmul.f32 %v5624, %v5421
        %v5626 = vmul.f32 %v5625, %v5624
        %v5627 = vmul.f32 0.5, %v5626
        %v5628 = vsub.f32 1.5, %v5627
        %v5629 = vmul.f32 %v5624, %v5628
        %vm5630 = vweird.f32 %v5421
        %vm5631 = vweird.f32 %v5624
        %vm5632 = vmor %vm5630, %vm5631
        %v5633 = vsel %vm5632, %v5624, %v5629
        %v5634 = vrsqrt.pop %v5422
        %v5635 = vmul.f32 %v5634, %v5422
        %v5636 = vmul.f32 %v5635, %v5634
        %v5637 = vmul.f32 0.5, %v5636
        %v5638 = vsub.f32 1.5, %v5637
        %v5639 = vmul.f32 %v5634, %v5638
        %vm5640 = vweird.f32 %v5422
        %vm5641 = vweird.f32 %v5634
        %vm5642 = vmor %vm5640, %vm5641
        %v5643 = vsel %vm5642, %v5634, %v5639
        %v5644 = vrsqrt.pop %v5423
        %v5645 = vmul.f32 %v5644, %v5423
        %v5646 = vmul.f32 %v5645, %v5644
        %v5647 = vmul.f32 0.5, %v5646
        %v5648 = vsub.f32 1.5, %v5647
        %v5649 = vmul.f32 %v5644, %v5648
        %vm5650 = vweird.f32 %v5423
        %vm5651 = vweird.f32 %v5644
        %vm5652 = vmor %vm5650, %vm5651
        %v5653 = vsel %vm5652, %v5644, %v5649
        %v5654 = vrsqrt.pop %v5424
        %v5655 = vmul.f32 %v5654, %v5424
        %v5656 = vmul.f32 %v5655, %v5654
        %v5657 = vmul.f32 0.5, %v5656
        %v5658 = vsub.f32 1.5, %v5657
        %v5659 = vmul.f32 %v5654, %v5658
        %vm5660 = vweird.f32 %v5424
        %vm5661 = vweird.f32 %v5654
        %vm5662 = vmor %vm5660, %vm5661
        %v5663 = vsel %vm5662, %v5654, %v5659
        %v5664 = vrsqrt.pop %v5425
        %v5665 = vmul.f32 %v5664, %v5425
        %v5666 = vmul.f32 %v5665, %v5664
        %v5667 = vmul.f32 0.5, %v5666
        %v5668 = vsub.f32 1.5, %v5667
        %v5669 = vmul.f32 %v5664, %v5668
        %vm5670 = vweird.f32 %v5425
        %vm5671 = vweird.f32 %v5664
        %vm5672 = vmor %vm5670, %vm5671
        %v5673 = vsel %vm5672, %v5664, %v5669
        %v5674 = vrsqrt.pop %v5426
        %v5675 = vmul.f32 %v5674, %v5426
        %v5676 = vmul.f32 %v5675, %v5674
        %v5677 = vmul.f32 0.5, %v5676
        %v5678 = vsub.f32 1.5, %v5677
        %v5679 = vmul.f32 %v5674, %v5678
        %vm5680 = vweird.f32 %v5426
        %vm5681 = vweird.f32 %v5674
        %vm5682 = vmor %vm5680, %vm5681
        %v5683 = vsel %vm5682, %v5674, %v5679
        %v5684 = vrsqrt.pop %v5427
        %v5685 = vmul.f32 %v5684, %v5427
        %v5686 = vmul.f32 %v5685, %v5684
        %v5687 = vmul.f32 0.5, %v5686
        %v5688 = vsub.f32 1.5, %v5687
        %v5689 = vmul.f32 %v5684, %v5688
        %vm5690 = vweird.f32 %v5427
        %vm5691 = vweird.f32 %v5684
        %vm5692 = vmor %vm5690, %vm5691
        %v5693 = vsel %vm5692, %v5684, %v5689
        %v5694 = vrsqrt.pop %v5428
        %v5695 = vmul.f32 %v5694, %v5428
        %v5696 = vmul.f32 %v5695, %v5694
        %v5697 = vmul.f32 0.5, %v5696
        %v5698 = vsub.f32 1.5, %v5697
        %v5699 = vmul.f32 %v5694, %v5698
        %vm5700 = vweird.f32 %v5428
        %vm5701 = vweird.f32 %v5694
        %vm5702 = vmor %vm5700, %vm5701
        %v5703 = vsel %vm5702, %v5694, %v5699
        %v5704 = vrsqrt.pop %v5429
        %v5705 = vmul.f32 %v5704, %v5429
        %v5706 = vmul.f32 %v5705, %v5704
        %v5707 = vmul.f32 0.5, %v5706
        %v5708 = vsub.f32 1.5, %v5707
        %v5709 = vmul.f32 %v5704, %v5708
        %vm5710 = vweird.f32 %v5429
        %vm5711 = vweird.f32 %v5704
        %vm5712 = vmor %vm5710, %vm5711
        %v5713 = vsel %vm5712, %v5704, %v5709
        %v5714 = vrsqrt.pop %v5430
        %v5715 = vmul.f32 %v5714, %v5430
        %v5716 = vmul.f32 %v5715, %v5714
        %v5717 = vmul.f32 0.5, %v5716
        %v5718 = vsub.f32 1.5, %v5717
        %v5719 = vmul.f32 %v5714, %v5718
        %vm5720 = vweird.f32 %v5430
        %vm5721 = vweird.f32 %v5714
        %vm5722 = vmor %vm5720, %vm5721
        %v5723 = vsel %vm5722, %v5714, %v5719
        %v5724 = vrsqrt.pop %v5431
        %v5725 = vmul.f32 %v5724, %v5431
        %v5726 = vmul.f32 %v5725, %v5724
        %v5727 = vmul.f32 0.5, %v5726
        %v5728 = vsub.f32 1.5, %v5727
        %v5729 = vmul.f32 %v5724, %v5728
        %vm5730 = vweird.f32 %v5431
        %vm5731 = vweird.f32 %v5724
        %vm5732 = vmor %vm5730, %vm5731
        %v5733 = vsel %vm5732, %v5724, %v5729
        %v5734 = vrsqrt.pop %v5432
        %v5735 = vmul.f32 %v5734, %v5432
        %v5736 = vmul.f32 %v5735, %v5734
        %v5737 = vmul.f32 0.5, %v5736
        %v5738 = vsub.f32 1.5, %v5737
        %v5739 = vmul.f32 %v5734, %v5738
        %vm5740 = vweird.f32 %v5432
        %vm5741 = vweird.f32 %v5734
        %vm5742 = vmor %vm5740, %vm5741
        %v5743 = vsel %vm5742, %v5734, %v5739
        %v5744 = vrsqrt.pop %v5433
        %v5745 = vmul.f32 %v5744, %v5433
        %v5746 = vmul.f32 %v5745, %v5744
        %v5747 = vmul.f32 0.5, %v5746
        %v5748 = vsub.f32 1.5, %v5747
        %v5749 = vmul.f32 %v5744, %v5748
        %vm5750 = vweird.f32 %v5433
        %vm5751 = vweird.f32 %v5744
        %vm5752 = vmor %vm5750, %vm5751
        %v5753 = vsel %vm5752, %v5744, %v5749
        %v5754 = vmul.f32 %v5210, %v5443
        %v5755 = vmul.f32 %v5211, %v5453
        %v5756 = vmul.f32 %v5212, %v5463
        %v5757 = vmul.f32 %v5213, %v5473
        %v5758 = vmul.f32 %v5214, %v5483
        %v5759 = vmul.f32 %v5215, %v5493
        %v5760 = vmul.f32 %v5216, %v5503
        %v5761 = vmul.f32 %v5217, %v5513
        %v5762 = vmul.f32 %v5218, %v5523
        %v5763 = vmul.f32 %v5219, %v5533
        %v5764 = vmul.f32 %v5220, %v5543
        %v5765 = vmul.f32 %v5221, %v5553
        %v5766 = vmul.f32 %v5222, %v5563
        %v5767 = vmul.f32 %v5223, %v5573
        %v5768 = vmul.f32 %v5224, %v5583
        %v5769 = vmul.f32 %v5225, %v5593
        %v5770 = vmul.f32 %v5226, %v5603
        %v5771 = vmul.f32 %v5227, %v5613
        %v5772 = vmul.f32 %v5228, %v5623
        %v5773 = vmul.f32 %v5229, %v5633
        %v5774 = vmul.f32 %v5230, %v5643
        %v5775 = vmul.f32 %v5231, %v5653
        %v5776 = vmul.f32 %v5232, %v5663
        %v5777 = vmul.f32 %v5233, %v5673
        %v5778 = vmul.f32 %v5234, %v5683
        %v5779 = vmul.f32 %v5235, %v5693
        %v5780 = vmul.f32 %v5236, %v5703
        %v5781 = vmul.f32 %v5237, %v5713
        %v5782 = vmul.f32 %v5238, %v5723
        %v5783 = vmul.f32 %v5239, %v5733
        %v5784 = vmul.f32 %v5240, %v5743
        %v5785 = vmul.f32 %v5241, %v5753
        %v5786 = vperm.slane %v4196, 0
        %v5787 = vmul.f32 %v5754, %v5786
        %v5788 = vmul.f32 %v5755, %v5786
        %v5789 = vmul.f32 %v5756, %v5786
        %v5790 = vmul.f32 %v5757, %v5786
        %v5791 = vmul.f32 %v5758, %v5786
        %v5792 = vmul.f32 %v5759, %v5786
        %v5793 = vmul.f32 %v5760, %v5786
        %v5794 = vmul.f32 %v5761, %v5786
        %v5795 = vmul.f32 %v5762, %v5786
        %v5796 = vmul.f32 %v5763, %v5786
        %v5797 = vmul.f32 %v5764, %v5786
        %v5798 = vmul.f32 %v5765, %v5786
        %v5799 = vmul.f32 %v5766, %v5786
        %v5800 = vmul.f32 %v5767, %v5786
        %v5801 = vmul.f32 %v5768, %v5786
        %v5802 = vmul.f32 %v5769, %v5786
        %v5803 = vmul.f32 %v5770, %v5786
        %v5804 = vmul.f32 %v5771, %v5786
        %v5805 = vmul.f32 %v5772, %v5786
        %v5806 = vmul.f32 %v5773, %v5786
        %v5807 = vmul.f32 %v5774, %v5786
        %v5808 = vmul.f32 %v5775, %v5786
        %v5809 = vmul.f32 %v5776, %v5786
        %v5810 = vmul.f32 %v5777, %v5786
        %v5811 = vmul.f32 %v5778, %v5786
        %v5812 = vmul.f32 %v5779, %v5786
        %v5813 = vmul.f32 %v5780, %v5786
        %v5814 = vmul.f32 %v5781, %v5786
        %v5815 = vmul.f32 %v5782, %v5786
        %v5816 = vmul.f32 %v5783, %v5786
        %v5817 = vmul.f32 %v5784, %v5786
        %v5818 = vmul.f32 %v5785, %v5786
        %v5819 = vperm.slane %v4197, 0
        %v5820 = vadd.f32 %v5787, %v5819
        %v5821 = vadd.f32 %v5788, %v5819
        %v5822 = vadd.f32 %v5789, %v5819
        %v5823 = vadd.f32 %v5790, %v5819
        %v5824 = vadd.f32 %v5791, %v5819
        %v5825 = vadd.f32 %v5792, %v5819
        %v5826 = vadd.f32 %v5793, %v5819
        %v5827 = vadd.f32 %v5794, %v5819
        %v5828 = vadd.f32 %v5795, %v5819
        %v5829 = vadd.f32 %v5796, %v5819
        %v5830 = vadd.f32 %v5797, %v5819
        %v5831 = vadd.f32 %v5798, %v5819
        %v5832 = vadd.f32 %v5799, %v5819
        %v5833 = vadd.f32 %v5800, %v5819
        %v5834 = vadd.f32 %v5801, %v5819
        %v5835 = vadd.f32 %v5802, %v5819
        %v5836 = vadd.f32 %v5803, %v5819
        %v5837 = vadd.f32 %v5804, %v5819
        %v5838 = vadd.f32 %v5805, %v5819
        %v5839 = vadd.f32 %v5806, %v5819
        %v5840 = vadd.f32 %v5807, %v5819
        %v5841 = vadd.f32 %v5808, %v5819
        %v5842 = vadd.f32 %v5809, %v5819
        %v5843 = vadd.f32 %v5810, %v5819
        %v5844 = vadd.f32 %v5811, %v5819
        %v5845 = vadd.f32 %v5812, %v5819
        %v5846 = vadd.f32 %v5813, %v5819
        %v5847 = vadd.f32 %v5814, %v5819
        %v5848 = vadd.f32 %v5815, %v5819
        %v5849 = vadd.f32 %v5816, %v5819
        %v5850 = vadd.f32 %v5817, %v5819
        %v5851 = vadd.f32 %v5818, %v5819
        %v5853 = vsel %vm833, %v5820, 0
        %v5856 = vsel %vm833, %v5821, 0
        %v5859 = vsel %vm833, %v5822, 0
        %v5862 = vsel %vm833, %v5823, 0
        %v5865 = vsel %vm833, %v5824, 0
        %v5868 = vsel %vm833, %v5825, 0
        %v5871 = vsel %vm833, %v5826, 0
        %v5874 = vsel %vm833, %v5827, 0
        %v5877 = vsel %vm833, %v5828, 0
        %v5880 = vsel %vm833, %v5829, 0
        %v5883 = vsel %vm833, %v5830, 0
        %v5886 = vsel %vm833, %v5831, 0
        %v5889 = vsel %vm833, %v5832, 0
        %v5892 = vsel %vm833, %v5833, 0
        %v5895 = vsel %vm833, %v5834, 0
        %v5898 = vsel %vm833, %v5835, 0
        %v5901 = vsel %vm833, %v5836, 0
        %v5904 = vsel %vm833, %v5837, 0
        %v5907 = vsel %vm833, %v5838, 0
        %v5910 = vsel %vm833, %v5839, 0
        %v5913 = vsel %vm833, %v5840, 0
        %v5916 = vsel %vm833, %v5841, 0
        %v5919 = vsel %vm833, %v5842, 0
        %v5922 = vsel %vm833, %v5843, 0
        %v5925 = vsel %vm833, %v5844, 0
        %v5928 = vsel %vm833, %v5845, 0
        %v5931 = vsel %vm833, %v5846, 0
        %v5934 = vsel %vm833, %v5847, 0
        %v5937 = vsel %vm833, %v5848, 0
        %v5940 = vsel %vm833, %v5849, 0
        %v5943 = vsel %vm833, %v5850, 0
        %v5946 = vsel %vm833, %v5851, 0
        %5948 = vmatpush.msra.mxu0 0.0
        %5949 = vmatpush.msra.mxu0 0.0
        %5950 = vmatpush.msra.mxu0 0.0
        %5951 = vmatpush.msra.mxu0 0.0
        %5952 = vmatpush.msra.mxu0 0.0
        %5953 = vmatpush.msra.mxu0 0.0
        %5954 = vmatpush.msra.mxu0 0.0
        %5955 = vmatpush.msra.mxu0 0.0
        %5956 = vmatpush.msra.mxu0 0.0
        %5957 = vmatpush.msra.mxu0 0.0
        %5958 = vmatpush.msra.mxu0 0.0
        %5959 = vmatpush.msra.mxu0 0.0
        %5960 = vmatpush.msra.mxu0 %v4193
        %5961 = vmatpush.msra.mxu0 %v4192
        %5962 = vmatpush.msra.mxu0 %v4191
        %5963 = vmatpush.msra.mxu0 %v4190
        %5964 = vmatmul.f32.gmra.mxu0 %v5853
        %v5965 = vpop.f32.mrf.mxu0
        %v5966 = vadd.f32 0.0, %v5965
        %5967 = vmatmul.f32.gmra.mxu0 %v5856
        %v5968 = vpop.f32.mrf.mxu0
        %v5969 = vadd.f32 0.0, %v5968
        %5970 = vmatmul.f32.gmra.mxu0 %v5859
        %v5971 = vpop.f32.mrf.mxu0
        %v5972 = vadd.f32 0.0, %v5971
        %5973 = vmatmul.f32.gmra.mxu0 %v5862
        %v5974 = vpop.f32.mrf.mxu0
        %v5975 = vadd.f32 0.0, %v5974
        %5976 = vmatmul.f32.gmra.mxu0 %v5865
        %v5977 = vpop.f32.mrf.mxu0
        %v5978 = vadd.f32 0.0, %v5977
        %5979 = vmatmul.f32.gmra.mxu0 %v5868
        %v5980 = vpop.f32.mrf.mxu0
        %v5981 = vadd.f32 0.0, %v5980
        %5982 = vmatmul.f32.gmra.mxu0 %v5871
        %v5983 = vpop.f32.mrf.mxu0
        %v5984 = vadd.f32 0.0, %v5983
        %5985 = vmatmul.f32.gmra.mxu0 %v5874
        %v5986 = vpop.f32.mrf.mxu0
        %v5987 = vadd.f32 0.0, %v5986
        %5988 = vmatmul.f32.gmra.mxu0 %v5877
        %v5989 = vpop.f32.mrf.mxu0
        %v5990 = vadd.f32 0.0, %v5989
        %5991 = vmatmul.f32.gmra.mxu0 %v5880
        %v5992 = vpop.f32.mrf.mxu0
        %v5993 = vadd.f32 0.0, %v5992
        %5994 = vmatmul.f32.gmra.mxu0 %v5883
        %v5995 = vpop.f32.mrf.mxu0
        %v5996 = vadd.f32 0.0, %v5995
        %5997 = vmatmul.f32.gmra.mxu0 %v5886
        %v5998 = vpop.f32.mrf.mxu0
        %v5999 = vadd.f32 0.0, %v5998
        %6000 = vmatmul.f32.gmra.mxu0 %v5889
        %v6001 = vpop.f32.mrf.mxu0
        %v6002 = vadd.f32 0.0, %v6001
        %6003 = vmatmul.f32.gmra.mxu0 %v5892
        %v6004 = vpop.f32.mrf.mxu0
        %v6005 = vadd.f32 0.0, %v6004
        %6006 = vmatmul.f32.gmra.mxu0 %v5895
        %v6007 = vpop.f32.mrf.mxu0
        %v6008 = vadd.f32 0.0, %v6007
        %6009 = vmatmul.f32.gmra.mxu0 %v5898
        %v6010 = vpop.f32.mrf.mxu0
        %v6011 = vadd.f32 0.0, %v6010
        %6012 = vmatmul.f32.gmra.mxu0 %v5901
        %v6013 = vpop.f32.mrf.mxu0
        %v6014 = vadd.f32 0.0, %v6013
        %6015 = vmatmul.f32.gmra.mxu0 %v5904
        %v6016 = vpop.f32.mrf.mxu0
        %v6017 = vadd.f32 0.0, %v6016
        %6018 = vmatmul.f32.gmra.mxu0 %v5907
        %v6019 = vpop.f32.mrf.mxu0
        %v6020 = vadd.f32 0.0, %v6019
        %6021 = vmatmul.f32.gmra.mxu0 %v5910
        %v6022 = vpop.f32.mrf.mxu0
        %v6023 = vadd.f32 0.0, %v6022
        %6024 = vmatmul.f32.gmra.mxu0 %v5913
        %v6025 = vpop.f32.mrf.mxu0
        %v6026 = vadd.f32 0.0, %v6025
        %6027 = vmatmul.f32.gmra.mxu0 %v5916
        %v6028 = vpop.f32.mrf.mxu0
        %v6029 = vadd.f32 0.0, %v6028
        %6030 = vmatmul.f32.gmra.mxu0 %v5919
        %v6031 = vpop.f32.mrf.mxu0
        %v6032 = vadd.f32 0.0, %v6031
        %6033 = vmatmul.f32.gmra.mxu0 %v5922
        %v6034 = vpop.f32.mrf.mxu0
        %v6035 = vadd.f32 0.0, %v6034
        %6036 = vmatmul.f32.gmra.mxu0 %v5925
        %v6037 = vpop.f32.mrf.mxu0
        %v6038 = vadd.f32 0.0, %v6037
        %6039 = vmatmul.f32.gmra.mxu0 %v5928
        %v6040 = vpop.f32.mrf.mxu0
        %v6041 = vadd.f32 0.0, %v6040
        %6042 = vmatmul.f32.gmra.mxu0 %v5931
        %v6043 = vpop.f32.mrf.mxu0
        %v6044 = vadd.f32 0.0, %v6043
        %6045 = vmatmul.f32.gmra.mxu0 %v5934
        %v6046 = vpop.f32.mrf.mxu0
        %v6047 = vadd.f32 0.0, %v6046
        %6048 = vmatmul.f32.gmra.mxu0 %v5937
        %v6049 = vpop.f32.mrf.mxu0
        %v6050 = vadd.f32 0.0, %v6049
        %6051 = vmatmul.f32.gmra.mxu0 %v5940
        %v6052 = vpop.f32.mrf.mxu0
        %v6053 = vadd.f32 0.0, %v6052
        %6054 = vmatmul.f32.gmra.mxu0 %v5943
        %v6055 = vpop.f32.mrf.mxu0
        %v6056 = vadd.f32 0.0, %v6055
        %6057 = vmatmul.f32.gmra.mxu0 %v5946
        %v6058 = vpop.f32.mrf.mxu0
        %v6059 = vadd.f32 0.0, %v6058
        %6060 = vdwg.mxu0
        %v6061 = vadd.f32 %v4087, %v5966
        %v6062 = vadd.f32 %v4090, %v5969
        %v6063 = vadd.f32 %v4093, %v5972
        %v6064 = vadd.f32 %v4096, %v5975
        %v6065 = vadd.f32 %v4099, %v5978
        %v6066 = vadd.f32 %v4102, %v5981
        %v6067 = vadd.f32 %v4105, %v5984
        %v6068 = vadd.f32 %v4108, %v5987
        %v6069 = vadd.f32 %v4111, %v5990
        %v6070 = vadd.f32 %v4114, %v5993
        %v6071 = vadd.f32 %v4117, %v5996
        %v6072 = vadd.f32 %v4120, %v5999
        %v6073 = vadd.f32 %v4123, %v6002
        %v6074 = vadd.f32 %v4126, %v6005
        %v6075 = vadd.f32 %v4129, %v6008
        %v6076 = vadd.f32 %v4132, %v6011
        %v6077 = vadd.f32 %v4135, %v6014
        %v6078 = vadd.f32 %v4138, %v6017
        %v6079 = vadd.f32 %v4141, %v6020
        %v6080 = vadd.f32 %v4144, %v6023
        %v6081 = vadd.f32 %v4147, %v6026
        %v6082 = vadd.f32 %v4150, %v6029
        %v6083 = vadd.f32 %v4153, %v6032
        %v6084 = vadd.f32 %v4156, %v6035
        %v6085 = vadd.f32 %v4159, %v6038
        %v6086 = vadd.f32 %v4162, %v6041
        %v6087 = vadd.f32 %v4165, %v6044
        %v6088 = vadd.f32 %v4168, %v6047
        %v6089 = vadd.f32 %v4171, %v6050
        %v6090 = vadd.f32 %v4174, %v6053
        %v6091 = vadd.f32 %v4177, %v6056
        %v6092 = vadd.f32 %v4180, %v6059
        %v6093 = vld [vmem:[%s4 + $0xc] sm:$0x1]
        %v6094 = vperm.slane %v6093, 0
        %v6095 = vadd.f32 %v6061, %v6094
        %v6096 = vadd.f32 %v6062, %v6094
        %v6097 = vadd.f32 %v6063, %v6094
        %v6098 = vadd.f32 %v6064, %v6094
        %v6099 = vadd.f32 %v6065, %v6094
        %v6100 = vadd.f32 %v6066, %v6094
        %v6101 = vadd.f32 %v6067, %v6094
        %v6102 = vadd.f32 %v6068, %v6094
        %v6103 = vadd.f32 %v6069, %v6094
        %v6104 = vadd.f32 %v6070, %v6094
        %v6105 = vadd.f32 %v6071, %v6094
        %v6106 = vadd.f32 %v6072, %v6094
        %v6107 = vadd.f32 %v6073, %v6094
        %v6108 = vadd.f32 %v6074, %v6094
        %v6109 = vadd.f32 %v6075, %v6094
        %v6110 = vadd.f32 %v6076, %v6094
        %v6111 = vadd.f32 %v6077, %v6094
        %v6112 = vadd.f32 %v6078, %v6094
        %v6113 = vadd.f32 %v6079, %v6094
        %v6114 = vadd.f32 %v6080, %v6094
        %v6115 = vadd.f32 %v6081, %v6094
        %v6116 = vadd.f32 %v6082, %v6094
        %v6117 = vadd.f32 %v6083, %v6094
        %v6118 = vadd.f32 %v6084, %v6094
        %v6119 = vadd.f32 %v6085, %v6094
        %v6120 = vadd.f32 %v6086, %v6094
        %v6121 = vadd.f32 %v6087, %v6094
        %v6122 = vadd.f32 %v6088, %v6094
        %v6123 = vadd.f32 %v6089, %v6094
        %v6124 = vadd.f32 %v6090, %v6094
        %v6125 = vadd.f32 %v6091, %v6094
        %v6126 = vadd.f32 %v6092, %v6094
        %v6127 = vmax.f32 %v6095, 0.0
        %v6128 = vmax.f32 %v6096, 0.0
        %v6129 = vmax.f32 %v6097, 0.0
        %v6130 = vmax.f32 %v6098, 0.0
        %v6131 = vmax.f32 %v6099, 0.0
        %v6132 = vmax.f32 %v6100, 0.0
        %v6133 = vmax.f32 %v6101, 0.0
        %v6134 = vmax.f32 %v6102, 0.0
        %v6135 = vmax.f32 %v6103, 0.0
        %v6136 = vmax.f32 %v6104, 0.0
        %v6137 = vmax.f32 %v6105, 0.0
        %v6138 = vmax.f32 %v6106, 0.0
        %v6139 = vmax.f32 %v6107, 0.0
        %v6140 = vmax.f32 %v6108, 0.0
        %v6141 = vmax.f32 %v6109, 0.0
        %v6142 = vmax.f32 %v6110, 0.0
        %v6143 = vmax.f32 %v6111, 0.0
        %v6144 = vmax.f32 %v6112, 0.0
        %v6145 = vmax.f32 %v6113, 0.0
        %v6146 = vmax.f32 %v6114, 0.0
        %v6147 = vmax.f32 %v6115, 0.0
        %v6148 = vmax.f32 %v6116, 0.0
        %v6149 = vmax.f32 %v6117, 0.0
        %v6150 = vmax.f32 %v6118, 0.0
        %v6151 = vmax.f32 %v6119, 0.0
        %v6152 = vmax.f32 %v6120, 0.0
        %v6153 = vmax.f32 %v6121, 0.0
        %v6154 = vmax.f32 %v6122, 0.0
        %v6155 = vmax.f32 %v6123, 0.0
        %v6156 = vmax.f32 %v6124, 0.0
        %v6157 = vmax.f32 %v6125, 0.0
        %v6158 = vmax.f32 %v6126, 0.0
        %v6159 = vld [vmem:[%s318] sm:$0xff]
        %v6160 = vld [vmem:[%s318 + $0x8] sm:$0xff]
        %6161 = vmatpush.msra.mxu0 %v6142
        %6162 = vmatpush.msra.mxu0 %v6141
        %6163 = vmatpush.msra.mxu0 %v6140
        %6164 = vmatpush.msra.mxu0 %v6139
        %6165 = vmatpush.msra.mxu0 %v6138
        %6166 = vmatpush.msra.mxu0 %v6137
        %6167 = vmatpush.msra.mxu0 %v6136
        %6168 = vmatpush.msra.mxu0 %v6135
        %6169 = vmatpush.msra.mxu0 %v6134
        %6170 = vmatpush.msra.mxu0 %v6133
        %6171 = vmatpush.msra.mxu0 %v6132
        %6172 = vmatpush.msra.mxu0 %v6131
        %6173 = vmatpush.msra.mxu0 %v6130
        %6174 = vmatpush.msra.mxu0 %v6129
        %6175 = vmatpush.msra.mxu0 %v6128
        %6176 = vmatpush.msra.mxu0 %v6127
        %6177 = vmatmul.f32.gmra.mxu0 %v6159
        %v6178 = vpop.f32.mrf.mxu0
        %v6179 = vadd.f32 0.0, %v6178
        %6180 = vdwg.mxu0
        %6181 = vmatpush.msra.mxu0 %v6158
        %6182 = vmatpush.msra.mxu0 %v6157
        %6183 = vmatpush.msra.mxu0 %v6156
        %6184 = vmatpush.msra.mxu0 %v6155
        %6185 = vmatpush.msra.mxu0 %v6154
        %6186 = vmatpush.msra.mxu0 %v6153
        %6187 = vmatpush.msra.mxu0 %v6152
        %6188 = vmatpush.msra.mxu0 %v6151
        %6189 = vmatpush.msra.mxu0 %v6150
        %6190 = vmatpush.msra.mxu0 %v6149
        %6191 = vmatpush.msra.mxu0 %v6148
        %6192 = vmatpush.msra.mxu0 %v6147
        %6193 = vmatpush.msra.mxu0 %v6146
        %6194 = vmatpush.msra.mxu0 %v6145
        %6195 = vmatpush.msra.mxu0 %v6144
        %6196 = vmatpush.msra.mxu0 %v6143
        %6197 = vmatmul.f32.gmra.mxu0 %v6160
        %v6198 = vpop.f32.mrf.mxu0
        %v6199 = vadd.f32 %v6179, %v6198
        %6200 = vdwg.mxu0
        %v6201 = vld [vmem:[%s3 + $0x120] sm:$0xff]
        %v6202 = vld [vmem:[%s3 + $0x128] sm:$0xff]
        %v6203 = vld [vmem:[%s3 + $0x130] sm:$0xff]
        %v6204 = vld [vmem:[%s3 + $0x138] sm:$0xff]
        %v6205 = vld [vmem:[%s4 + $0xd] sm:$0x1]
        %v6206 = vperm.slane %v6205, 0
        %v6208 = vsel %vm833, %v6199, 0
        %6210 = vmatpush.msra.mxu0 0.0
        %6211 = vmatpush.msra.mxu0 0.0
        %6212 = vmatpush.msra.mxu0 0.0
        %6213 = vmatpush.msra.mxu0 0.0
        %6214 = vmatpush.msra.mxu0 0.0
        %6215 = vmatpush.msra.mxu0 0.0
        %6216 = vmatpush.msra.mxu0 0.0
        %6217 = vmatpush.msra.mxu0 0.0
        %6218 = vmatpush.msra.mxu0 0.0
        %6219 = vmatpush.msra.mxu0 0.0
        %6220 = vmatpush.msra.mxu0 0.0
        %6221 = vmatpush.msra.mxu0 0.0
        %6222 = vmatpush.msra.mxu0 %v6204
        %6223 = vmatpush.msra.mxu0 %v6203
        %6224 = vmatpush.msra.mxu0 %v6202
        %6225 = vmatpush.msra.mxu0 %v6201
        %6226 = vmatmul.f32.gmra.mxu0 %v6208
        %v6227 = vpop.f32.mrf.mxu0
        %v6228 = vadd.f32 %v6206, %v6227
        %6229 = vdwg.mxu0
        %v6230 = vmax.f32 %v6228, 0.0
        %v6231 = vld [vmem:[%s5] sm:$0xff]
        %v6232 = vld [vmem:[%s5 + $0x8] sm:$0xff]
        %v6233 = vld [vmem:[%s5 + $0x10] sm:$0xff]
        %v6234 = vld [vmem:[%s5 + $0x18] sm:$0xff]
        %v6235 = vld [vmem:[%s5 + $0x20] sm:$0x1]
        %v6236 = vperm.slane %v6235, 0
        %v6238 = vsel %vm833, %v6230, 0
        %6240 = vmatpush.msra.mxu0 0.0
        %6241 = vmatpush.msra.mxu0 0.0
        %6242 = vmatpush.msra.mxu0 0.0
        %6243 = vmatpush.msra.mxu0 0.0
        %6244 = vmatpush.msra.mxu0 0.0
        %6245 = vmatpush.msra.mxu0 0.0
        %6246 = vmatpush.msra.mxu0 0.0
        %6247 = vmatpush.msra.mxu0 0.0
        %6248 = vmatpush.msra.mxu0 0.0
        %6249 = vmatpush.msra.mxu0 0.0
        %6250 = vmatpush.msra.mxu0 0.0
        %6251 = vmatpush.msra.mxu0 0.0
        %6252 = vmatpush.msra.mxu0 %v6234
        %6253 = vmatpush.msra.mxu0 %v6233
        %6254 = vmatpush.msra.mxu0 %v6232
        %6255 = vmatpush.msra.mxu0 %v6231
        %6256 = vmatmul.f32.gmra.mxu0 %v6238
        %v6257 = vpop.f32.mrf.mxu0
        %v6258 = vadd.f32 %v6236, %v6257
        %6259 = vdwg.mxu0
        %6260 = vst [vmem:[%s305] sm:$0xff] %v6258
        %s6261 = sand.u32 %s172, 1
        %s6262 = scalar_lea.sflag [#allocation4], %s6261
        %s6263 = sand.u32 %s172, 1
        %s6264 = smul.addr %s6263, 8
        %s6265 = scalar_lea.vmem [#allocation5], %s6264
        // Predicated region
        $region49: #{tpu_custom_call.1} parent=43 // pred_check
          %p6266 = pneg %p182
        $region50: #{tpu_custom_call.1} parent=43 // pred_check_branch
          %6268 = sbr.rel (%p6266) target = $region52
        $region51: #{tpu_custom_call.1} parent=43 // pred_region
          %6270 = vsyncadd %s6262, 0
          %s6271 = smul.addr %s23, 8
          %s6272 = scalar_lea.hbm %s6, %s6271
          %s6274 = sshll.u32 %s6265, 4
          %s6275 = int_to_ptr.vmem [resolvable:$true] %s6274
          %s6276 = sshll.u32 %s6272, 4
          %s6277 = int_to_ptr.hbm [resolvable:$true] %s6276
          %6279 = dma.vmem_to_hbm [thread:$0]  %s6275, 128, %s6277, %s6262
        $region52: #{tpu_custom_call.1} parent=43 // pred_fallthru
          _
      $region44: #{tpu_custom_call.1} parent=5 // pred_fallthru
        _
      %p6280 = scmp.le.s32.totalorder 2, %s18
      // Predicated region
      $region53: #{tpu_custom_call.1} parent=5 // pred_check
        %p6281 = pneg %p6280
      $region54: #{tpu_custom_call.1} parent=5 // pred_check_branch
        %6283 = sbr.rel (%p6281) target = $region56
      $region55: #{tpu_custom_call.1} parent=5 // pred_region
        %s6284 = ssub.s32 %s18, 2
        // Predicated region
        $region57: #{tpu_custom_call.1} parent=55 // pred_check
          %p6285 = pneg %p188
        $region58: #{tpu_custom_call.1} parent=55 // pred_check_branch
          %6287 = sbr.rel (%p6285) target = $region60
        $region59: #{tpu_custom_call.1} parent=55 // pred_region
          %s6288 = sand.u32 %s173, 1
          %s6289 = scalar_lea.sflag [#allocation4], %s6288
          %s6290 = sand.u32 %s173, 1
          %s6291 = smul.addr %s6290, 8
          %s6292 = scalar_lea.vmem [#allocation5], %s6291
          %6294 = dma.done %s6289, 128
        $region60: #{tpu_custom_call.1} parent=55 // pred_fallthru
          _
      $region56: #{tpu_custom_call.1} parent=5 // pred_fallthru
        _
    $region6: #{tpu_custom_call.1} parent=1 // loop_footer
      %s22 = sadd.s32 1, %s18
    $region7: #{tpu_custom_call.1} parent=1 // loop_footer_branch
      %17 = sbr.rel target = $region3
    $region8: #{tpu_custom_call.1} parent=1 // loop_exit
      _
    %6295 = vsyncpa [#allocation3], 1
    %s6296 = scalar_lea.sflag [#allocation3], 1
    %6297 = vsyncpa %s6296, 1
    %6298 = vsyncpa [#allocation4], 1
    %s6299 = scalar_lea.sflag [#allocation4], 1
    %6300 = vsyncpa %s6299, 1

</llo_original>
